<compile_context>
chip_gen: v7x
topology: tpu7x:2x2x1
jax: 0.10.0
libtpu: 0.0.40
codegen_flags: <defaults>
</compile_context>

<pallas_src>
import functools

import jax
import jax.numpy as jnp
from jax.experimental import pallas as pl
from jax.experimental.pallas import tpu as pltpu

# ----------------------------- config -------------------------------------
EMBED = 32          # embedding_dim (k)
HEADS = 4           # num_heads
DEPTH = 2           # number of transformer blocks
SEQ = 8             # seq_length (t)
VOCAB = 64          # num_tokens
BATCH = 2           # batch size
FF_MULT = 4
LN_EPS = 1e-5
VPAD = 128          # lane-dense padded logits width (multiple of 128)
PACK_W = FF_MULT * EMBED   # width of the per-block vector pack (must be 128)

PER_BLOCK = 5       # weight arrays per transformer block passed to the kernel
                    # (wqkv, wo, w1, w2, vec_pack)


# ----------------------------- kernel --------------------------------------
def _layernorm(x, gamma, beta):
    mean = jnp.mean(x, axis=-1, keepdims=True)
    var = jnp.mean((x - mean) ** 2, axis=-1, keepdims=True)
    inv = jax.lax.rsqrt(var + LN_EPS)
    return (x - mean) * inv * gamma + beta


def fused_forward_kernel(b, t, depth, x_ref, *refs):
    """Whole forward pass in one kernel.

    x_ref: (b*t, k) activations (token + positional embeddings, pre-reshaped).
    refs:  per-block weights (PER_BLOCK each, depth blocks), then
           wp_pad (k, VPAD), bp_pad (1, VPAD), then the output ref (b, VPAD).
    """
    o_ref = refs[-1]
    bp_ref = refs[-2]
    wp_ref = refs[-3]
    wrefs = refs[:-3]

    x = x_ref[...]                       # (b*t, k)
    bt, k = x.shape
    h = HEADS
    s = k // h

    for d in range(depth):               # static unroll over depth
        (wqkv, wo, w1, w2, vec) = wrefs[d * PER_BLOCK:(d + 1) * PER_BLOCK]

        vecs = vec[...]                  # (8, PACK_W) packed small vectors
        bo = vecs[0:1, :k]
        g1 = vecs[1:2, :k]
        be1 = vecs[2:3, :k]
        bf1 = vecs[3:4, :]               # (1, ff) -- ff == PACK_W
        bf2 = vecs[4:5, :k]
        g2 = vecs[5:6, :k]
        be2 = vecs[6:7, :k]

        # fused QKV projection over all batch*seq rows; 1/sqrt(s) folded into Wq
        qkv = jnp.dot(x, wqkv[...], preferred_element_type=jnp.float32)   # (bt, 3k)
        q = qkv[:, :k]
        km = qkv[:, k:2 * k]
        v = qkv[:, 2 * k:]

        # attention: static loops over (tiny) batch & heads, values stay in vregs
        att_rows = []
        for bi in range(b):
            r0 = bi * t
            qb = q[r0:r0 + t]
            kb = km[r0:r0 + t]
            vb = v[r0:r0 + t]
            houts = []
            for hi in range(h):
                c0 = hi * s
                sc = jnp.dot(qb[:, c0:c0 + s], kb[:, c0:c0 + s].T,
                             preferred_element_type=jnp.float32)          # (t, t)
                sc = sc - jnp.max(sc, axis=-1, keepdims=True)
                p = jnp.exp(sc)
                p = p * pl.reciprocal(jnp.sum(p, axis=-1, keepdims=True),
                                      approx=True)
                houts.append(jnp.dot(p, vb[:, c0:c0 + s],
                                     preferred_element_type=jnp.float32))
            att_rows.append(jnp.concatenate(houts, axis=-1))              # (t, k)
        att = jnp.concatenate(att_rows, axis=0)                           # (bt, k)
        att = jnp.dot(att, wo[...], preferred_element_type=jnp.float32) + bo

        # residual + LayerNorm 1
        y = _layernorm(att + x, g1, be1)

        # feedforward: Linear -> ReLU -> Linear
        ff = jnp.dot(y, w1[...], preferred_element_type=jnp.float32) + bf1
        ff = jnp.maximum(ff, 0.0)
        ff = jnp.dot(ff, w2[...], preferred_element_type=jnp.float32) + bf2

        # residual + LayerNorm 2
        x = _layernorm(ff + y, g2, be2)

    # head: max-pool over seq -> linear (lane-padded to VPAD) -> log_softmax
    pooled = jnp.concatenate(
        [jnp.max(x[bi * t:(bi + 1) * t], axis=0, keepdims=True) for bi in range(b)],
        axis=0)                                                           # (b, k)
    logits = jnp.dot(pooled, wp_ref[...],
                     preferred_element_type=jnp.float32) + bp_ref[...]    # (b, VPAD)
    m = jnp.max(logits, axis=-1, keepdims=True)
    lse = jnp.log(jnp.sum(jnp.exp(logits - m), axis=-1, keepdims=True)) + m
    o_ref[...] = logits - lse


# ----------------------------- wrapper --------------------------------------
def run_fused_forward(x2, kparams):
    """x2: (b*t, k) activations; returns (b, VPAD) padded log-probs."""
    weights = []
    for blk in kparams["blocks"]:
        weights += [blk["wqkv"], blk["wo"], blk["w1"], blk["w2"], blk["vec"]]
    weights += [kparams["wp_pad"], kparams["bp_pad"]]

    in_specs = [pl.BlockSpec(x2.shape, lambda i: (0, 0))]
    in_specs += [pl.BlockSpec(w.shape, lambda i: (0, 0)) for w in weights]

    kernel = functools.partial(fused_forward_kernel, BATCH, SEQ, DEPTH)
    return pl.pallas_call(
        kernel,
        out_shape=jax.ShapeDtypeStruct((BATCH, VPAD), jnp.float32),
        grid=(1,),
        in_specs=in_specs,
        out_specs=pl.BlockSpec((BATCH, VPAD), lambda i: (0, 0)),
        compiler_params=pltpu.CompilerParams(
            dimension_semantics=("arbitrary",),
            vmem_limit_bytes=32 * 1024 * 1024),
    )(x2, *weights)


@jax.jit
def transformer_forward(token_ids, kparams):
    """token_ids: (b, t) int32 -> (b, VOCAB) log-probs."""
    # embedding lookup + positional embedding (plain-JAX glue: gather)
    tokens = jnp.take(kparams["tok_emb"], token_ids, axis=0)       # (b, t, k)
    b, t, k = tokens.shape
    x = tokens + kparams["pos_emb"][None, :t, :]
    x2 = x.reshape(b * t, k)                                       # collapse batch+seq
    out_pad = run_fused_forward(x2, kparams)                       # (b, VPAD)
    return out_pad[:, :VOCAB]


# ------------------------- pure-JAX reference -------------------------------
def _ref_block(x, blk):
    def one(xi):                                    # xi: (t, k)
        t, k = xi.shape
        s = k // HEADS
        q = xi @ blk["wq"]
        km = xi @ blk["wk"]
        v = xi @ blk["wv"]
        outs = []
        for hi in range(HEADS):
            qh, kh, vh = (q[:, hi*s:(hi+1)*s], km[:, hi*s:(hi+1)*s],
                          v[:, hi*s:(hi+1)*s])
            sc = (qh @ kh.T) / (s ** 0.5)
            p = jax.nn.softmax(sc, axis=-1)
            outs.append(p @ vh)
        att = jnp.concatenate(outs, axis=-1) @ blk["wo"] + blk["bo"][0]

        def ln(z, g, be):
            m = jnp.mean(z, axis=-1, keepdims=True)
            va = jnp.mean((z - m) ** 2, axis=-1, keepdims=True)
            return (z - m) / jnp.sqrt(va + LN_EPS) * g[0] + be[0]

        y = ln(att + xi, blk["g1"], blk["be1"])
        ff = jnp.maximum(y @ blk["w1"] + blk["bf1"][0], 0.0) @ blk["w2"] + blk["bf2"][0]
        return ln(ff + y, blk["g2"], blk["be2"])
    return jax.vmap(one)(x)


def transformer_forward_ref(token_ids, params):
    tokens = jnp.take(params["tok_emb"], token_ids, axis=0)
    x = tokens + params["pos_emb"][None, :tokens.shape[1], :]
    for blk in params["blocks"]:
        x = _ref_block(x, blk)
    pooled = jnp.max(x, axis=1)
    logits = pooled @ params["wp"] + params["bp"][0]
    return jax.nn.log_softmax(logits, axis=1)


# ----------------------------- params --------------------------------------
def init_params(key):
    k, ff = EMBED, FF_MULT * EMBED
    n_keys = 4 + DEPTH
    keys = jax.random.split(key, n_keys)

    def nrm(kk, shape):
        return 0.02 * jax.random.normal(kk, shape, jnp.float32)

    params = {
        "tok_emb": nrm(keys[0], (VOCAB, k)),
        "pos_emb": nrm(keys[1], (SEQ, k)),
        "wp": nrm(keys[2], (k, VOCAB)),
        "bp": nrm(keys[3], (1, VOCAB)),
        "blocks": [],
    }
    for d in range(DEPTH):
        bk = jax.random.split(keys[4 + d], 9)
        blk = {
            "wq": nrm(bk[0], (k, k)),
            "wk": nrm(bk[1], (k, k)),
            "wv": nrm(bk[2], (k, k)),
            "wo": nrm(bk[3], (k, k)),
            "bo": nrm(bk[4], (1, k)),
            "g1": jnp.ones((1, k), jnp.float32),
            "be1": jnp.zeros((1, k), jnp.float32),
            "w1": nrm(bk[5], (k, ff)),
            "bf1": nrm(bk[6], (1, ff)),
            "w2": nrm(bk[7], (ff, k)),
            "bf2": nrm(bk[8], (1, k)),
            "g2": jnp.ones((1, k), jnp.float32),
            "be2": jnp.zeros((1, k), jnp.float32),
        }
        params["blocks"].append(blk)
    return params


def prepare_kernel_params(params):
    """One-time transform: pack QKV (+ fold score scale into Wq), pack the
    small per-block vectors into one (8, PACK_W) slab, pad head to 128 lanes."""
    assert PACK_W == 128, "vector pack layout assumes ff hidden == 128"
    s = EMBED // HEADS
    scale = 1.0 / (float(s) ** 0.5)
    kp = {"tok_emb": params["tok_emb"], "pos_emb": params["pos_emb"], "blocks": []}
    for blk in params["blocks"]:
        wqkv = jnp.concatenate([blk["wq"] * scale, blk["wk"], blk["wv"]], axis=1)
        vec = jnp.zeros((8, PACK_W), jnp.float32)
        vec = vec.at[0, :EMBED].set(blk["bo"][0])
        vec = vec.at[1, :EMBED].set(blk["g1"][0])
        vec = vec.at[2, :EMBED].set(blk["be1"][0])
        vec = vec.at[3, :].set(blk["bf1"][0])
        vec = vec.at[4, :EMBED].set(blk["bf2"][0])
        vec = vec.at[5, :EMBED].set(blk["g2"][0])
        vec = vec.at[6, :EMBED].set(blk["be2"][0])
        kp["blocks"].append({
            "wqkv": wqkv, "wo": blk["wo"],
            "w1": blk["w1"], "w2": blk["w2"],
            "vec": vec,
        })
    # lane-dense head: pad weight with zeros, pad bias with -1e30 so pad lanes
    # never win the max / contribute to the softmax sum.
    kp["wp_pad"] = jnp.zeros((EMBED, VPAD), jnp.float32).at[:, :VOCAB].set(params["wp"])
    kp["bp_pad"] = jnp.full((1, VPAD), -1e30, jnp.float32).at[:, :VOCAB].set(params["bp"])
    return kp


# ------------------------------- main ---------------------------------------
if __name__ == "__main__":
    key = jax.random.PRNGKey(0)
    pkey, xkey = jax.random.split(key)
    params = init_params(pkey)
    kparams = prepare_kernel_params(params)

    token_ids = jax.random.randint(xkey, (BATCH, SEQ), 0, VOCAB, dtype=jnp.int32)

    out = transformer_forward(token_ids, kparams)
    out = jax.block_until_ready(out)

    ref = transformer_forward_ref(token_ids, params)
    assert out.shape == (BATCH, VOCAB), out.shape
    assert jnp.allclose(out, ref, atol=1e-3, rtol=1e-3), "mismatch vs JAX reference"
    # log-probs should sum to ~1 after exp
    assert jnp.allclose(jnp.sum(jnp.exp(out), axis=1), 1.0, atol=1e-4)

    print("KERNEL_OK")
</pallas_src>

<mosaic_0001>
module attributes {stable_mosaic.version = 11 : i64} {
  func.func @fused_forward_kernel(%arg0: i32, %arg1: memref<16x32xf32, #tpu.memory_space<vmem>>, %arg2: memref<32x96xf32, #tpu.memory_space<vmem>>, %arg3: memref<32x32xf32, #tpu.memory_space<vmem>>, %arg4: memref<32x128xf32, #tpu.memory_space<vmem>>, %arg5: memref<128x32xf32, #tpu.memory_space<vmem>>, %arg6: memref<8x128xf32, #tpu.memory_space<vmem>>, %arg7: memref<32x96xf32, #tpu.memory_space<vmem>>, %arg8: memref<32x32xf32, #tpu.memory_space<vmem>>, %arg9: memref<32x128xf32, #tpu.memory_space<vmem>>, %arg10: memref<128x32xf32, #tpu.memory_space<vmem>>, %arg11: memref<8x128xf32, #tpu.memory_space<vmem>>, %arg12: memref<32x128xf32, #tpu.memory_space<vmem>>, %arg13: memref<1x128xf32, #tpu.memory_space<vmem>>, %arg14: memref<2x128xf32, #tpu.memory_space<vmem>>) attributes {dimension_semantics = [#tpu.dimension_semantics<arbitrary>], iteration_bounds = array<i64: 1>, scalar_prefetch = 0 : i64, scratch_operands = 0 : i64, tpu.core_type = #tpu.core_type<tc>, window_params = [{pipeline_mode = #tpu.pipeline_mode<synchronous>, transform_indices = @transform_0, window_bounds = array<i64: 16, 32>}, {pipeline_mode = #tpu.pipeline_mode<synchronous>, transform_indices = @transform_1, window_bounds = array<i64: 32, 96>}, {pipeline_mode = #tpu.pipeline_mode<synchronous>, transform_indices = @transform_2, window_bounds = array<i64: 32, 32>}, {pipeline_mode = #tpu.pipeline_mode<synchronous>, transform_indices = @transform_3, window_bounds = array<i64: 32, 128>}, {pipeline_mode = #tpu.pipeline_mode<synchronous>, transform_indices = @transform_4, window_bounds = array<i64: 128, 32>}, {pipeline_mode = #tpu.pipeline_mode<synchronous>, transform_indices = @transform_5, window_bounds = array<i64: 8, 128>}, {pipeline_mode = #tpu.pipeline_mode<synchronous>, transform_indices = @transform_6, window_bounds = array<i64: 32, 96>}, {pipeline_mode = #tpu.pipeline_mode<synchronous>, transform_indices = @transform_7, window_bounds = array<i64: 32, 32>}, {pipeline_mode = #tpu.pipeline_mode<synchronous>, transform_indices = @transform_8, window_bounds = array<i64: 32, 128>}, {pipeline_mode = #tpu.pipeline_mode<synchronous>, transform_indices = @transform_9, window_bounds = array<i64: 128, 32>}, {pipeline_mode = #tpu.pipeline_mode<synchronous>, transform_indices = @transform_10, window_bounds = array<i64: 8, 128>}, {pipeline_mode = #tpu.pipeline_mode<synchronous>, transform_indices = @transform_11, window_bounds = array<i64: 32, 128>}, {pipeline_mode = #tpu.pipeline_mode<synchronous>, transform_indices = @transform_12, window_bounds = array<i64: 1, 128>}, {pipeline_mode = #tpu.pipeline_mode<synchronous>, transform_indices = @transform_13, window_bounds = array<i64: 2, 128>}]} {
    %c0 = arith.constant 0 : index
    %c0_0 = arith.constant 0 : index
    %0 = vector.load %arg1[%c0, %c0_0] : memref<16x32xf32, #tpu.memory_space<vmem>>, vector<16x32xf32>
    %c0_1 = arith.constant 0 : index
    %c0_2 = arith.constant 0 : index
    %1 = vector.load %arg6[%c0_1, %c0_2] : memref<8x128xf32, #tpu.memory_space<vmem>>, vector<8x128xf32>
    %2 = vector.extract_strided_slice %1 {offsets = [0, 0], sizes = [1, 32], strides = [1, 1]} : vector<8x128xf32> to vector<1x32xf32>
    %3 = vector.extract_strided_slice %1 {offsets = [1, 0], sizes = [1, 32], strides = [1, 1]} : vector<8x128xf32> to vector<1x32xf32>
    %4 = vector.extract_strided_slice %1 {offsets = [2, 0], sizes = [1, 32], strides = [1, 1]} : vector<8x128xf32> to vector<1x32xf32>
    %5 = vector.extract_strided_slice %1 {offsets = [3, 0], sizes = [1, 128], strides = [1, 1]} : vector<8x128xf32> to vector<1x128xf32>
    %6 = vector.extract_strided_slice %1 {offsets = [4, 0], sizes = [1, 32], strides = [1, 1]} : vector<8x128xf32> to vector<1x32xf32>
    %7 = vector.extract_strided_slice %1 {offsets = [5, 0], sizes = [1, 32], strides = [1, 1]} : vector<8x128xf32> to vector<1x32xf32>
    %8 = vector.extract_strided_slice %1 {offsets = [6, 0], sizes = [1, 32], strides = [1, 1]} : vector<8x128xf32> to vector<1x32xf32>
    %c0_3 = arith.constant 0 : index
    %c0_4 = arith.constant 0 : index
    %9 = vector.load %arg2[%c0_3, %c0_4] : memref<32x96xf32, #tpu.memory_space<vmem>>, vector<32x96xf32>
    %cst = arith.constant dense<0.000000e+00> : vector<16x96xf32>
    %10 = tpu.matmul %0, %9, %cst {dimension_numbers = #tpu.dot_dimension_numbers<[1], [0], [0], [1], [0, 0, 1, 1], [], []>} : vector<16x32xf32>, vector<32x96xf32>, vector<16x96xf32> -> vector<16x96xf32>
    %11 = vector.extract_strided_slice %10 {offsets = [0, 0], sizes = [16, 32], strides = [1, 1]} : vector<16x96xf32> to vector<16x32xf32>
    %12 = vector.extract_strided_slice %10 {offsets = [0, 32], sizes = [16, 32], strides = [1, 1]} : vector<16x96xf32> to vector<16x32xf32>
    %13 = vector.extract_strided_slice %10 {offsets = [0, 64], sizes = [16, 32], strides = [1, 1]} : vector<16x96xf32> to vector<16x32xf32>
    %14 = vector.extract_strided_slice %11 {offsets = [0, 0], sizes = [8, 32], strides = [1, 1]} : vector<16x32xf32> to vector<8x32xf32>
    %15 = vector.extract_strided_slice %12 {offsets = [0, 0], sizes = [8, 32], strides = [1, 1]} : vector<16x32xf32> to vector<8x32xf32>
    %16 = vector.extract_strided_slice %13 {offsets = [0, 0], sizes = [8, 32], strides = [1, 1]} : vector<16x32xf32> to vector<8x32xf32>
    %17 = vector.extract_strided_slice %14 {offsets = [0, 0], sizes = [8, 8], strides = [1, 1]} : vector<8x32xf32> to vector<8x8xf32>
    %18 = vector.extract_strided_slice %15 {offsets = [0, 0], sizes = [8, 8], strides = [1, 1]} : vector<8x32xf32> to vector<8x8xf32>
    %19 = tpu.transpose %18, [1, 0] : vector<8x8xf32> -> vector<8x8xf32>
    %cst_5 = arith.constant dense<0.000000e+00> : vector<8x8xf32>
    %20 = tpu.matmul %17, %19, %cst_5 {dimension_numbers = #tpu.dot_dimension_numbers<[1], [0], [0], [1], [0, 0, 1, 1], [], []>} : vector<8x8xf32>, vector<8x8xf32>, vector<8x8xf32> -> vector<8x8xf32>
    %cst_6 = arith.constant dense<0xFF800000> : vector<8xf32>
    %21 = vector.multi_reduction <maximumf>, %20, %cst_6 [1] : vector<8x8xf32> to vector<8xf32>
    %22 = vector.shape_cast %21 : vector<8xf32> to vector<8x1xf32>
    %23 = vector.broadcast %22 : vector<8x1xf32> to vector<8x8xf32>
    %24 = arith.subf %20, %23 : vector<8x8xf32>
    %25 = math.exp %24 : vector<8x8xf32>
    %cst_7 = arith.constant dense<0.000000e+00> : vector<8xf32>
    %26 = vector.multi_reduction <add>, %25, %cst_7 [1] : vector<8x8xf32> to vector<8xf32>
    %27 = vector.shape_cast %26 : vector<8xf32> to vector<8x1xf32>
    %28 = tpu.reciprocal %27 {approx = true} : vector<8x1xf32> -> vector<8x1xf32>
    %29 = vector.broadcast %28 : vector<8x1xf32> to vector<8x8xf32>
    %30 = arith.mulf %25, %29 : vector<8x8xf32>
    %31 = vector.extract_strided_slice %16 {offsets = [0, 0], sizes = [8, 8], strides = [1, 1]} : vector<8x32xf32> to vector<8x8xf32>
    %cst_8 = arith.constant dense<0.000000e+00> : vector<8x8xf32>
    %32 = tpu.matmul %30, %31, %cst_8 {dimension_numbers = #tpu.dot_dimension_numbers<[1], [0], [0], [1], [0, 0, 1, 1], [], []>} : vector<8x8xf32>, vector<8x8xf32>, vector<8x8xf32> -> vector<8x8xf32>
    %33 = vector.extract_strided_slice %14 {offsets = [0, 8], sizes = [8, 8], strides = [1, 1]} : vector<8x32xf32> to vector<8x8xf32>
    %34 = vector.extract_strided_slice %15 {offsets = [0, 8], sizes = [8, 8], strides = [1, 1]} : vector<8x32xf32> to vector<8x8xf32>
    %35 = tpu.transpose %34, [1, 0] : vector<8x8xf32> -> vector<8x8xf32>
    %cst_9 = arith.constant dense<0.000000e+00> : vector<8x8xf32>
    %36 = tpu.matmul %33, %35, %cst_9 {dimension_numbers = #tpu.dot_dimension_numbers<[1], [0], [0], [1], [0, 0, 1, 1], [], []>} : vector<8x8xf32>, vector<8x8xf32>, vector<8x8xf32> -> vector<8x8xf32>
    %cst_10 = arith.constant dense<0xFF800000> : vector<8xf32>
    %37 = vector.multi_reduction <maximumf>, %36, %cst_10 [1] : vector<8x8xf32> to vector<8xf32>
    %38 = vector.shape_cast %37 : vector<8xf32> to vector<8x1xf32>
    %39 = vector.broadcast %38 : vector<8x1xf32> to vector<8x8xf32>
    %40 = arith.subf %36, %39 : vector<8x8xf32>
    %41 = math.exp %40 : vector<8x8xf32>
    %cst_11 = arith.constant dense<0.000000e+00> : vector<8xf32>
    %42 = vector.multi_reduction <add>, %41, %cst_11 [1] : vector<8x8xf32> to vector<8xf32>
    %43 = vector.shape_cast %42 : vector<8xf32> to vector<8x1xf32>
    %44 = tpu.reciprocal %43 {approx = true} : vector<8x1xf32> -> vector<8x1xf32>
    %45 = vector.broadcast %44 : vector<8x1xf32> to vector<8x8xf32>
    %46 = arith.mulf %41, %45 : vector<8x8xf32>
    %47 = vector.extract_strided_slice %16 {offsets = [0, 8], sizes = [8, 8], strides = [1, 1]} : vector<8x32xf32> to vector<8x8xf32>
    %cst_12 = arith.constant dense<0.000000e+00> : vector<8x8xf32>
    %48 = tpu.matmul %46, %47, %cst_12 {dimension_numbers = #tpu.dot_dimension_numbers<[1], [0], [0], [1], [0, 0, 1, 1], [], []>} : vector<8x8xf32>, vector<8x8xf32>, vector<8x8xf32> -> vector<8x8xf32>
    %49 = vector.extract_strided_slice %14 {offsets = [0, 16], sizes = [8, 8], strides = [1, 1]} : vector<8x32xf32> to vector<8x8xf32>
    %50 = vector.extract_strided_slice %15 {offsets = [0, 16], sizes = [8, 8], strides = [1, 1]} : vector<8x32xf32> to vector<8x8xf32>
    %51 = tpu.transpose %50, [1, 0] : vector<8x8xf32> -> vector<8x8xf32>
    %cst_13 = arith.constant dense<0.000000e+00> : vector<8x8xf32>
    %52 = tpu.matmul %49, %51, %cst_13 {dimension_numbers = #tpu.dot_dimension_numbers<[1], [0], [0], [1], [0, 0, 1, 1], [], []>} : vector<8x8xf32>, vector<8x8xf32>, vector<8x8xf32> -> vector<8x8xf32>
    %cst_14 = arith.constant dense<0xFF800000> : vector<8xf32>
    %53 = vector.multi_reduction <maximumf>, %52, %cst_14 [1] : vector<8x8xf32> to vector<8xf32>
    %54 = vector.shape_cast %53 : vector<8xf32> to vector<8x1xf32>
    %55 = vector.broadcast %54 : vector<8x1xf32> to vector<8x8xf32>
    %56 = arith.subf %52, %55 : vector<8x8xf32>
    %57 = math.exp %56 : vector<8x8xf32>
    %cst_15 = arith.constant dense<0.000000e+00> : vector<8xf32>
    %58 = vector.multi_reduction <add>, %57, %cst_15 [1] : vector<8x8xf32> to vector<8xf32>
    %59 = vector.shape_cast %58 : vector<8xf32> to vector<8x1xf32>
    %60 = tpu.reciprocal %59 {approx = true} : vector<8x1xf32> -> vector<8x1xf32>
    %61 = vector.broadcast %60 : vector<8x1xf32> to vector<8x8xf32>
    %62 = arith.mulf %57, %61 : vector<8x8xf32>
    %63 = vector.extract_strided_slice %16 {offsets = [0, 16], sizes = [8, 8], strides = [1, 1]} : vector<8x32xf32> to vector<8x8xf32>
    %cst_16 = arith.constant dense<0.000000e+00> : vector<8x8xf32>
    %64 = tpu.matmul %62, %63, %cst_16 {dimension_numbers = #tpu.dot_dimension_numbers<[1], [0], [0], [1], [0, 0, 1, 1], [], []>} : vector<8x8xf32>, vector<8x8xf32>, vector<8x8xf32> -> vector<8x8xf32>
    %65 = vector.extract_strided_slice %14 {offsets = [0, 24], sizes = [8, 8], strides = [1, 1]} : vector<8x32xf32> to vector<8x8xf32>
    %66 = vector.extract_strided_slice %15 {offsets = [0, 24], sizes = [8, 8], strides = [1, 1]} : vector<8x32xf32> to vector<8x8xf32>
    %67 = tpu.transpose %66, [1, 0] : vector<8x8xf32> -> vector<8x8xf32>
    %cst_17 = arith.constant dense<0.000000e+00> : vector<8x8xf32>
    %68 = tpu.matmul %65, %67, %cst_17 {dimension_numbers = #tpu.dot_dimension_numbers<[1], [0], [0], [1], [0, 0, 1, 1], [], []>} : vector<8x8xf32>, vector<8x8xf32>, vector<8x8xf32> -> vector<8x8xf32>
    %cst_18 = arith.constant dense<0xFF800000> : vector<8xf32>
    %69 = vector.multi_reduction <maximumf>, %68, %cst_18 [1] : vector<8x8xf32> to vector<8xf32>
    %70 = vector.shape_cast %69 : vector<8xf32> to vector<8x1xf32>
    %71 = vector.broadcast %70 : vector<8x1xf32> to vector<8x8xf32>
    %72 = arith.subf %68, %71 : vector<8x8xf32>
    %73 = math.exp %72 : vector<8x8xf32>
    %cst_19 = arith.constant dense<0.000000e+00> : vector<8xf32>
    %74 = vector.multi_reduction <add>, %73, %cst_19 [1] : vector<8x8xf32> to vector<8xf32>
    %75 = vector.shape_cast %74 : vector<8xf32> to vector<8x1xf32>
    %76 = tpu.reciprocal %75 {approx = true} : vector<8x1xf32> -> vector<8x1xf32>
    %77 = vector.broadcast %76 : vector<8x1xf32> to vector<8x8xf32>
    %78 = arith.mulf %73, %77 : vector<8x8xf32>
    %79 = vector.extract_strided_slice %16 {offsets = [0, 24], sizes = [8, 8], strides = [1, 1]} : vector<8x32xf32> to vector<8x8xf32>
    %cst_20 = arith.constant dense<0.000000e+00> : vector<8x8xf32>
    %80 = tpu.matmul %78, %79, %cst_20 {dimension_numbers = #tpu.dot_dimension_numbers<[1], [0], [0], [1], [0, 0, 1, 1], [], []>} : vector<8x8xf32>, vector<8x8xf32>, vector<8x8xf32> -> vector<8x8xf32>
    %81 = tpu.concatenate %32, %48, %64, %80 in 1 : vector<8x8xf32>, vector<8x8xf32>, vector<8x8xf32>, vector<8x8xf32> -> vector<8x32xf32>
    %82 = vector.extract_strided_slice %11 {offsets = [8, 0], sizes = [8, 32], strides = [1, 1]} : vector<16x32xf32> to vector<8x32xf32>
    %83 = vector.extract_strided_slice %12 {offsets = [8, 0], sizes = [8, 32], strides = [1, 1]} : vector<16x32xf32> to vector<8x32xf32>
    %84 = vector.extract_strided_slice %13 {offsets = [8, 0], sizes = [8, 32], strides = [1, 1]} : vector<16x32xf32> to vector<8x32xf32>
    %85 = vector.extract_strided_slice %82 {offsets = [0, 0], sizes = [8, 8], strides = [1, 1]} : vector<8x32xf32> to vector<8x8xf32>
    %86 = vector.extract_strided_slice %83 {offsets = [0, 0], sizes = [8, 8], strides = [1, 1]} : vector<8x32xf32> to vector<8x8xf32>
    %87 = tpu.transpose %86, [1, 0] : vector<8x8xf32> -> vector<8x8xf32>
    %cst_21 = arith.constant dense<0.000000e+00> : vector<8x8xf32>
    %88 = tpu.matmul %85, %87, %cst_21 {dimension_numbers = #tpu.dot_dimension_numbers<[1], [0], [0], [1], [0, 0, 1, 1], [], []>} : vector<8x8xf32>, vector<8x8xf32>, vector<8x8xf32> -> vector<8x8xf32>
    %cst_22 = arith.constant dense<0xFF800000> : vector<8xf32>
    %89 = vector.multi_reduction <maximumf>, %88, %cst_22 [1] : vector<8x8xf32> to vector<8xf32>
    %90 = vector.shape_cast %89 : vector<8xf32> to vector<8x1xf32>
    %91 = vector.broadcast %90 : vector<8x1xf32> to vector<8x8xf32>
    %92 = arith.subf %88, %91 : vector<8x8xf32>
    %93 = math.exp %92 : vector<8x8xf32>
    %cst_23 = arith.constant dense<0.000000e+00> : vector<8xf32>
    %94 = vector.multi_reduction <add>, %93, %cst_23 [1] : vector<8x8xf32> to vector<8xf32>
    %95 = vector.shape_cast %94 : vector<8xf32> to vector<8x1xf32>
    %96 = tpu.reciprocal %95 {approx = true} : vector<8x1xf32> -> vector<8x1xf32>
    %97 = vector.broadcast %96 : vector<8x1xf32> to vector<8x8xf32>
    %98 = arith.mulf %93, %97 : vector<8x8xf32>
    %99 = vector.extract_strided_slice %84 {offsets = [0, 0], sizes = [8, 8], strides = [1, 1]} : vector<8x32xf32> to vector<8x8xf32>
    %cst_24 = arith.constant dense<0.000000e+00> : vector<8x8xf32>
    %100 = tpu.matmul %98, %99, %cst_24 {dimension_numbers = #tpu.dot_dimension_numbers<[1], [0], [0], [1], [0, 0, 1, 1], [], []>} : vector<8x8xf32>, vector<8x8xf32>, vector<8x8xf32> -> vector<8x8xf32>
    %101 = vector.extract_strided_slice %82 {offsets = [0, 8], sizes = [8, 8], strides = [1, 1]} : vector<8x32xf32> to vector<8x8xf32>
    %102 = vector.extract_strided_slice %83 {offsets = [0, 8], sizes = [8, 8], strides = [1, 1]} : vector<8x32xf32> to vector<8x8xf32>
    %103 = tpu.transpose %102, [1, 0] : vector<8x8xf32> -> vector<8x8xf32>
    %cst_25 = arith.constant dense<0.000000e+00> : vector<8x8xf32>
    %104 = tpu.matmul %101, %103, %cst_25 {dimension_numbers = #tpu.dot_dimension_numbers<[1], [0], [0], [1], [0, 0, 1, 1], [], []>} : vector<8x8xf32>, vector<8x8xf32>, vector<8x8xf32> -> vector<8x8xf32>
    %cst_26 = arith.constant dense<0xFF800000> : vector<8xf32>
    %105 = vector.multi_reduction <maximumf>, %104, %cst_26 [1] : vector<8x8xf32> to vector<8xf32>
    %106 = vector.shape_cast %105 : vector<8xf32> to vector<8x1xf32>
    %107 = vector.broadcast %106 : vector<8x1xf32> to vector<8x8xf32>
    %108 = arith.subf %104, %107 : vector<8x8xf32>
    %109 = math.exp %108 : vector<8x8xf32>
    %cst_27 = arith.constant dense<0.000000e+00> : vector<8xf32>
    %110 = vector.multi_reduction <add>, %109, %cst_27 [1] : vector<8x8xf32> to vector<8xf32>
    %111 = vector.shape_cast %110 : vector<8xf32> to vector<8x1xf32>
    %112 = tpu.reciprocal %111 {approx = true} : vector<8x1xf32> -> vector<8x1xf32>
    %113 = vector.broadcast %112 : vector<8x1xf32> to vector<8x8xf32>
    %114 = arith.mulf %109, %113 : vector<8x8xf32>
    %115 = vector.extract_strided_slice %84 {offsets = [0, 8], sizes = [8, 8], strides = [1, 1]} : vector<8x32xf32> to vector<8x8xf32>
    %cst_28 = arith.constant dense<0.000000e+00> : vector<8x8xf32>
    %116 = tpu.matmul %114, %115, %cst_28 {dimension_numbers = #tpu.dot_dimension_numbers<[1], [0], [0], [1], [0, 0, 1, 1], [], []>} : vector<8x8xf32>, vector<8x8xf32>, vector<8x8xf32> -> vector<8x8xf32>
    %117 = vector.extract_strided_slice %82 {offsets = [0, 16], sizes = [8, 8], strides = [1, 1]} : vector<8x32xf32> to vector<8x8xf32>
    %118 = vector.extract_strided_slice %83 {offsets = [0, 16], sizes = [8, 8], strides = [1, 1]} : vector<8x32xf32> to vector<8x8xf32>
    %119 = tpu.transpose %118, [1, 0] : vector<8x8xf32> -> vector<8x8xf32>
    %cst_29 = arith.constant dense<0.000000e+00> : vector<8x8xf32>
    %120 = tpu.matmul %117, %119, %cst_29 {dimension_numbers = #tpu.dot_dimension_numbers<[1], [0], [0], [1], [0, 0, 1, 1], [], []>} : vector<8x8xf32>, vector<8x8xf32>, vector<8x8xf32> -> vector<8x8xf32>
    %cst_30 = arith.constant dense<0xFF800000> : vector<8xf32>
    %121 = vector.multi_reduction <maximumf>, %120, %cst_30 [1] : vector<8x8xf32> to vector<8xf32>
    %122 = vector.shape_cast %121 : vector<8xf32> to vector<8x1xf32>
    %123 = vector.broadcast %122 : vector<8x1xf32> to vector<8x8xf32>
    %124 = arith.subf %120, %123 : vector<8x8xf32>
    %125 = math.exp %124 : vector<8x8xf32>
    %cst_31 = arith.constant dense<0.000000e+00> : vector<8xf32>
    %126 = vector.multi_reduction <add>, %125, %cst_31 [1] : vector<8x8xf32> to vector<8xf32>
    %127 = vector.shape_cast %126 : vector<8xf32> to vector<8x1xf32>
    %128 = tpu.reciprocal %127 {approx = true} : vector<8x1xf32> -> vector<8x1xf32>
    %129 = vector.broadcast %128 : vector<8x1xf32> to vector<8x8xf32>
    %130 = arith.mulf %125, %129 : vector<8x8xf32>
    %131 = vector.extract_strided_slice %84 {offsets = [0, 16], sizes = [8, 8], strides = [1, 1]} : vector<8x32xf32> to vector<8x8xf32>
    %cst_32 = arith.constant dense<0.000000e+00> : vector<8x8xf32>
    %132 = tpu.matmul %130, %131, %cst_32 {dimension_numbers = #tpu.dot_dimension_numbers<[1], [0], [0], [1], [0, 0, 1, 1], [], []>} : vector<8x8xf32>, vector<8x8xf32>, vector<8x8xf32> -> vector<8x8xf32>
    %133 = vector.extract_strided_slice %82 {offsets = [0, 24], sizes = [8, 8], strides = [1, 1]} : vector<8x32xf32> to vector<8x8xf32>
    %134 = vector.extract_strided_slice %83 {offsets = [0, 24], sizes = [8, 8], strides = [1, 1]} : vector<8x32xf32> to vector<8x8xf32>
    %135 = tpu.transpose %134, [1, 0] : vector<8x8xf32> -> vector<8x8xf32>
    %cst_33 = arith.constant dense<0.000000e+00> : vector<8x8xf32>
    %136 = tpu.matmul %133, %135, %cst_33 {dimension_numbers = #tpu.dot_dimension_numbers<[1], [0], [0], [1], [0, 0, 1, 1], [], []>} : vector<8x8xf32>, vector<8x8xf32>, vector<8x8xf32> -> vector<8x8xf32>
    %cst_34 = arith.constant dense<0xFF800000> : vector<8xf32>
    %137 = vector.multi_reduction <maximumf>, %136, %cst_34 [1] : vector<8x8xf32> to vector<8xf32>
    %138 = vector.shape_cast %137 : vector<8xf32> to vector<8x1xf32>
    %139 = vector.broadcast %138 : vector<8x1xf32> to vector<8x8xf32>
    %140 = arith.subf %136, %139 : vector<8x8xf32>
    %141 = math.exp %140 : vector<8x8xf32>
    %cst_35 = arith.constant dense<0.000000e+00> : vector<8xf32>
    %142 = vector.multi_reduction <add>, %141, %cst_35 [1] : vector<8x8xf32> to vector<8xf32>
    %143 = vector.shape_cast %142 : vector<8xf32> to vector<8x1xf32>
    %144 = tpu.reciprocal %143 {approx = true} : vector<8x1xf32> -> vector<8x1xf32>
    %145 = vector.broadcast %144 : vector<8x1xf32> to vector<8x8xf32>
    %146 = arith.mulf %141, %145 : vector<8x8xf32>
    %147 = vector.extract_strided_slice %84 {offsets = [0, 24], sizes = [8, 8], strides = [1, 1]} : vector<8x32xf32> to vector<8x8xf32>
    %cst_36 = arith.constant dense<0.000000e+00> : vector<8x8xf32>
    %148 = tpu.matmul %146, %147, %cst_36 {dimension_numbers = #tpu.dot_dimension_numbers<[1], [0], [0], [1], [0, 0, 1, 1], [], []>} : vector<8x8xf32>, vector<8x8xf32>, vector<8x8xf32> -> vector<8x8xf32>
    %149 = tpu.concatenate %100, %116, %132, %148 in 1 : vector<8x8xf32>, vector<8x8xf32>, vector<8x8xf32>, vector<8x8xf32> -> vector<8x32xf32>
    %150 = tpu.concatenate %81, %149 in 0 : vector<8x32xf32>, vector<8x32xf32> -> vector<16x32xf32>
    %c0_37 = arith.constant 0 : index
    %c0_38 = arith.constant 0 : index
    %151 = vector.load %arg3[%c0_37, %c0_38] : memref<32x32xf32, #tpu.memory_space<vmem>>, vector<32x32xf32>
    %cst_39 = arith.constant dense<0.000000e+00> : vector<16x32xf32>
    %152 = tpu.matmul %150, %151, %cst_39 {dimension_numbers = #tpu.dot_dimension_numbers<[1], [0], [0], [1], [0, 0, 1, 1], [], []>} : vector<16x32xf32>, vector<32x32xf32>, vector<16x32xf32> -> vector<16x32xf32>
    %153 = vector.broadcast %2 : vector<1x32xf32> to vector<16x32xf32>
    %154 = arith.addf %152, %153 : vector<16x32xf32>
    %155 = arith.addf %154, %0 : vector<16x32xf32>
    %cst_40 = arith.constant dense<0.000000e+00> : vector<16xf32>
    %156 = vector.multi_reduction <add>, %155, %cst_40 [1] : vector<16x32xf32> to vector<16xf32>
    %157 = vector.shape_cast %156 : vector<16xf32> to vector<16x1xf32>
    %cst_41 = arith.constant 3.200000e+01 : f32
    %158 = vector.broadcast %cst_41 : f32 to vector<16x1xf32>
    %159 = arith.divf %157, %158 : vector<16x1xf32>
    %160 = vector.broadcast %159 : vector<16x1xf32> to vector<16x32xf32>
    %161 = arith.subf %155, %160 : vector<16x32xf32>
    %162 = arith.mulf %161, %161 : vector<16x32xf32>
    %cst_42 = arith.constant dense<0.000000e+00> : vector<16xf32>
    %163 = vector.multi_reduction <add>, %162, %cst_42 [1] : vector<16x32xf32> to vector<16xf32>
    %164 = vector.shape_cast %163 : vector<16xf32> to vector<16x1xf32>
    %cst_43 = arith.constant 3.200000e+01 : f32
    %165 = vector.broadcast %cst_43 : f32 to vector<16x1xf32>
    %166 = arith.divf %164, %165 : vector<16x1xf32>
    %cst_44 = arith.constant 9.99999974E-6 : f32
    %167 = vector.broadcast %cst_44 : f32 to vector<16x1xf32>
    %168 = arith.addf %166, %167 : vector<16x1xf32>
    %169 = math.rsqrt %168 : vector<16x1xf32>
    %170 = vector.broadcast %159 : vector<16x1xf32> to vector<16x32xf32>
    %171 = arith.subf %155, %170 : vector<16x32xf32>
    %172 = vector.broadcast %169 : vector<16x1xf32> to vector<16x32xf32>
    %173 = arith.mulf %171, %172 : vector<16x32xf32>
    %174 = vector.broadcast %3 : vector<1x32xf32> to vector<16x32xf32>
    %175 = arith.mulf %173, %174 : vector<16x32xf32>
    %176 = vector.broadcast %4 : vector<1x32xf32> to vector<16x32xf32>
    %177 = arith.addf %175, %176 : vector<16x32xf32>
    %c0_45 = arith.constant 0 : index
    %c0_46 = arith.constant 0 : index
    %178 = vector.load %arg4[%c0_45, %c0_46] : memref<32x128xf32, #tpu.memory_space<vmem>>, vector<32x128xf32>
    %cst_47 = arith.constant dense<0.000000e+00> : vector<16x128xf32>
    %179 = tpu.matmul %177, %178, %cst_47 {dimension_numbers = #tpu.dot_dimension_numbers<[1], [0], [0], [1], [0, 0, 1, 1], [], []>} : vector<16x32xf32>, vector<32x128xf32>, vector<16x128xf32> -> vector<16x128xf32>
    %180 = vector.broadcast %5 : vector<1x128xf32> to vector<16x128xf32>
    %181 = arith.addf %179, %180 : vector<16x128xf32>
    %cst_48 = arith.constant 0.000000e+00 : f32
    %182 = vector.broadcast %cst_48 : f32 to vector<16x128xf32>
    %183 = arith.maximumf %181, %182 : vector<16x128xf32>
    %c0_49 = arith.constant 0 : index
    %c0_50 = arith.constant 0 : index
    %184 = vector.load %arg5[%c0_49, %c0_50] : memref<128x32xf32, #tpu.memory_space<vmem>>, vector<128x32xf32>
    %cst_51 = arith.constant dense<0.000000e+00> : vector<16x32xf32>
    %185 = tpu.matmul %183, %184, %cst_51 {dimension_numbers = #tpu.dot_dimension_numbers<[1], [0], [0], [1], [0, 0, 1, 1], [], []>} : vector<16x128xf32>, vector<128x32xf32>, vector<16x32xf32> -> vector<16x32xf32>
    %186 = vector.broadcast %6 : vector<1x32xf32> to vector<16x32xf32>
    %187 = arith.addf %185, %186 : vector<16x32xf32>
    %188 = arith.addf %187, %177 : vector<16x32xf32>
    %cst_52 = arith.constant dense<0.000000e+00> : vector<16xf32>
    %189 = vector.multi_reduction <add>, %188, %cst_52 [1] : vector<16x32xf32> to vector<16xf32>
    %190 = vector.shape_cast %189 : vector<16xf32> to vector<16x1xf32>
    %cst_53 = arith.constant 3.200000e+01 : f32
    %191 = vector.broadcast %cst_53 : f32 to vector<16x1xf32>
    %192 = arith.divf %190, %191 : vector<16x1xf32>
    %193 = vector.broadcast %192 : vector<16x1xf32> to vector<16x32xf32>
    %194 = arith.subf %188, %193 : vector<16x32xf32>
    %195 = arith.mulf %194, %194 : vector<16x32xf32>
    %cst_54 = arith.constant dense<0.000000e+00> : vector<16xf32>
    %196 = vector.multi_reduction <add>, %195, %cst_54 [1] : vector<16x32xf32> to vector<16xf32>
    %197 = vector.shape_cast %196 : vector<16xf32> to vector<16x1xf32>
    %cst_55 = arith.constant 3.200000e+01 : f32
    %198 = vector.broadcast %cst_55 : f32 to vector<16x1xf32>
    %199 = arith.divf %197, %198 : vector<16x1xf32>
    %cst_56 = arith.constant 9.99999974E-6 : f32
    %200 = vector.broadcast %cst_56 : f32 to vector<16x1xf32>
    %201 = arith.addf %199, %200 : vector<16x1xf32>
    %202 = math.rsqrt %201 : vector<16x1xf32>
    %203 = vector.broadcast %192 : vector<16x1xf32> to vector<16x32xf32>
    %204 = arith.subf %188, %203 : vector<16x32xf32>
    %205 = vector.broadcast %202 : vector<16x1xf32> to vector<16x32xf32>
    %206 = arith.mulf %204, %205 : vector<16x32xf32>
    %207 = vector.broadcast %7 : vector<1x32xf32> to vector<16x32xf32>
    %208 = arith.mulf %206, %207 : vector<16x32xf32>
    %209 = vector.broadcast %8 : vector<1x32xf32> to vector<16x32xf32>
    %210 = arith.addf %208, %209 : vector<16x32xf32>
    %c0_57 = arith.constant 0 : index
    %c0_58 = arith.constant 0 : index
    %211 = vector.load %arg11[%c0_57, %c0_58] : memref<8x128xf32, #tpu.memory_space<vmem>>, vector<8x128xf32>
    %212 = vector.extract_strided_slice %211 {offsets = [0, 0], sizes = [1, 32], strides = [1, 1]} : vector<8x128xf32> to vector<1x32xf32>
    %213 = vector.extract_strided_slice %211 {offsets = [1, 0], sizes = [1, 32], strides = [1, 1]} : vector<8x128xf32> to vector<1x32xf32>
    %214 = vector.extract_strided_slice %211 {offsets = [2, 0], sizes = [1, 32], strides = [1, 1]} : vector<8x128xf32> to vector<1x32xf32>
    %215 = vector.extract_strided_slice %211 {offsets = [3, 0], sizes = [1, 128], strides = [1, 1]} : vector<8x128xf32> to vector<1x128xf32>
    %216 = vector.extract_strided_slice %211 {offsets = [4, 0], sizes = [1, 32], strides = [1, 1]} : vector<8x128xf32> to vector<1x32xf32>
    %217 = vector.extract_strided_slice %211 {offsets = [5, 0], sizes = [1, 32], strides = [1, 1]} : vector<8x128xf32> to vector<1x32xf32>
    %218 = vector.extract_strided_slice %211 {offsets = [6, 0], sizes = [1, 32], strides = [1, 1]} : vector<8x128xf32> to vector<1x32xf32>
    %c0_59 = arith.constant 0 : index
    %c0_60 = arith.constant 0 : index
    %219 = vector.load %arg7[%c0_59, %c0_60] : memref<32x96xf32, #tpu.memory_space<vmem>>, vector<32x96xf32>
    %cst_61 = arith.constant dense<0.000000e+00> : vector<16x96xf32>
    %220 = tpu.matmul %210, %219, %cst_61 {dimension_numbers = #tpu.dot_dimension_numbers<[1], [0], [0], [1], [0, 0, 1, 1], [], []>} : vector<16x32xf32>, vector<32x96xf32>, vector<16x96xf32> -> vector<16x96xf32>
    %221 = vector.extract_strided_slice %220 {offsets = [0, 0], sizes = [16, 32], strides = [1, 1]} : vector<16x96xf32> to vector<16x32xf32>
    %222 = vector.extract_strided_slice %220 {offsets = [0, 32], sizes = [16, 32], strides = [1, 1]} : vector<16x96xf32> to vector<16x32xf32>
    %223 = vector.extract_strided_slice %220 {offsets = [0, 64], sizes = [16, 32], strides = [1, 1]} : vector<16x96xf32> to vector<16x32xf32>
    %224 = vector.extract_strided_slice %221 {offsets = [0, 0], sizes = [8, 32], strides = [1, 1]} : vector<16x32xf32> to vector<8x32xf32>
    %225 = vector.extract_strided_slice %222 {offsets = [0, 0], sizes = [8, 32], strides = [1, 1]} : vector<16x32xf32> to vector<8x32xf32>
    %226 = vector.extract_strided_slice %223 {offsets = [0, 0], sizes = [8, 32], strides = [1, 1]} : vector<16x32xf32> to vector<8x32xf32>
    %227 = vector.extract_strided_slice %224 {offsets = [0, 0], sizes = [8, 8], strides = [1, 1]} : vector<8x32xf32> to vector<8x8xf32>
    %228 = vector.extract_strided_slice %225 {offsets = [0, 0], sizes = [8, 8], strides = [1, 1]} : vector<8x32xf32> to vector<8x8xf32>
    %229 = tpu.transpose %228, [1, 0] : vector<8x8xf32> -> vector<8x8xf32>
    %cst_62 = arith.constant dense<0.000000e+00> : vector<8x8xf32>
    %230 = tpu.matmul %227, %229, %cst_62 {dimension_numbers = #tpu.dot_dimension_numbers<[1], [0], [0], [1], [0, 0, 1, 1], [], []>} : vector<8x8xf32>, vector<8x8xf32>, vector<8x8xf32> -> vector<8x8xf32>
    %cst_63 = arith.constant dense<0xFF800000> : vector<8xf32>
    %231 = vector.multi_reduction <maximumf>, %230, %cst_63 [1] : vector<8x8xf32> to vector<8xf32>
    %232 = vector.shape_cast %231 : vector<8xf32> to vector<8x1xf32>
    %233 = vector.broadcast %232 : vector<8x1xf32> to vector<8x8xf32>
    %234 = arith.subf %230, %233 : vector<8x8xf32>
    %235 = math.exp %234 : vector<8x8xf32>
    %cst_64 = arith.constant dense<0.000000e+00> : vector<8xf32>
    %236 = vector.multi_reduction <add>, %235, %cst_64 [1] : vector<8x8xf32> to vector<8xf32>
    %237 = vector.shape_cast %236 : vector<8xf32> to vector<8x1xf32>
    %238 = tpu.reciprocal %237 {approx = true} : vector<8x1xf32> -> vector<8x1xf32>
    %239 = vector.broadcast %238 : vector<8x1xf32> to vector<8x8xf32>
    %240 = arith.mulf %235, %239 : vector<8x8xf32>
    %241 = vector.extract_strided_slice %226 {offsets = [0, 0], sizes = [8, 8], strides = [1, 1]} : vector<8x32xf32> to vector<8x8xf32>
    %cst_65 = arith.constant dense<0.000000e+00> : vector<8x8xf32>
    %242 = tpu.matmul %240, %241, %cst_65 {dimension_numbers = #tpu.dot_dimension_numbers<[1], [0], [0], [1], [0, 0, 1, 1], [], []>} : vector<8x8xf32>, vector<8x8xf32>, vector<8x8xf32> -> vector<8x8xf32>
    %243 = vector.extract_strided_slice %224 {offsets = [0, 8], sizes = [8, 8], strides = [1, 1]} : vector<8x32xf32> to vector<8x8xf32>
    %244 = vector.extract_strided_slice %225 {offsets = [0, 8], sizes = [8, 8], strides = [1, 1]} : vector<8x32xf32> to vector<8x8xf32>
    %245 = tpu.transpose %244, [1, 0] : vector<8x8xf32> -> vector<8x8xf32>
    %cst_66 = arith.constant dense<0.000000e+00> : vector<8x8xf32>
    %246 = tpu.matmul %243, %245, %cst_66 {dimension_numbers = #tpu.dot_dimension_numbers<[1], [0], [0], [1], [0, 0, 1, 1], [], []>} : vector<8x8xf32>, vector<8x8xf32>, vector<8x8xf32> -> vector<8x8xf32>
    %cst_67 = arith.constant dense<0xFF800000> : vector<8xf32>
    %247 = vector.multi_reduction <maximumf>, %246, %cst_67 [1] : vector<8x8xf32> to vector<8xf32>
    %248 = vector.shape_cast %247 : vector<8xf32> to vector<8x1xf32>
    %249 = vector.broadcast %248 : vector<8x1xf32> to vector<8x8xf32>
    %250 = arith.subf %246, %249 : vector<8x8xf32>
    %251 = math.exp %250 : vector<8x8xf32>
    %cst_68 = arith.constant dense<0.000000e+00> : vector<8xf32>
    %252 = vector.multi_reduction <add>, %251, %cst_68 [1] : vector<8x8xf32> to vector<8xf32>
    %253 = vector.shape_cast %252 : vector<8xf32> to vector<8x1xf32>
    %254 = tpu.reciprocal %253 {approx = true} : vector<8x1xf32> -> vector<8x1xf32>
    %255 = vector.broadcast %254 : vector<8x1xf32> to vector<8x8xf32>
    %256 = arith.mulf %251, %255 : vector<8x8xf32>
    %257 = vector.extract_strided_slice %226 {offsets = [0, 8], sizes = [8, 8], strides = [1, 1]} : vector<8x32xf32> to vector<8x8xf32>
    %cst_69 = arith.constant dense<0.000000e+00> : vector<8x8xf32>
    %258 = tpu.matmul %256, %257, %cst_69 {dimension_numbers = #tpu.dot_dimension_numbers<[1], [0], [0], [1], [0, 0, 1, 1], [], []>} : vector<8x8xf32>, vector<8x8xf32>, vector<8x8xf32> -> vector<8x8xf32>
    %259 = vector.extract_strided_slice %224 {offsets = [0, 16], sizes = [8, 8], strides = [1, 1]} : vector<8x32xf32> to vector<8x8xf32>
    %260 = vector.extract_strided_slice %225 {offsets = [0, 16], sizes = [8, 8], strides = [1, 1]} : vector<8x32xf32> to vector<8x8xf32>
    %261 = tpu.transpose %260, [1, 0] : vector<8x8xf32> -> vector<8x8xf32>
    %cst_70 = arith.constant dense<0.000000e+00> : vector<8x8xf32>
    %262 = tpu.matmul %259, %261, %cst_70 {dimension_numbers = #tpu.dot_dimension_numbers<[1], [0], [0], [1], [0, 0, 1, 1], [], []>} : vector<8x8xf32>, vector<8x8xf32>, vector<8x8xf32> -> vector<8x8xf32>
    %cst_71 = arith.constant dense<0xFF800000> : vector<8xf32>
    %263 = vector.multi_reduction <maximumf>, %262, %cst_71 [1] : vector<8x8xf32> to vector<8xf32>
    %264 = vector.shape_cast %263 : vector<8xf32> to vector<8x1xf32>
    %265 = vector.broadcast %264 : vector<8x1xf32> to vector<8x8xf32>
    %266 = arith.subf %262, %265 : vector<8x8xf32>
    %267 = math.exp %266 : vector<8x8xf32>
    %cst_72 = arith.constant dense<0.000000e+00> : vector<8xf32>
    %268 = vector.multi_reduction <add>, %267, %cst_72 [1] : vector<8x8xf32> to vector<8xf32>
    %269 = vector.shape_cast %268 : vector<8xf32> to vector<8x1xf32>
    %270 = tpu.reciprocal %269 {approx = true} : vector<8x1xf32> -> vector<8x1xf32>
    %271 = vector.broadcast %270 : vector<8x1xf32> to vector<8x8xf32>
    %272 = arith.mulf %267, %271 : vector<8x8xf32>
    %273 = vector.extract_strided_slice %226 {offsets = [0, 16], sizes = [8, 8], strides = [1, 1]} : vector<8x32xf32> to vector<8x8xf32>
    %cst_73 = arith.constant dense<0.000000e+00> : vector<8x8xf32>
    %274 = tpu.matmul %272, %273, %cst_73 {dimension_numbers = #tpu.dot_dimension_numbers<[1], [0], [0], [1], [0, 0, 1, 1], [], []>} : vector<8x8xf32>, vector<8x8xf32>, vector<8x8xf32> -> vector<8x8xf32>
    %275 = vector.extract_strided_slice %224 {offsets = [0, 24], sizes = [8, 8], strides = [1, 1]} : vector<8x32xf32> to vector<8x8xf32>
    %276 = vector.extract_strided_slice %225 {offsets = [0, 24], sizes = [8, 8], strides = [1, 1]} : vector<8x32xf32> to vector<8x8xf32>
    %277 = tpu.transpose %276, [1, 0] : vector<8x8xf32> -> vector<8x8xf32>
    %cst_74 = arith.constant dense<0.000000e+00> : vector<8x8xf32>
    %278 = tpu.matmul %275, %277, %cst_74 {dimension_numbers = #tpu.dot_dimension_numbers<[1], [0], [0], [1], [0, 0, 1, 1], [], []>} : vector<8x8xf32>, vector<8x8xf32>, vector<8x8xf32> -> vector<8x8xf32>
    %cst_75 = arith.constant dense<0xFF800000> : vector<8xf32>
    %279 = vector.multi_reduction <maximumf>, %278, %cst_75 [1] : vector<8x8xf32> to vector<8xf32>
    %280 = vector.shape_cast %279 : vector<8xf32> to vector<8x1xf32>
    %281 = vector.broadcast %280 : vector<8x1xf32> to vector<8x8xf32>
    %282 = arith.subf %278, %281 : vector<8x8xf32>
    %283 = math.exp %282 : vector<8x8xf32>
    %cst_76 = arith.constant dense<0.000000e+00> : vector<8xf32>
    %284 = vector.multi_reduction <add>, %283, %cst_76 [1] : vector<8x8xf32> to vector<8xf32>
    %285 = vector.shape_cast %284 : vector<8xf32> to vector<8x1xf32>
    %286 = tpu.reciprocal %285 {approx = true} : vector<8x1xf32> -> vector<8x1xf32>
    %287 = vector.broadcast %286 : vector<8x1xf32> to vector<8x8xf32>
    %288 = arith.mulf %283, %287 : vector<8x8xf32>
    %289 = vector.extract_strided_slice %226 {offsets = [0, 24], sizes = [8, 8], strides = [1, 1]} : vector<8x32xf32> to vector<8x8xf32>
    %cst_77 = arith.constant dense<0.000000e+00> : vector<8x8xf32>
    %290 = tpu.matmul %288, %289, %cst_77 {dimension_numbers = #tpu.dot_dimension_numbers<[1], [0], [0], [1], [0, 0, 1, 1], [], []>} : vector<8x8xf32>, vector<8x8xf32>, vector<8x8xf32> -> vector<8x8xf32>
    %291 = tpu.concatenate %242, %258, %274, %290 in 1 : vector<8x8xf32>, vector<8x8xf32>, vector<8x8xf32>, vector<8x8xf32> -> vector<8x32xf32>
    %292 = vector.extract_strided_slice %221 {offsets = [8, 0], sizes = [8, 32], strides = [1, 1]} : vector<16x32xf32> to vector<8x32xf32>
    %293 = vector.extract_strided_slice %222 {offsets = [8, 0], sizes = [8, 32], strides = [1, 1]} : vector<16x32xf32> to vector<8x32xf32>
    %294 = vector.extract_strided_slice %223 {offsets = [8, 0], sizes = [8, 32], strides = [1, 1]} : vector<16x32xf32> to vector<8x32xf32>
    %295 = vector.extract_strided_slice %292 {offsets = [0, 0], sizes = [8, 8], strides = [1, 1]} : vector<8x32xf32> to vector<8x8xf32>
    %296 = vector.extract_strided_slice %293 {offsets = [0, 0], sizes = [8, 8], strides = [1, 1]} : vector<8x32xf32> to vector<8x8xf32>
    %297 = tpu.transpose %296, [1, 0] : vector<8x8xf32> -> vector<8x8xf32>
    %cst_78 = arith.constant dense<0.000000e+00> : vector<8x8xf32>
    %298 = tpu.matmul %295, %297, %cst_78 {dimension_numbers = #tpu.dot_dimension_numbers<[1], [0], [0], [1], [0, 0, 1, 1], [], []>} : vector<8x8xf32>, vector<8x8xf32>, vector<8x8xf32> -> vector<8x8xf32>
    %cst_79 = arith.constant dense<0xFF800000> : vector<8xf32>
    %299 = vector.multi_reduction <maximumf>, %298, %cst_79 [1] : vector<8x8xf32> to vector<8xf32>
    %300 = vector.shape_cast %299 : vector<8xf32> to vector<8x1xf32>
    %301 = vector.broadcast %300 : vector<8x1xf32> to vector<8x8xf32>
    %302 = arith.subf %298, %301 : vector<8x8xf32>
    %303 = math.exp %302 : vector<8x8xf32>
    %cst_80 = arith.constant dense<0.000000e+00> : vector<8xf32>
    %304 = vector.multi_reduction <add>, %303, %cst_80 [1] : vector<8x8xf32> to vector<8xf32>
    %305 = vector.shape_cast %304 : vector<8xf32> to vector<8x1xf32>
    %306 = tpu.reciprocal %305 {approx = true} : vector<8x1xf32> -> vector<8x1xf32>
    %307 = vector.broadcast %306 : vector<8x1xf32> to vector<8x8xf32>
    %308 = arith.mulf %303, %307 : vector<8x8xf32>
    %309 = vector.extract_strided_slice %294 {offsets = [0, 0], sizes = [8, 8], strides = [1, 1]} : vector<8x32xf32> to vector<8x8xf32>
    %cst_81 = arith.constant dense<0.000000e+00> : vector<8x8xf32>
    %310 = tpu.matmul %308, %309, %cst_81 {dimension_numbers = #tpu.dot_dimension_numbers<[1], [0], [0], [1], [0, 0, 1, 1], [], []>} : vector<8x8xf32>, vector<8x8xf32>, vector<8x8xf32> -> vector<8x8xf32>
    %311 = vector.extract_strided_slice %292 {offsets = [0, 8], sizes = [8, 8], strides = [1, 1]} : vector<8x32xf32> to vector<8x8xf32>
    %312 = vector.extract_strided_slice %293 {offsets = [0, 8], sizes = [8, 8], strides = [1, 1]} : vector<8x32xf32> to vector<8x8xf32>
    %313 = tpu.transpose %312, [1, 0] : vector<8x8xf32> -> vector<8x8xf32>
    %cst_82 = arith.constant dense<0.000000e+00> : vector<8x8xf32>
    %314 = tpu.matmul %311, %313, %cst_82 {dimension_numbers = #tpu.dot_dimension_numbers<[1], [0], [0], [1], [0, 0, 1, 1], [], []>} : vector<8x8xf32>, vector<8x8xf32>, vector<8x8xf32> -> vector<8x8xf32>
    %cst_83 = arith.constant dense<0xFF800000> : vector<8xf32>
    %315 = vector.multi_reduction <maximumf>, %314, %cst_83 [1] : vector<8x8xf32> to vector<8xf32>
    %316 = vector.shape_cast %315 : vector<8xf32> to vector<8x1xf32>
    %317 = vector.broadcast %316 : vector<8x1xf32> to vector<8x8xf32>
    %318 = arith.subf %314, %317 : vector<8x8xf32>
    %319 = math.exp %318 : vector<8x8xf32>
    %cst_84 = arith.constant dense<0.000000e+00> : vector<8xf32>
    %320 = vector.multi_reduction <add>, %319, %cst_84 [1] : vector<8x8xf32> to vector<8xf32>
    %321 = vector.shape_cast %320 : vector<8xf32> to vector<8x1xf32>
    %322 = tpu.reciprocal %321 {approx = true} : vector<8x1xf32> -> vector<8x1xf32>
    %323 = vector.broadcast %322 : vector<8x1xf32> to vector<8x8xf32>
    %324 = arith.mulf %319, %323 : vector<8x8xf32>
    %325 = vector.extract_strided_slice %294 {offsets = [0, 8], sizes = [8, 8], strides = [1, 1]} : vector<8x32xf32> to vector<8x8xf32>
    %cst_85 = arith.constant dense<0.000000e+00> : vector<8x8xf32>
    %326 = tpu.matmul %324, %325, %cst_85 {dimension_numbers = #tpu.dot_dimension_numbers<[1], [0], [0], [1], [0, 0, 1, 1], [], []>} : vector<8x8xf32>, vector<8x8xf32>, vector<8x8xf32> -> vector<8x8xf32>
    %327 = vector.extract_strided_slice %292 {offsets = [0, 16], sizes = [8, 8], strides = [1, 1]} : vector<8x32xf32> to vector<8x8xf32>
    %328 = vector.extract_strided_slice %293 {offsets = [0, 16], sizes = [8, 8], strides = [1, 1]} : vector<8x32xf32> to vector<8x8xf32>
    %329 = tpu.transpose %328, [1, 0] : vector<8x8xf32> -> vector<8x8xf32>
    %cst_86 = arith.constant dense<0.000000e+00> : vector<8x8xf32>
    %330 = tpu.matmul %327, %329, %cst_86 {dimension_numbers = #tpu.dot_dimension_numbers<[1], [0], [0], [1], [0, 0, 1, 1], [], []>} : vector<8x8xf32>, vector<8x8xf32>, vector<8x8xf32> -> vector<8x8xf32>
    %cst_87 = arith.constant dense<0xFF800000> : vector<8xf32>
    %331 = vector.multi_reduction <maximumf>, %330, %cst_87 [1] : vector<8x8xf32> to vector<8xf32>
    %332 = vector.shape_cast %331 : vector<8xf32> to vector<8x1xf32>
    %333 = vector.broadcast %332 : vector<8x1xf32> to vector<8x8xf32>
    %334 = arith.subf %330, %333 : vector<8x8xf32>
    %335 = math.exp %334 : vector<8x8xf32>
    %cst_88 = arith.constant dense<0.000000e+00> : vector<8xf32>
    %336 = vector.multi_reduction <add>, %335, %cst_88 [1] : vector<8x8xf32> to vector<8xf32>
    %337 = vector.shape_cast %336 : vector<8xf32> to vector<8x1xf32>
    %338 = tpu.reciprocal %337 {approx = true} : vector<8x1xf32> -> vector<8x1xf32>
    %339 = vector.broadcast %338 : vector<8x1xf32> to vector<8x8xf32>
    %340 = arith.mulf %335, %339 : vector<8x8xf32>
    %341 = vector.extract_strided_slice %294 {offsets = [0, 16], sizes = [8, 8], strides = [1, 1]} : vector<8x32xf32> to vector<8x8xf32>
    %cst_89 = arith.constant dense<0.000000e+00> : vector<8x8xf32>
    %342 = tpu.matmul %340, %341, %cst_89 {dimension_numbers = #tpu.dot_dimension_numbers<[1], [0], [0], [1], [0, 0, 1, 1], [], []>} : vector<8x8xf32>, vector<8x8xf32>, vector<8x8xf32> -> vector<8x8xf32>
    %343 = vector.extract_strided_slice %292 {offsets = [0, 24], sizes = [8, 8], strides = [1, 1]} : vector<8x32xf32> to vector<8x8xf32>
    %344 = vector.extract_strided_slice %293 {offsets = [0, 24], sizes = [8, 8], strides = [1, 1]} : vector<8x32xf32> to vector<8x8xf32>
    %345 = tpu.transpose %344, [1, 0] : vector<8x8xf32> -> vector<8x8xf32>
    %cst_90 = arith.constant dense<0.000000e+00> : vector<8x8xf32>
    %346 = tpu.matmul %343, %345, %cst_90 {dimension_numbers = #tpu.dot_dimension_numbers<[1], [0], [0], [1], [0, 0, 1, 1], [], []>} : vector<8x8xf32>, vector<8x8xf32>, vector<8x8xf32> -> vector<8x8xf32>
    %cst_91 = arith.constant dense<0xFF800000> : vector<8xf32>
    %347 = vector.multi_reduction <maximumf>, %346, %cst_91 [1] : vector<8x8xf32> to vector<8xf32>
    %348 = vector.shape_cast %347 : vector<8xf32> to vector<8x1xf32>
    %349 = vector.broadcast %348 : vector<8x1xf32> to vector<8x8xf32>
    %350 = arith.subf %346, %349 : vector<8x8xf32>
    %351 = math.exp %350 : vector<8x8xf32>
    %cst_92 = arith.constant dense<0.000000e+00> : vector<8xf32>
    %352 = vector.multi_reduction <add>, %351, %cst_92 [1] : vector<8x8xf32> to vector<8xf32>
    %353 = vector.shape_cast %352 : vector<8xf32> to vector<8x1xf32>
    %354 = tpu.reciprocal %353 {approx = true} : vector<8x1xf32> -> vector<8x1xf32>
    %355 = vector.broadcast %354 : vector<8x1xf32> to vector<8x8xf32>
    %356 = arith.mulf %351, %355 : vector<8x8xf32>
    %357 = vector.extract_strided_slice %294 {offsets = [0, 24], sizes = [8, 8], strides = [1, 1]} : vector<8x32xf32> to vector<8x8xf32>
    %cst_93 = arith.constant dense<0.000000e+00> : vector<8x8xf32>
    %358 = tpu.matmul %356, %357, %cst_93 {dimension_numbers = #tpu.dot_dimension_numbers<[1], [0], [0], [1], [0, 0, 1, 1], [], []>} : vector<8x8xf32>, vector<8x8xf32>, vector<8x8xf32> -> vector<8x8xf32>
    %359 = tpu.concatenate %310, %326, %342, %358 in 1 : vector<8x8xf32>, vector<8x8xf32>, vector<8x8xf32>, vector<8x8xf32> -> vector<8x32xf32>
    %360 = tpu.concatenate %291, %359 in 0 : vector<8x32xf32>, vector<8x32xf32> -> vector<16x32xf32>
    %c0_94 = arith.constant 0 : index
    %c0_95 = arith.constant 0 : index
    %361 = vector.load %arg8[%c0_94, %c0_95] : memref<32x32xf32, #tpu.memory_space<vmem>>, vector<32x32xf32>
    %cst_96 = arith.constant dense<0.000000e+00> : vector<16x32xf32>
    %362 = tpu.matmul %360, %361, %cst_96 {dimension_numbers = #tpu.dot_dimension_numbers<[1], [0], [0], [1], [0, 0, 1, 1], [], []>} : vector<16x32xf32>, vector<32x32xf32>, vector<16x32xf32> -> vector<16x32xf32>
    %363 = vector.broadcast %212 : vector<1x32xf32> to vector<16x32xf32>
    %364 = arith.addf %362, %363 : vector<16x32xf32>
    %365 = arith.addf %364, %210 : vector<16x32xf32>
    %cst_97 = arith.constant dense<0.000000e+00> : vector<16xf32>
    %366 = vector.multi_reduction <add>, %365, %cst_97 [1] : vector<16x32xf32> to vector<16xf32>
    %367 = vector.shape_cast %366 : vector<16xf32> to vector<16x1xf32>
    %cst_98 = arith.constant 3.200000e+01 : f32
    %368 = vector.broadcast %cst_98 : f32 to vector<16x1xf32>
    %369 = arith.divf %367, %368 : vector<16x1xf32>
    %370 = vector.broadcast %369 : vector<16x1xf32> to vector<16x32xf32>
    %371 = arith.subf %365, %370 : vector<16x32xf32>
    %372 = arith.mulf %371, %371 : vector<16x32xf32>
    %cst_99 = arith.constant dense<0.000000e+00> : vector<16xf32>
    %373 = vector.multi_reduction <add>, %372, %cst_99 [1] : vector<16x32xf32> to vector<16xf32>
    %374 = vector.shape_cast %373 : vector<16xf32> to vector<16x1xf32>
    %cst_100 = arith.constant 3.200000e+01 : f32
    %375 = vector.broadcast %cst_100 : f32 to vector<16x1xf32>
    %376 = arith.divf %374, %375 : vector<16x1xf32>
    %cst_101 = arith.constant 9.99999974E-6 : f32
    %377 = vector.broadcast %cst_101 : f32 to vector<16x1xf32>
    %378 = arith.addf %376, %377 : vector<16x1xf32>
    %379 = math.rsqrt %378 : vector<16x1xf32>
    %380 = vector.broadcast %369 : vector<16x1xf32> to vector<16x32xf32>
    %381 = arith.subf %365, %380 : vector<16x32xf32>
    %382 = vector.broadcast %379 : vector<16x1xf32> to vector<16x32xf32>
    %383 = arith.mulf %381, %382 : vector<16x32xf32>
    %384 = vector.broadcast %213 : vector<1x32xf32> to vector<16x32xf32>
    %385 = arith.mulf %383, %384 : vector<16x32xf32>
    %386 = vector.broadcast %214 : vector<1x32xf32> to vector<16x32xf32>
    %387 = arith.addf %385, %386 : vector<16x32xf32>
    %c0_102 = arith.constant 0 : index
    %c0_103 = arith.constant 0 : index
    %388 = vector.load %arg9[%c0_102, %c0_103] : memref<32x128xf32, #tpu.memory_space<vmem>>, vector<32x128xf32>
    %cst_104 = arith.constant dense<0.000000e+00> : vector<16x128xf32>
    %389 = tpu.matmul %387, %388, %cst_104 {dimension_numbers = #tpu.dot_dimension_numbers<[1], [0], [0], [1], [0, 0, 1, 1], [], []>} : vector<16x32xf32>, vector<32x128xf32>, vector<16x128xf32> -> vector<16x128xf32>
    %390 = vector.broadcast %215 : vector<1x128xf32> to vector<16x128xf32>
    %391 = arith.addf %389, %390 : vector<16x128xf32>
    %cst_105 = arith.constant 0.000000e+00 : f32
    %392 = vector.broadcast %cst_105 : f32 to vector<16x128xf32>
    %393 = arith.maximumf %391, %392 : vector<16x128xf32>
    %c0_106 = arith.constant 0 : index
    %c0_107 = arith.constant 0 : index
    %394 = vector.load %arg10[%c0_106, %c0_107] : memref<128x32xf32, #tpu.memory_space<vmem>>, vector<128x32xf32>
    %cst_108 = arith.constant dense<0.000000e+00> : vector<16x32xf32>
    %395 = tpu.matmul %393, %394, %cst_108 {dimension_numbers = #tpu.dot_dimension_numbers<[1], [0], [0], [1], [0, 0, 1, 1], [], []>} : vector<16x128xf32>, vector<128x32xf32>, vector<16x32xf32> -> vector<16x32xf32>
    %396 = vector.broadcast %216 : vector<1x32xf32> to vector<16x32xf32>
    %397 = arith.addf %395, %396 : vector<16x32xf32>
    %398 = arith.addf %397, %387 : vector<16x32xf32>
    %cst_109 = arith.constant dense<0.000000e+00> : vector<16xf32>
    %399 = vector.multi_reduction <add>, %398, %cst_109 [1] : vector<16x32xf32> to vector<16xf32>
    %400 = vector.shape_cast %399 : vector<16xf32> to vector<16x1xf32>
    %cst_110 = arith.constant 3.200000e+01 : f32
    %401 = vector.broadcast %cst_110 : f32 to vector<16x1xf32>
    %402 = arith.divf %400, %401 : vector<16x1xf32>
    %403 = vector.broadcast %402 : vector<16x1xf32> to vector<16x32xf32>
    %404 = arith.subf %398, %403 : vector<16x32xf32>
    %405 = arith.mulf %404, %404 : vector<16x32xf32>
    %cst_111 = arith.constant dense<0.000000e+00> : vector<16xf32>
    %406 = vector.multi_reduction <add>, %405, %cst_111 [1] : vector<16x32xf32> to vector<16xf32>
    %407 = vector.shape_cast %406 : vector<16xf32> to vector<16x1xf32>
    %cst_112 = arith.constant 3.200000e+01 : f32
    %408 = vector.broadcast %cst_112 : f32 to vector<16x1xf32>
    %409 = arith.divf %407, %408 : vector<16x1xf32>
    %cst_113 = arith.constant 9.99999974E-6 : f32
    %410 = vector.broadcast %cst_113 : f32 to vector<16x1xf32>
    %411 = arith.addf %409, %410 : vector<16x1xf32>
    %412 = math.rsqrt %411 : vector<16x1xf32>
    %413 = vector.broadcast %402 : vector<16x1xf32> to vector<16x32xf32>
    %414 = arith.subf %398, %413 : vector<16x32xf32>
    %415 = vector.broadcast %412 : vector<16x1xf32> to vector<16x32xf32>
    %416 = arith.mulf %414, %415 : vector<16x32xf32>
    %417 = vector.broadcast %217 : vector<1x32xf32> to vector<16x32xf32>
    %418 = arith.mulf %416, %417 : vector<16x32xf32>
    %419 = vector.broadcast %218 : vector<1x32xf32> to vector<16x32xf32>
    %420 = arith.addf %418, %419 : vector<16x32xf32>
    %421 = vector.extract_strided_slice %420 {offsets = [0, 0], sizes = [8, 32], strides = [1, 1]} : vector<16x32xf32> to vector<8x32xf32>
    %cst_114 = arith.constant dense<0xFF800000> : vector<32xf32>
    %422 = vector.multi_reduction <maximumf>, %421, %cst_114 [0] : vector<8x32xf32> to vector<32xf32>
    %423 = vector.shape_cast %422 : vector<32xf32> to vector<1x32xf32>
    %424 = vector.extract_strided_slice %420 {offsets = [8, 0], sizes = [8, 32], strides = [1, 1]} : vector<16x32xf32> to vector<8x32xf32>
    %cst_115 = arith.constant dense<0xFF800000> : vector<32xf32>
    %425 = vector.multi_reduction <maximumf>, %424, %cst_115 [0] : vector<8x32xf32> to vector<32xf32>
    %426 = vector.shape_cast %425 : vector<32xf32> to vector<1x32xf32>
    %427 = tpu.concatenate %423, %426 in 0 : vector<1x32xf32>, vector<1x32xf32> -> vector<2x32xf32>
    %c0_116 = arith.constant 0 : index
    %c0_117 = arith.constant 0 : index
    %428 = vector.load %arg12[%c0_116, %c0_117] : memref<32x128xf32, #tpu.memory_space<vmem>>, vector<32x128xf32>
    %cst_118 = arith.constant dense<0.000000e+00> : vector<2x128xf32>
    %429 = tpu.matmul %427, %428, %cst_118 {dimension_numbers = #tpu.dot_dimension_numbers<[1], [0], [0], [1], [0, 0, 1, 1], [], []>} : vector<2x32xf32>, vector<32x128xf32>, vector<2x128xf32> -> vector<2x128xf32>
    %c0_119 = arith.constant 0 : index
    %c0_120 = arith.constant 0 : index
    %430 = vector.load %arg13[%c0_119, %c0_120] : memref<1x128xf32, #tpu.memory_space<vmem>>, vector<1x128xf32>
    %431 = vector.broadcast %430 : vector<1x128xf32> to vector<2x128xf32>
    %432 = arith.addf %429, %431 : vector<2x128xf32>
    %cst_121 = arith.constant dense<0xFF800000> : vector<2xf32>
    %433 = vector.multi_reduction <maximumf>, %432, %cst_121 [1] : vector<2x128xf32> to vector<2xf32>
    %434 = vector.shape_cast %433 : vector<2xf32> to vector<2x1xf32>
    %435 = vector.broadcast %434 : vector<2x1xf32> to vector<2x128xf32>
    %436 = arith.subf %432, %435 : vector<2x128xf32>
    %437 = math.exp %436 : vector<2x128xf32>
    %cst_122 = arith.constant dense<0.000000e+00> : vector<2xf32>
    %438 = vector.multi_reduction <add>, %437, %cst_122 [1] : vector<2x128xf32> to vector<2xf32>
    %439 = vector.shape_cast %438 : vector<2xf32> to vector<2x1xf32>
    %440 = math.log %439 : vector<2x1xf32>
    %441 = arith.addf %440, %434 : vector<2x1xf32>
    %442 = vector.broadcast %441 : vector<2x1xf32> to vector<2x128xf32>
    %443 = arith.subf %432, %442 : vector<2x128xf32>
    %c0_123 = arith.constant 0 : index
    %c0_124 = arith.constant 0 : index
    %444 = vector.load %arg14[%c0_123, %c0_124] : memref<2x128xf32, #tpu.memory_space<vmem>>, vector<2x128xf32>
    tpu.vector_store %arg14[%c0_123, %c0_124], %443 {strides = array<i32>} : memref<2x128xf32, #tpu.memory_space<vmem>>, vector<2x128xf32>,
    return
  }
  func.func @transform_0(%arg0: i32) -> (i32, i32) {
    %c0_i32 = arith.constant 0 : i32
    %c0_i32_0 = arith.constant 0 : i32
    %c0_i32_1 = arith.constant 0 : i32
    return %c0_i32, %c0_i32_0 : i32, i32
  }
  func.func @transform_1(%arg0: i32) -> (i32, i32) {
    %c0_i32 = arith.constant 0 : i32
    %c0_i32_0 = arith.constant 0 : i32
    %c0_i32_1 = arith.constant 0 : i32
    return %c0_i32, %c0_i32_0 : i32, i32
  }
  func.func @transform_2(%arg0: i32) -> (i32, i32) {
    %c0_i32 = arith.constant 0 : i32
    %c0_i32_0 = arith.constant 0 : i32
    %c0_i32_1 = arith.constant 0 : i32
    return %c0_i32, %c0_i32_0 : i32, i32
  }
  func.func @transform_3(%arg0: i32) -> (i32, i32) {
    %c0_i32 = arith.constant 0 : i32
    %c0_i32_0 = arith.constant 0 : i32
    %c0_i32_1 = arith.constant 0 : i32
    return %c0_i32, %c0_i32_0 : i32, i32
  }
  func.func @transform_4(%arg0: i32) -> (i32, i32) {
    %c0_i32 = arith.constant 0 : i32
    %c0_i32_0 = arith.constant 0 : i32
    %c0_i32_1 = arith.constant 0 : i32
    return %c0_i32, %c0_i32_0 : i32, i32
  }
  func.func @transform_5(%arg0: i32) -> (i32, i32) {
    %c0_i32 = arith.constant 0 : i32
    %c0_i32_0 = arith.constant 0 : i32
    %c0_i32_1 = arith.constant 0 : i32
    return %c0_i32, %c0_i32_0 : i32, i32
  }
  func.func @transform_6(%arg0: i32) -> (i32, i32) {
    %c0_i32 = arith.constant 0 : i32
    %c0_i32_0 = arith.constant 0 : i32
    %c0_i32_1 = arith.constant 0 : i32
    return %c0_i32, %c0_i32_0 : i32, i32
  }
  func.func @transform_7(%arg0: i32) -> (i32, i32) {
    %c0_i32 = arith.constant 0 : i32
    %c0_i32_0 = arith.constant 0 : i32
    %c0_i32_1 = arith.constant 0 : i32
    return %c0_i32, %c0_i32_0 : i32, i32
  }
  func.func @transform_8(%arg0: i32) -> (i32, i32) {
    %c0_i32 = arith.constant 0 : i32
    %c0_i32_0 = arith.constant 0 : i32
    %c0_i32_1 = arith.constant 0 : i32
    return %c0_i32, %c0_i32_0 : i32, i32
  }
  func.func @transform_9(%arg0: i32) -> (i32, i32) {
    %c0_i32 = arith.constant 0 : i32
    %c0_i32_0 = arith.constant 0 : i32
    %c0_i32_1 = arith.constant 0 : i32
    return %c0_i32, %c0_i32_0 : i32, i32
  }
  func.func @transform_10(%arg0: i32) -> (i32, i32) {
    %c0_i32 = arith.constant 0 : i32
    %c0_i32_0 = arith.constant 0 : i32
    %c0_i32_1 = arith.constant 0 : i32
    return %c0_i32, %c0_i32_0 : i32, i32
  }
  func.func @transform_11(%arg0: i32) -> (i32, i32) {
    %c0_i32 = arith.constant 0 : i32
    %c0_i32_0 = arith.constant 0 : i32
    %c0_i32_1 = arith.constant 0 : i32
    return %c0_i32, %c0_i32_0 : i32, i32
  }
  func.func @transform_12(%arg0: i32) -> (i32, i32) {
    %c0_i32 = arith.constant 0 : i32
    %c0_i32_0 = arith.constant 0 : i32
    %c0_i32_1 = arith.constant 0 : i32
    return %c0_i32, %c0_i32_0 : i32, i32
  }
  func.func @transform_13(%arg0: i32) -> (i32, i32) {
    %c0_i32 = arith.constant 0 : i32
    %c0_i32_0 = arith.constant 0 : i32
    %c0_i32_1 = arith.constant 0 : i32
    return %c0_i32, %c0_i32_0 : i32, i32
  }
}

</mosaic_0001>

<llo_original>
// kernel: transformer_forward.1
$region0: #{transformer_forward.1}
  #allocation0 [shape = 'u32[]', space=smem, size = 0x4, offset = 0x4, fixed_abs, tag = 'smem constant byte address 0x4 - core index']
  #allocation1 [shape = 'u32[144,128]{1,0:T(1,128)}', space=vmem, size = 0x12000, scoped, tag = 'internal scratch']
  %s0 = inlined_call_operand.vmem [shape: f32[16,32], index: 0, kind: input, shape index: {}]
  %s1 = inlined_call_operand.vmem [shape: f32[32,96], index: 1, kind: input, shape index: {}]
  %s2 = inlined_call_operand.vmem [shape: f32[32,32], index: 2, kind: input, shape index: {}]
  %s3 = inlined_call_operand.vmem [shape: f32[32,128], index: 3, kind: input, shape index: {}]
  %s4 = inlined_call_operand.vmem [shape: f32[128,32], index: 4, kind: input, shape index: {}]
  %s5 = inlined_call_operand.vmem [shape: f32[8,128], index: 5, kind: input, shape index: {}]
  %s6 = inlined_call_operand.vmem [shape: f32[32,96], index: 6, kind: input, shape index: {}]
  %s7 = inlined_call_operand.vmem [shape: f32[32,32], index: 7, kind: input, shape index: {}]
  %s8 = inlined_call_operand.vmem [shape: f32[32,128], index: 8, kind: input, shape index: {}]
  %s9 = inlined_call_operand.vmem [shape: f32[128,32], index: 9, kind: input, shape index: {}]
  %s10 = inlined_call_operand.vmem [shape: f32[8,128], index: 10, kind: input, shape index: {}]
  %s11 = inlined_call_operand.vmem [shape: f32[32,128], index: 11, kind: input, shape index: {}]
  %s12 = inlined_call_operand.vmem [shape: f32[1,128], index: 12, kind: input, shape index: {}]
  %s13 = inlined_call_operand.hbm [shape: f32[2,128], index: 13, kind: output, shape index: {}]
  %s14 = sld [smem:[#allocation0]]
  $region62: #{transformer_forward.1} parent=0
    _
  %s16 = ssub.s32 1, %s14
  %s17 = scalar_select 0, %s16, %s14
  $region1: #{transformer_forward.1} parent=0
    #allocation2 [shape = 'u8[1024]{0}', space=vmem, size = 0x400, scoped, tag = 'output window, operand 0, single buffered']
    #allocation3 [shape = 's32[1]{0}', space=sflag, size = 0x4, scoped, tag = 'scoped memory for transformer_forward.1']
    %18 = vsyncpa [#allocation3], 0
    // Predicated region
    $region2: #{transformer_forward.1} parent=1 // pred_check
      _
    $region3: #{transformer_forward.1} parent=1 // pred_check_branch
      %20 = sbr.rel (0) target = $region5
    $region4: #{transformer_forward.1} parent=1 // pred_region
      _
    $region5: #{transformer_forward.1} parent=1 // pred_fallthru
      _
    // Predicated region
    $region6: #{transformer_forward.1} parent=1 // pred_check
      _
    $region7: #{transformer_forward.1} parent=1 // pred_check_branch
      %22 = sbr.rel (0) target = $region9
    $region8: #{transformer_forward.1} parent=1 // pred_region
      _
    $region9: #{transformer_forward.1} parent=1 // pred_fallthru
      _
    // Predicated region
    $region10: #{transformer_forward.1} parent=1 // pred_check
      _
    $region11: #{transformer_forward.1} parent=1 // pred_check_branch
      %24 = sbr.rel (0) target = $region13
    $region12: #{transformer_forward.1} parent=1 // pred_region
      _
    $region13: #{transformer_forward.1} parent=1 // pred_fallthru
      _
    // Predicated region
    $region14: #{transformer_forward.1} parent=1 // pred_check
      _
    $region15: #{transformer_forward.1} parent=1 // pred_check_branch
      %26 = sbr.rel (0) target = $region17
    $region16: #{transformer_forward.1} parent=1 // pred_region
      _
    $region17: #{transformer_forward.1} parent=1 // pred_fallthru
      _
    // Predicated region
    $region18: #{transformer_forward.1} parent=1 // pred_check
      _
    $region19: #{transformer_forward.1} parent=1 // pred_check_branch
      %28 = sbr.rel (0) target = $region21
    $region20: #{transformer_forward.1} parent=1 // pred_region
      _
    $region21: #{transformer_forward.1} parent=1 // pred_fallthru
      _
    // Predicated region
    $region22: #{transformer_forward.1} parent=1 // pred_check
      _
    $region23: #{transformer_forward.1} parent=1 // pred_check_branch
      %30 = sbr.rel (0) target = $region25
    $region24: #{transformer_forward.1} parent=1 // pred_region
      _
    $region25: #{transformer_forward.1} parent=1 // pred_fallthru
      _
    // Predicated region
    $region26: #{transformer_forward.1} parent=1 // pred_check
      _
    $region27: #{transformer_forward.1} parent=1 // pred_check_branch
      %32 = sbr.rel (0) target = $region29
    $region28: #{transformer_forward.1} parent=1 // pred_region
      _
    $region29: #{transformer_forward.1} parent=1 // pred_fallthru
      _
    // Predicated region
    $region30: #{transformer_forward.1} parent=1 // pred_check
      _
    $region31: #{transformer_forward.1} parent=1 // pred_check_branch
      %34 = sbr.rel (0) target = $region33
    $region32: #{transformer_forward.1} parent=1 // pred_region
      _
    $region33: #{transformer_forward.1} parent=1 // pred_fallthru
      _
    // Predicated region
    $region34: #{transformer_forward.1} parent=1 // pred_check
      _
    $region35: #{transformer_forward.1} parent=1 // pred_check_branch
      %36 = sbr.rel (0) target = $region37
    $region36: #{transformer_forward.1} parent=1 // pred_region
      _
    $region37: #{transformer_forward.1} parent=1 // pred_fallthru
      _
    // Predicated region
    $region38: #{transformer_forward.1} parent=1 // pred_check
      _
    $region39: #{transformer_forward.1} parent=1 // pred_check_branch
      %38 = sbr.rel (0) target = $region41
    $region40: #{transformer_forward.1} parent=1 // pred_region
      _
    $region41: #{transformer_forward.1} parent=1 // pred_fallthru
      _
    // Predicated region
    $region42: #{transformer_forward.1} parent=1 // pred_check
      _
    $region43: #{transformer_forward.1} parent=1 // pred_check_branch
      %40 = sbr.rel (0) target = $region45
    $region44: #{transformer_forward.1} parent=1 // pred_region
      _
    $region45: #{transformer_forward.1} parent=1 // pred_fallthru
      _
    // Predicated region
    $region46: #{transformer_forward.1} parent=1 // pred_check
      _
    $region47: #{transformer_forward.1} parent=1 // pred_check_branch
      %42 = sbr.rel (0) target = $region49
    $region48: #{transformer_forward.1} parent=1 // pred_region
      _
    $region49: #{transformer_forward.1} parent=1 // pred_fallthru
      _
    // Predicated region
    $region50: #{transformer_forward.1} parent=1 // pred_check
      _
    $region51: #{transformer_forward.1} parent=1 // pred_check_branch
      %44 = sbr.rel (0) target = $region53
    $region52: #{transformer_forward.1} parent=1 // pred_region
      _
    $region53: #{transformer_forward.1} parent=1 // pred_fallthru
      _
    %v45 = vld [vmem:[%s0] sm:$0xff]
    %v46 = vld [vmem:[%s0 + $0x8] sm:$0xff]
    %v47 = vld [vmem:[%s5] sm:$0xff]
    %v48 = vld [vmem:[%s1] sm:$0xff]
    %v49 = vld [vmem:[%s1 + $0x8] sm:$0xff]
    %v50 = vld [vmem:[%s1 + $0x10] sm:$0xff]
    %v51 = vld [vmem:[%s1 + $0x18] sm:$0xff]
    %vm52 = vcmask 261120
    %v54 = vsel %vm52, %v45, 0
    %v57 = vsel %vm52, %v46, 0
    %59 = vmatprep.subr.mxu0 0.0
    %60 = vmatpush1.msra.mxu0 %v48
    %61 = vmatprep.subr.mxu0 0.0
    %62 = vmatpush1.msra.mxu0 %v49
    %63 = vmatprep.subr.mxu0 0.0
    %64 = vmatpush1.msra.mxu0 %v50
    %65 = vmatprep.subr.mxu0 0.0
    %66 = vmatpush1.msra.mxu0 %v51
    %67 = vmatprep.subr.mxu0 0.0
    %68 = vmatpush1.msra.mxu0 0.0
    %69 = vmatprep.subr.mxu0 0.0
    %70 = vmatpush1.msra.mxu0 0.0
    %71 = vmatprep.subr.mxu0 0.0
    %72 = vmatpush1.msra.mxu0 0.0
    %73 = vmatprep.subr.mxu0 0.0
    %74 = vmatpush1.msra.mxu0 0.0
    %75 = vmatprep.subr.mxu0 0.0
    %76 = vmatpush1.msra.mxu0 0.0
    %77 = vmatprep.subr.mxu0 0.0
    %78 = vmatpush1.msra.mxu0 0.0
    %79 = vmatprep.subr.mxu0 0.0
    %80 = vmatpush1.msra.mxu0 0.0
    %81 = vmatprep.subr.mxu0 0.0
    %82 = vmatpush1.msra.mxu0 0.0
    %83 = vmatprep.subr.mxu0 0.0
    %84 = vmatpush1.msra.mxu0 0.0
    %85 = vmatprep.subr.mxu0 0.0
    %86 = vmatpush1.msra.mxu0 0.0
    %87 = vmatprep.subr.mxu0 0.0
    %88 = vmatpush1.msra.mxu0 0.0
    %89 = vmatprep.subr.mxu0 0.0
    %90 = vmatpush1.msra.mxu0 0.0
    %91 = vmatprep.subr.mxu0 0.0
    %92 = vmatpush1.msra.mxu0 0.0
    %93 = vmatprep.subr.mxu0 0.0
    %94 = vmatpush1.msra.mxu0 0.0
    %95 = vmatprep.subr.mxu0 0.0
    %96 = vmatpush1.msra.mxu0 0.0
    %97 = vmatprep.subr.mxu0 0.0
    %98 = vmatpush1.msra.mxu0 0.0
    %99 = vmatprep.subr.mxu0 0.0
    %100 = vmatpush1.msra.mxu0 0.0
    %101 = vmatprep.subr.mxu0 0.0
    %102 = vmatpush1.msra.mxu0 0.0
    %103 = vmatprep.subr.mxu0 0.0
    %104 = vmatpush1.msra.mxu0 0.0
    %105 = vmatprep.subr.mxu0 0.0
    %106 = vmatpush1.msra.mxu0 0.0
    %107 = vmatprep.subr.mxu0 0.0
    %108 = vmatpush1.msra.mxu0 0.0
    %109 = vmatprep.subr.mxu0 0.0
    %110 = vmatpush1.msra.mxu0 0.0
    %111 = vmatprep.subr.mxu0 0.0
    %112 = vmatpush1.msra.mxu0 0.0
    %113 = vmatprep.subr.mxu0 0.0
    %114 = vmatpush1.msra.mxu0 0.0
    %115 = vmatprep.subr.mxu0 0.0
    %116 = vmatpush1.msra.mxu0 0.0
    %117 = vmatprep.subr.mxu0 0.0
    %118 = vmatpush1.msra.mxu0 0.0
    %119 = vmatprep.subr.mxu0 0.0
    %120 = vmatpush1.msra.mxu0 0.0
    %121 = vmatprep.subr.mxu0 0.0
    %122 = vmatpush1.msra.mxu0 0.0
    %123 = vmatprep.mubr.f32.mxu0 0.0
    %124 = vmatmul.mubr.f32.gmra.mrb[0].mxu0 %v54
    %v125 = vpop.f32.mrb[0].mxu0
    %v126 = vadd.f32 0.0, %v125
    %v127 = vpop.f32.mrb[0].mxu0
    %128 = vmatprep.mubr.f32.mxu0 0.0
    %129 = vmatmul.mubr.f32.gmra.mrb[0].mxu0 %v57
    %v130 = vpop.f32.mrb[0].mxu0
    %v131 = vadd.f32 0.0, %v130
    %v132 = vpop.f32.mrb[0].mxu0
    %133 = vdwg.mxu0
    %135 = vrot.lane.b32.xlu0 %v126, 96
    %v136 = vpop.permute.xlu0 %135
    %vm137 = vcmask 64512
    %v138 = vsel %vm137, %v126, 0
    %v140 = vsel %vm137, %v136, 0
    %142 = vmatprep.subr.mxu0 0.0
    %143 = vmatpush1.xpose.msra.mxu0 %v140
    %144 = vmatprep.subr.mxu0 0.0
    %145 = vmatpush1.xpose.msra.mxu0 0.0
    %146 = vmatprep.subr.mxu0 0.0
    %147 = vmatpush1.xpose.msra.mxu0 0.0
    %148 = vmatprep.subr.mxu0 0.0
    %149 = vmatpush1.xpose.msra.mxu0 0.0
    %150 = vmatprep.subr.mxu0 0.0
    %151 = vmatpush1.xpose.msra.mxu0 0.0
    %152 = vmatprep.subr.mxu0 0.0
    %153 = vmatpush1.xpose.msra.mxu0 0.0
    %154 = vmatprep.subr.mxu0 0.0
    %155 = vmatpush1.xpose.msra.mxu0 0.0
    %156 = vmatprep.subr.mxu0 0.0
    %157 = vmatpush1.xpose.msra.mxu0 0.0
    %158 = vmatprep.subr.mxu0 0.0
    %159 = vmatpush1.xpose.msra.mxu0 0.0
    %160 = vmatprep.subr.mxu0 0.0
    %161 = vmatpush1.xpose.msra.mxu0 0.0
    %162 = vmatprep.subr.mxu0 0.0
    %163 = vmatpush1.xpose.msra.mxu0 0.0
    %164 = vmatprep.subr.mxu0 0.0
    %165 = vmatpush1.xpose.msra.mxu0 0.0
    %166 = vmatprep.subr.mxu0 0.0
    %167 = vmatpush1.xpose.msra.mxu0 0.0
    %168 = vmatprep.subr.mxu0 0.0
    %169 = vmatpush1.xpose.msra.mxu0 0.0
    %170 = vmatprep.subr.mxu0 0.0
    %171 = vmatpush1.xpose.msra.mxu0 0.0
    %172 = vmatprep.subr.mxu0 0.0
    %173 = vmatpush1.xpose.msra.mxu0 0.0
    %174 = vmatprep.subr.mxu0 0.0
    %175 = vmatpush1.xpose.msra.mxu0 0.0
    %176 = vmatprep.subr.mxu0 0.0
    %177 = vmatpush1.xpose.msra.mxu0 0.0
    %178 = vmatprep.subr.mxu0 0.0
    %179 = vmatpush1.xpose.msra.mxu0 0.0
    %180 = vmatprep.subr.mxu0 0.0
    %181 = vmatpush1.xpose.msra.mxu0 0.0
    %182 = vmatprep.subr.mxu0 0.0
    %183 = vmatpush1.xpose.msra.mxu0 0.0
    %184 = vmatprep.subr.mxu0 0.0
    %185 = vmatpush1.xpose.msra.mxu0 0.0
    %186 = vmatprep.subr.mxu0 0.0
    %187 = vmatpush1.xpose.msra.mxu0 0.0
    %188 = vmatprep.subr.mxu0 0.0
    %189 = vmatpush1.xpose.msra.mxu0 0.0
    %190 = vmatprep.subr.mxu0 0.0
    %191 = vmatpush1.xpose.msra.mxu0 0.0
    %192 = vmatprep.subr.mxu0 0.0
    %193 = vmatpush1.xpose.msra.mxu0 0.0
    %194 = vmatprep.subr.mxu0 0.0
    %195 = vmatpush1.xpose.msra.mxu0 0.0
    %196 = vmatprep.subr.mxu0 0.0
    %197 = vmatpush1.xpose.msra.mxu0 0.0
    %198 = vmatprep.subr.mxu0 0.0
    %199 = vmatpush1.xpose.msra.mxu0 0.0
    %200 = vmatprep.subr.mxu0 0.0
    %201 = vmatpush1.xpose.msra.mxu0 0.0
    %202 = vmatprep.subr.mxu0 0.0
    %203 = vmatpush1.xpose.msra.mxu0 0.0
    %204 = vmatprep.subr.mxu0 0.0
    %205 = vmatpush1.xpose.msra.mxu0 0.0
    %206 = vmatprep.mubr.f32.mxu0 0.0
    %207 = vmatmul.mubr.f32.gmra.mrb[0].mxu0 %v138
    %v208 = vpop.f32.mrb[0].mxu0
    %v209 = vadd.f32 0.0, %v208
    %v210 = vpop.f32.mrb[0].mxu0
    %211 = vdwg.mxu0
    %v212 = vsel %vm137, %v209, -inf
    %213 = vmax.xlane.f32.xlu0 %v212
    %v214 = vpop.xlane.xlu0 %213
    %v215 = vsub.f32 %v209, %v214
    %v216 = vmul.f32 %v215, 1.442695
    %v217 = vpow.pop %v216
    %v218 = vsel %vm137, %v217, 0.0
    %219 = vadd.xlane.f32.xlu0 %v218
    %v220 = vpop.xlane.xlu0 %219
    %v221 = vrcp.pop %v220
    %v222 = vmul.f32 %v217, %v221
    %223 = vrot.lane.b32.xlu0 %v126, 64
    %v224 = vpop.permute.xlu0 %223
    %v227 = vsel %vm137, %v222, 0
    %229 = vmatprep.subr.mxu0 0.0
    %230 = vmatpush1.msra.mxu0 %v224
    %231 = vmatprep.subr.mxu0 0.0
    %232 = vmatpush1.msra.mxu0 0.0
    %233 = vmatprep.subr.mxu0 0.0
    %234 = vmatpush1.msra.mxu0 0.0
    %235 = vmatprep.subr.mxu0 0.0
    %236 = vmatpush1.msra.mxu0 0.0
    %237 = vmatprep.subr.mxu0 0.0
    %238 = vmatpush1.msra.mxu0 0.0
    %239 = vmatprep.subr.mxu0 0.0
    %240 = vmatpush1.msra.mxu0 0.0
    %241 = vmatprep.subr.mxu0 0.0
    %242 = vmatpush1.msra.mxu0 0.0
    %243 = vmatprep.subr.mxu0 0.0
    %244 = vmatpush1.msra.mxu0 0.0
    %245 = vmatprep.subr.mxu0 0.0
    %246 = vmatpush1.msra.mxu0 0.0
    %247 = vmatprep.subr.mxu0 0.0
    %248 = vmatpush1.msra.mxu0 0.0
    %249 = vmatprep.subr.mxu0 0.0
    %250 = vmatpush1.msra.mxu0 0.0
    %251 = vmatprep.subr.mxu0 0.0
    %252 = vmatpush1.msra.mxu0 0.0
    %253 = vmatprep.subr.mxu0 0.0
    %254 = vmatpush1.msra.mxu0 0.0
    %255 = vmatprep.subr.mxu0 0.0
    %256 = vmatpush1.msra.mxu0 0.0
    %257 = vmatprep.subr.mxu0 0.0
    %258 = vmatpush1.msra.mxu0 0.0
    %259 = vmatprep.subr.mxu0 0.0
    %260 = vmatpush1.msra.mxu0 0.0
    %261 = vmatprep.subr.mxu0 0.0
    %262 = vmatpush1.msra.mxu0 0.0
    %263 = vmatprep.subr.mxu0 0.0
    %264 = vmatpush1.msra.mxu0 0.0
    %265 = vmatprep.subr.mxu0 0.0
    %266 = vmatpush1.msra.mxu0 0.0
    %267 = vmatprep.subr.mxu0 0.0
    %268 = vmatpush1.msra.mxu0 0.0
    %269 = vmatprep.subr.mxu0 0.0
    %270 = vmatpush1.msra.mxu0 0.0
    %271 = vmatprep.subr.mxu0 0.0
    %272 = vmatpush1.msra.mxu0 0.0
    %273 = vmatprep.subr.mxu0 0.0
    %274 = vmatpush1.msra.mxu0 0.0
    %275 = vmatprep.subr.mxu0 0.0
    %276 = vmatpush1.msra.mxu0 0.0
    %277 = vmatprep.subr.mxu0 0.0
    %278 = vmatpush1.msra.mxu0 0.0
    %279 = vmatprep.subr.mxu0 0.0
    %280 = vmatpush1.msra.mxu0 0.0
    %281 = vmatprep.subr.mxu0 0.0
    %282 = vmatpush1.msra.mxu0 0.0
    %283 = vmatprep.subr.mxu0 0.0
    %284 = vmatpush1.msra.mxu0 0.0
    %285 = vmatprep.subr.mxu0 0.0
    %286 = vmatpush1.msra.mxu0 0.0
    %287 = vmatprep.subr.mxu0 0.0
    %288 = vmatpush1.msra.mxu0 0.0
    %289 = vmatprep.subr.mxu0 0.0
    %290 = vmatpush1.msra.mxu0 0.0
    %291 = vmatprep.subr.mxu0 0.0
    %292 = vmatpush1.msra.mxu0 0.0
    %293 = vmatprep.mubr.f32.mxu0 0.0
    %294 = vmatmul.mubr.f32.gmra.mrb[0].mxu0 %v227
    %v295 = vpop.f32.mrb[0].mxu0
    %v296 = vadd.f32 0.0, %v295
    %v297 = vpop.f32.mrb[0].mxu0
    %298 = vdwg.mxu0
    %299 = vrot.lane.b32.xlu0 %v126, 120
    %v300 = vpop.permute.xlu0 %299
    %301 = vrot.lane.b32.xlu0 %v126, 88
    %v302 = vpop.permute.xlu0 %301
    %v303 = vsel %vm137, %v300, 0
    %v305 = vsel %vm137, %v302, 0
    %307 = vmatprep.subr.mxu0 0.0
    %308 = vmatpush1.xpose.msra.mxu0 %v305
    %309 = vmatprep.subr.mxu0 0.0
    %310 = vmatpush1.xpose.msra.mxu0 0.0
    %311 = vmatprep.subr.mxu0 0.0
    %312 = vmatpush1.xpose.msra.mxu0 0.0
    %313 = vmatprep.subr.mxu0 0.0
    %314 = vmatpush1.xpose.msra.mxu0 0.0
    %315 = vmatprep.subr.mxu0 0.0
    %316 = vmatpush1.xpose.msra.mxu0 0.0
    %317 = vmatprep.subr.mxu0 0.0
    %318 = vmatpush1.xpose.msra.mxu0 0.0
    %319 = vmatprep.subr.mxu0 0.0
    %320 = vmatpush1.xpose.msra.mxu0 0.0
    %321 = vmatprep.subr.mxu0 0.0
    %322 = vmatpush1.xpose.msra.mxu0 0.0
    %323 = vmatprep.subr.mxu0 0.0
    %324 = vmatpush1.xpose.msra.mxu0 0.0
    %325 = vmatprep.subr.mxu0 0.0
    %326 = vmatpush1.xpose.msra.mxu0 0.0
    %327 = vmatprep.subr.mxu0 0.0
    %328 = vmatpush1.xpose.msra.mxu0 0.0
    %329 = vmatprep.subr.mxu0 0.0
    %330 = vmatpush1.xpose.msra.mxu0 0.0
    %331 = vmatprep.subr.mxu0 0.0
    %332 = vmatpush1.xpose.msra.mxu0 0.0
    %333 = vmatprep.subr.mxu0 0.0
    %334 = vmatpush1.xpose.msra.mxu0 0.0
    %335 = vmatprep.subr.mxu0 0.0
    %336 = vmatpush1.xpose.msra.mxu0 0.0
    %337 = vmatprep.subr.mxu0 0.0
    %338 = vmatpush1.xpose.msra.mxu0 0.0
    %339 = vmatprep.subr.mxu0 0.0
    %340 = vmatpush1.xpose.msra.mxu0 0.0
    %341 = vmatprep.subr.mxu0 0.0
    %342 = vmatpush1.xpose.msra.mxu0 0.0
    %343 = vmatprep.subr.mxu0 0.0
    %344 = vmatpush1.xpose.msra.mxu0 0.0
    %345 = vmatprep.subr.mxu0 0.0
    %346 = vmatpush1.xpose.msra.mxu0 0.0
    %347 = vmatprep.subr.mxu0 0.0
    %348 = vmatpush1.xpose.msra.mxu0 0.0
    %349 = vmatprep.subr.mxu0 0.0
    %350 = vmatpush1.xpose.msra.mxu0 0.0
    %351 = vmatprep.subr.mxu0 0.0
    %352 = vmatpush1.xpose.msra.mxu0 0.0
    %353 = vmatprep.subr.mxu0 0.0
    %354 = vmatpush1.xpose.msra.mxu0 0.0
    %355 = vmatprep.subr.mxu0 0.0
    %356 = vmatpush1.xpose.msra.mxu0 0.0
    %357 = vmatprep.subr.mxu0 0.0
    %358 = vmatpush1.xpose.msra.mxu0 0.0
    %359 = vmatprep.subr.mxu0 0.0
    %360 = vmatpush1.xpose.msra.mxu0 0.0
    %361 = vmatprep.subr.mxu0 0.0
    %362 = vmatpush1.xpose.msra.mxu0 0.0
    %363 = vmatprep.subr.mxu0 0.0
    %364 = vmatpush1.xpose.msra.mxu0 0.0
    %365 = vmatprep.subr.mxu0 0.0
    %366 = vmatpush1.xpose.msra.mxu0 0.0
    %367 = vmatprep.subr.mxu0 0.0
    %368 = vmatpush1.xpose.msra.mxu0 0.0
    %369 = vmatprep.subr.mxu0 0.0
    %370 = vmatpush1.xpose.msra.mxu0 0.0
    %371 = vmatprep.mubr.f32.mxu0 0.0
    %372 = vmatmul.mubr.f32.gmra.mrb[0].mxu0 %v303
    %v373 = vpop.f32.mrb[0].mxu0
    %v374 = vadd.f32 0.0, %v373
    %v375 = vpop.f32.mrb[0].mxu0
    %376 = vdwg.mxu0
    %v377 = vsel %vm137, %v374, -inf
    %378 = vmax.xlane.f32.xlu0 %v377
    %v379 = vpop.xlane.xlu0 %378
    %v380 = vsub.f32 %v374, %v379
    %v381 = vmul.f32 %v380, 1.442695
    %v382 = vpow.pop %v381
    %v383 = vsel %vm137, %v382, 0.0
    %384 = vadd.xlane.f32.xlu0 %v383
    %v385 = vpop.xlane.xlu0 %384
    %v386 = vrcp.pop %v385
    %v387 = vmul.f32 %v382, %v386
    %388 = vrot.lane.b32.xlu0 %v126, 56
    %v389 = vpop.permute.xlu0 %388
    %v392 = vsel %vm137, %v387, 0
    %394 = vmatprep.subr.mxu0 0.0
    %395 = vmatpush1.msra.mxu0 %v389
    %396 = vmatprep.subr.mxu0 0.0
    %397 = vmatpush1.msra.mxu0 0.0
    %398 = vmatprep.subr.mxu0 0.0
    %399 = vmatpush1.msra.mxu0 0.0
    %400 = vmatprep.subr.mxu0 0.0
    %401 = vmatpush1.msra.mxu0 0.0
    %402 = vmatprep.subr.mxu0 0.0
    %403 = vmatpush1.msra.mxu0 0.0
    %404 = vmatprep.subr.mxu0 0.0
    %405 = vmatpush1.msra.mxu0 0.0
    %406 = vmatprep.subr.mxu0 0.0
    %407 = vmatpush1.msra.mxu0 0.0
    %408 = vmatprep.subr.mxu0 0.0
    %409 = vmatpush1.msra.mxu0 0.0
    %410 = vmatprep.subr.mxu0 0.0
    %411 = vmatpush1.msra.mxu0 0.0
    %412 = vmatprep.subr.mxu0 0.0
    %413 = vmatpush1.msra.mxu0 0.0
    %414 = vmatprep.subr.mxu0 0.0
    %415 = vmatpush1.msra.mxu0 0.0
    %416 = vmatprep.subr.mxu0 0.0
    %417 = vmatpush1.msra.mxu0 0.0
    %418 = vmatprep.subr.mxu0 0.0
    %419 = vmatpush1.msra.mxu0 0.0
    %420 = vmatprep.subr.mxu0 0.0
    %421 = vmatpush1.msra.mxu0 0.0
    %422 = vmatprep.subr.mxu0 0.0
    %423 = vmatpush1.msra.mxu0 0.0
    %424 = vmatprep.subr.mxu0 0.0
    %425 = vmatpush1.msra.mxu0 0.0
    %426 = vmatprep.subr.mxu0 0.0
    %427 = vmatpush1.msra.mxu0 0.0
    %428 = vmatprep.subr.mxu0 0.0
    %429 = vmatpush1.msra.mxu0 0.0
    %430 = vmatprep.subr.mxu0 0.0
    %431 = vmatpush1.msra.mxu0 0.0
    %432 = vmatprep.subr.mxu0 0.0
    %433 = vmatpush1.msra.mxu0 0.0
    %434 = vmatprep.subr.mxu0 0.0
    %435 = vmatpush1.msra.mxu0 0.0
    %436 = vmatprep.subr.mxu0 0.0
    %437 = vmatpush1.msra.mxu0 0.0
    %438 = vmatprep.subr.mxu0 0.0
    %439 = vmatpush1.msra.mxu0 0.0
    %440 = vmatprep.subr.mxu0 0.0
    %441 = vmatpush1.msra.mxu0 0.0
    %442 = vmatprep.subr.mxu0 0.0
    %443 = vmatpush1.msra.mxu0 0.0
    %444 = vmatprep.subr.mxu0 0.0
    %445 = vmatpush1.msra.mxu0 0.0
    %446 = vmatprep.subr.mxu0 0.0
    %447 = vmatpush1.msra.mxu0 0.0
    %448 = vmatprep.subr.mxu0 0.0
    %449 = vmatpush1.msra.mxu0 0.0
    %450 = vmatprep.subr.mxu0 0.0
    %451 = vmatpush1.msra.mxu0 0.0
    %452 = vmatprep.subr.mxu0 0.0
    %453 = vmatpush1.msra.mxu0 0.0
    %454 = vmatprep.subr.mxu0 0.0
    %455 = vmatpush1.msra.mxu0 0.0
    %456 = vmatprep.subr.mxu0 0.0
    %457 = vmatpush1.msra.mxu0 0.0
    %458 = vmatprep.mubr.f32.mxu0 0.0
    %459 = vmatmul.mubr.f32.gmra.mrb[0].mxu0 %v392
    %v460 = vpop.f32.mrb[0].mxu0
    %v461 = vadd.f32 0.0, %v460
    %v462 = vpop.f32.mrb[0].mxu0
    %463 = vdwg.mxu0
    %464 = vrot.lane.b32.xlu0 %v126, 112
    %v465 = vpop.permute.xlu0 %464
    %466 = vrot.lane.b32.xlu0 %v126, 80
    %v467 = vpop.permute.xlu0 %466
    %v468 = vsel %vm137, %v465, 0
    %v470 = vsel %vm137, %v467, 0
    %472 = vmatprep.subr.mxu0 0.0
    %473 = vmatpush1.xpose.msra.mxu0 %v470
    %474 = vmatprep.subr.mxu0 0.0
    %475 = vmatpush1.xpose.msra.mxu0 0.0
    %476 = vmatprep.subr.mxu0 0.0
    %477 = vmatpush1.xpose.msra.mxu0 0.0
    %478 = vmatprep.subr.mxu0 0.0
    %479 = vmatpush1.xpose.msra.mxu0 0.0
    %480 = vmatprep.subr.mxu0 0.0
    %481 = vmatpush1.xpose.msra.mxu0 0.0
    %482 = vmatprep.subr.mxu0 0.0
    %483 = vmatpush1.xpose.msra.mxu0 0.0
    %484 = vmatprep.subr.mxu0 0.0
    %485 = vmatpush1.xpose.msra.mxu0 0.0
    %486 = vmatprep.subr.mxu0 0.0
    %487 = vmatpush1.xpose.msra.mxu0 0.0
    %488 = vmatprep.subr.mxu0 0.0
    %489 = vmatpush1.xpose.msra.mxu0 0.0
    %490 = vmatprep.subr.mxu0 0.0
    %491 = vmatpush1.xpose.msra.mxu0 0.0
    %492 = vmatprep.subr.mxu0 0.0
    %493 = vmatpush1.xpose.msra.mxu0 0.0
    %494 = vmatprep.subr.mxu0 0.0
    %495 = vmatpush1.xpose.msra.mxu0 0.0
    %496 = vmatprep.subr.mxu0 0.0
    %497 = vmatpush1.xpose.msra.mxu0 0.0
    %498 = vmatprep.subr.mxu0 0.0
    %499 = vmatpush1.xpose.msra.mxu0 0.0
    %500 = vmatprep.subr.mxu0 0.0
    %501 = vmatpush1.xpose.msra.mxu0 0.0
    %502 = vmatprep.subr.mxu0 0.0
    %503 = vmatpush1.xpose.msra.mxu0 0.0
    %504 = vmatprep.subr.mxu0 0.0
    %505 = vmatpush1.xpose.msra.mxu0 0.0
    %506 = vmatprep.subr.mxu0 0.0
    %507 = vmatpush1.xpose.msra.mxu0 0.0
    %508 = vmatprep.subr.mxu0 0.0
    %509 = vmatpush1.xpose.msra.mxu0 0.0
    %510 = vmatprep.subr.mxu0 0.0
    %511 = vmatpush1.xpose.msra.mxu0 0.0
    %512 = vmatprep.subr.mxu0 0.0
    %513 = vmatpush1.xpose.msra.mxu0 0.0
    %514 = vmatprep.subr.mxu0 0.0
    %515 = vmatpush1.xpose.msra.mxu0 0.0
    %516 = vmatprep.subr.mxu0 0.0
    %517 = vmatpush1.xpose.msra.mxu0 0.0
    %518 = vmatprep.subr.mxu0 0.0
    %519 = vmatpush1.xpose.msra.mxu0 0.0
    %520 = vmatprep.subr.mxu0 0.0
    %521 = vmatpush1.xpose.msra.mxu0 0.0
    %522 = vmatprep.subr.mxu0 0.0
    %523 = vmatpush1.xpose.msra.mxu0 0.0
    %524 = vmatprep.subr.mxu0 0.0
    %525 = vmatpush1.xpose.msra.mxu0 0.0
    %526 = vmatprep.subr.mxu0 0.0
    %527 = vmatpush1.xpose.msra.mxu0 0.0
    %528 = vmatprep.subr.mxu0 0.0
    %529 = vmatpush1.xpose.msra.mxu0 0.0
    %530 = vmatprep.subr.mxu0 0.0
    %531 = vmatpush1.xpose.msra.mxu0 0.0
    %532 = vmatprep.subr.mxu0 0.0
    %533 = vmatpush1.xpose.msra.mxu0 0.0
    %534 = vmatprep.subr.mxu0 0.0
    %535 = vmatpush1.xpose.msra.mxu0 0.0
    %536 = vmatprep.mubr.f32.mxu0 0.0
    %537 = vmatmul.mubr.f32.gmra.mrb[0].mxu0 %v468
    %v538 = vpop.f32.mrb[0].mxu0
    %v539 = vadd.f32 0.0, %v538
    %v540 = vpop.f32.mrb[0].mxu0
    %541 = vdwg.mxu0
    %v542 = vsel %vm137, %v539, -inf
    %543 = vmax.xlane.f32.xlu0 %v542
    %v544 = vpop.xlane.xlu0 %543
    %v545 = vsub.f32 %v539, %v544
    %v546 = vmul.f32 %v545, 1.442695
    %v547 = vpow.pop %v546
    %v548 = vsel %vm137, %v547, 0.0
    %549 = vadd.xlane.f32.xlu0 %v548
    %v550 = vpop.xlane.xlu0 %549
    %v551 = vrcp.pop %v550
    %v552 = vmul.f32 %v547, %v551
    %553 = vrot.lane.b32.xlu0 %v126, 48
    %v554 = vpop.permute.xlu0 %553
    %v557 = vsel %vm137, %v552, 0
    %559 = vmatprep.subr.mxu0 0.0
    %560 = vmatpush1.msra.mxu0 %v554
    %561 = vmatprep.subr.mxu0 0.0
    %562 = vmatpush1.msra.mxu0 0.0
    %563 = vmatprep.subr.mxu0 0.0
    %564 = vmatpush1.msra.mxu0 0.0
    %565 = vmatprep.subr.mxu0 0.0
    %566 = vmatpush1.msra.mxu0 0.0
    %567 = vmatprep.subr.mxu0 0.0
    %568 = vmatpush1.msra.mxu0 0.0
    %569 = vmatprep.subr.mxu0 0.0
    %570 = vmatpush1.msra.mxu0 0.0
    %571 = vmatprep.subr.mxu0 0.0
    %572 = vmatpush1.msra.mxu0 0.0
    %573 = vmatprep.subr.mxu0 0.0
    %574 = vmatpush1.msra.mxu0 0.0
    %575 = vmatprep.subr.mxu0 0.0
    %576 = vmatpush1.msra.mxu0 0.0
    %577 = vmatprep.subr.mxu0 0.0
    %578 = vmatpush1.msra.mxu0 0.0
    %579 = vmatprep.subr.mxu0 0.0
    %580 = vmatpush1.msra.mxu0 0.0
    %581 = vmatprep.subr.mxu0 0.0
    %582 = vmatpush1.msra.mxu0 0.0
    %583 = vmatprep.subr.mxu0 0.0
    %584 = vmatpush1.msra.mxu0 0.0
    %585 = vmatprep.subr.mxu0 0.0
    %586 = vmatpush1.msra.mxu0 0.0
    %587 = vmatprep.subr.mxu0 0.0
    %588 = vmatpush1.msra.mxu0 0.0
    %589 = vmatprep.subr.mxu0 0.0
    %590 = vmatpush1.msra.mxu0 0.0
    %591 = vmatprep.subr.mxu0 0.0
    %592 = vmatpush1.msra.mxu0 0.0
    %593 = vmatprep.subr.mxu0 0.0
    %594 = vmatpush1.msra.mxu0 0.0
    %595 = vmatprep.subr.mxu0 0.0
    %596 = vmatpush1.msra.mxu0 0.0
    %597 = vmatprep.subr.mxu0 0.0
    %598 = vmatpush1.msra.mxu0 0.0
    %599 = vmatprep.subr.mxu0 0.0
    %600 = vmatpush1.msra.mxu0 0.0
    %601 = vmatprep.subr.mxu0 0.0
    %602 = vmatpush1.msra.mxu0 0.0
    %603 = vmatprep.subr.mxu0 0.0
    %604 = vmatpush1.msra.mxu0 0.0
    %605 = vmatprep.subr.mxu0 0.0
    %606 = vmatpush1.msra.mxu0 0.0
    %607 = vmatprep.subr.mxu0 0.0
    %608 = vmatpush1.msra.mxu0 0.0
    %609 = vmatprep.subr.mxu0 0.0
    %610 = vmatpush1.msra.mxu0 0.0
    %611 = vmatprep.subr.mxu0 0.0
    %612 = vmatpush1.msra.mxu0 0.0
    %613 = vmatprep.subr.mxu0 0.0
    %614 = vmatpush1.msra.mxu0 0.0
    %615 = vmatprep.subr.mxu0 0.0
    %616 = vmatpush1.msra.mxu0 0.0
    %617 = vmatprep.subr.mxu0 0.0
    %618 = vmatpush1.msra.mxu0 0.0
    %619 = vmatprep.subr.mxu0 0.0
    %620 = vmatpush1.msra.mxu0 0.0
    %621 = vmatprep.subr.mxu0 0.0
    %622 = vmatpush1.msra.mxu0 0.0
    %623 = vmatprep.mubr.f32.mxu0 0.0
    %624 = vmatmul.mubr.f32.gmra.mrb[0].mxu0 %v557
    %v625 = vpop.f32.mrb[0].mxu0
    %v626 = vadd.f32 0.0, %v625
    %v627 = vpop.f32.mrb[0].mxu0
    %628 = vdwg.mxu0
    %629 = vrot.lane.b32.xlu0 %v126, 104
    %v630 = vpop.permute.xlu0 %629
    %631 = vrot.lane.b32.xlu0 %v126, 72
    %v632 = vpop.permute.xlu0 %631
    %v633 = vsel %vm137, %v630, 0
    %v635 = vsel %vm137, %v632, 0
    %637 = vmatprep.subr.mxu0 0.0
    %638 = vmatpush1.xpose.msra.mxu0 %v635
    %639 = vmatprep.subr.mxu0 0.0
    %640 = vmatpush1.xpose.msra.mxu0 0.0
    %641 = vmatprep.subr.mxu0 0.0
    %642 = vmatpush1.xpose.msra.mxu0 0.0
    %643 = vmatprep.subr.mxu0 0.0
    %644 = vmatpush1.xpose.msra.mxu0 0.0
    %645 = vmatprep.subr.mxu0 0.0
    %646 = vmatpush1.xpose.msra.mxu0 0.0
    %647 = vmatprep.subr.mxu0 0.0
    %648 = vmatpush1.xpose.msra.mxu0 0.0
    %649 = vmatprep.subr.mxu0 0.0
    %650 = vmatpush1.xpose.msra.mxu0 0.0
    %651 = vmatprep.subr.mxu0 0.0
    %652 = vmatpush1.xpose.msra.mxu0 0.0
    %653 = vmatprep.subr.mxu0 0.0
    %654 = vmatpush1.xpose.msra.mxu0 0.0
    %655 = vmatprep.subr.mxu0 0.0
    %656 = vmatpush1.xpose.msra.mxu0 0.0
    %657 = vmatprep.subr.mxu0 0.0
    %658 = vmatpush1.xpose.msra.mxu0 0.0
    %659 = vmatprep.subr.mxu0 0.0
    %660 = vmatpush1.xpose.msra.mxu0 0.0
    %661 = vmatprep.subr.mxu0 0.0
    %662 = vmatpush1.xpose.msra.mxu0 0.0
    %663 = vmatprep.subr.mxu0 0.0
    %664 = vmatpush1.xpose.msra.mxu0 0.0
    %665 = vmatprep.subr.mxu0 0.0
    %666 = vmatpush1.xpose.msra.mxu0 0.0
    %667 = vmatprep.subr.mxu0 0.0
    %668 = vmatpush1.xpose.msra.mxu0 0.0
    %669 = vmatprep.subr.mxu0 0.0
    %670 = vmatpush1.xpose.msra.mxu0 0.0
    %671 = vmatprep.subr.mxu0 0.0
    %672 = vmatpush1.xpose.msra.mxu0 0.0
    %673 = vmatprep.subr.mxu0 0.0
    %674 = vmatpush1.xpose.msra.mxu0 0.0
    %675 = vmatprep.subr.mxu0 0.0
    %676 = vmatpush1.xpose.msra.mxu0 0.0
    %677 = vmatprep.subr.mxu0 0.0
    %678 = vmatpush1.xpose.msra.mxu0 0.0
    %679 = vmatprep.subr.mxu0 0.0
    %680 = vmatpush1.xpose.msra.mxu0 0.0
    %681 = vmatprep.subr.mxu0 0.0
    %682 = vmatpush1.xpose.msra.mxu0 0.0
    %683 = vmatprep.subr.mxu0 0.0
    %684 = vmatpush1.xpose.msra.mxu0 0.0
    %685 = vmatprep.subr.mxu0 0.0
    %686 = vmatpush1.xpose.msra.mxu0 0.0
    %687 = vmatprep.subr.mxu0 0.0
    %688 = vmatpush1.xpose.msra.mxu0 0.0
    %689 = vmatprep.subr.mxu0 0.0
    %690 = vmatpush1.xpose.msra.mxu0 0.0
    %691 = vmatprep.subr.mxu0 0.0
    %692 = vmatpush1.xpose.msra.mxu0 0.0
    %693 = vmatprep.subr.mxu0 0.0
    %694 = vmatpush1.xpose.msra.mxu0 0.0
    %695 = vmatprep.subr.mxu0 0.0
    %696 = vmatpush1.xpose.msra.mxu0 0.0
    %697 = vmatprep.subr.mxu0 0.0
    %698 = vmatpush1.xpose.msra.mxu0 0.0
    %699 = vmatprep.subr.mxu0 0.0
    %700 = vmatpush1.xpose.msra.mxu0 0.0
    %701 = vmatprep.mubr.f32.mxu0 0.0
    %702 = vmatmul.mubr.f32.gmra.mrb[0].mxu0 %v633
    %v703 = vpop.f32.mrb[0].mxu0
    %v704 = vadd.f32 0.0, %v703
    %v705 = vpop.f32.mrb[0].mxu0
    %706 = vdwg.mxu0
    %v707 = vsel %vm137, %v704, -inf
    %708 = vmax.xlane.f32.xlu0 %v707
    %v709 = vpop.xlane.xlu0 %708
    %v710 = vsub.f32 %v704, %v709
    %v711 = vmul.f32 %v710, 1.442695
    %v712 = vpow.pop %v711
    %v713 = vsel %vm137, %v712, 0.0
    %714 = vadd.xlane.f32.xlu0 %v713
    %v715 = vpop.xlane.xlu0 %714
    %v716 = vrcp.pop %v715
    %v717 = vmul.f32 %v712, %v716
    %718 = vrot.lane.b32.xlu0 %v126, 40
    %v719 = vpop.permute.xlu0 %718
    %v722 = vsel %vm137, %v717, 0
    %724 = vmatprep.subr.mxu0 0.0
    %725 = vmatpush1.msra.mxu0 %v719
    %726 = vmatprep.subr.mxu0 0.0
    %727 = vmatpush1.msra.mxu0 0.0
    %728 = vmatprep.subr.mxu0 0.0
    %729 = vmatpush1.msra.mxu0 0.0
    %730 = vmatprep.subr.mxu0 0.0
    %731 = vmatpush1.msra.mxu0 0.0
    %732 = vmatprep.subr.mxu0 0.0
    %733 = vmatpush1.msra.mxu0 0.0
    %734 = vmatprep.subr.mxu0 0.0
    %735 = vmatpush1.msra.mxu0 0.0
    %736 = vmatprep.subr.mxu0 0.0
    %737 = vmatpush1.msra.mxu0 0.0
    %738 = vmatprep.subr.mxu0 0.0
    %739 = vmatpush1.msra.mxu0 0.0
    %740 = vmatprep.subr.mxu0 0.0
    %741 = vmatpush1.msra.mxu0 0.0
    %742 = vmatprep.subr.mxu0 0.0
    %743 = vmatpush1.msra.mxu0 0.0
    %744 = vmatprep.subr.mxu0 0.0
    %745 = vmatpush1.msra.mxu0 0.0
    %746 = vmatprep.subr.mxu0 0.0
    %747 = vmatpush1.msra.mxu0 0.0
    %748 = vmatprep.subr.mxu0 0.0
    %749 = vmatpush1.msra.mxu0 0.0
    %750 = vmatprep.subr.mxu0 0.0
    %751 = vmatpush1.msra.mxu0 0.0
    %752 = vmatprep.subr.mxu0 0.0
    %753 = vmatpush1.msra.mxu0 0.0
    %754 = vmatprep.subr.mxu0 0.0
    %755 = vmatpush1.msra.mxu0 0.0
    %756 = vmatprep.subr.mxu0 0.0
    %757 = vmatpush1.msra.mxu0 0.0
    %758 = vmatprep.subr.mxu0 0.0
    %759 = vmatpush1.msra.mxu0 0.0
    %760 = vmatprep.subr.mxu0 0.0
    %761 = vmatpush1.msra.mxu0 0.0
    %762 = vmatprep.subr.mxu0 0.0
    %763 = vmatpush1.msra.mxu0 0.0
    %764 = vmatprep.subr.mxu0 0.0
    %765 = vmatpush1.msra.mxu0 0.0
    %766 = vmatprep.subr.mxu0 0.0
    %767 = vmatpush1.msra.mxu0 0.0
    %768 = vmatprep.subr.mxu0 0.0
    %769 = vmatpush1.msra.mxu0 0.0
    %770 = vmatprep.subr.mxu0 0.0
    %771 = vmatpush1.msra.mxu0 0.0
    %772 = vmatprep.subr.mxu0 0.0
    %773 = vmatpush1.msra.mxu0 0.0
    %774 = vmatprep.subr.mxu0 0.0
    %775 = vmatpush1.msra.mxu0 0.0
    %776 = vmatprep.subr.mxu0 0.0
    %777 = vmatpush1.msra.mxu0 0.0
    %778 = vmatprep.subr.mxu0 0.0
    %779 = vmatpush1.msra.mxu0 0.0
    %780 = vmatprep.subr.mxu0 0.0
    %781 = vmatpush1.msra.mxu0 0.0
    %782 = vmatprep.subr.mxu0 0.0
    %783 = vmatpush1.msra.mxu0 0.0
    %784 = vmatprep.subr.mxu0 0.0
    %785 = vmatpush1.msra.mxu0 0.0
    %786 = vmatprep.subr.mxu0 0.0
    %787 = vmatpush1.msra.mxu0 0.0
    %788 = vmatprep.mubr.f32.mxu0 0.0
    %789 = vmatmul.mubr.f32.gmra.mrb[0].mxu0 %v722
    %v790 = vpop.f32.mrb[0].mxu0
    %v791 = vadd.f32 0.0, %v790
    %v792 = vpop.f32.mrb[0].mxu0
    %793 = vdwg.mxu0
    %795 = vrot.lane.b32.xlu0 %v461, 8
    %v796 = vpop.permute.xlu0 %795
    %799 = vrot.lane.b32.xlu0 %v626, 16
    %v800 = vpop.permute.xlu0 %799
    %803 = vrot.lane.b32.xlu0 %v791, 24
    %v804 = vpop.permute.xlu0 %803
    %v806 = vsel %vm137, %v296, %v796
    %vm807 = vcmask 130048
    %v808 = vsel %vm807, %v806, %v800
    %vm809 = vcmask 195584
    %v810 = vsel %vm809, %v808, %v804
    %812 = vrot.lane.b32.xlu0 %v131, 96
    %v813 = vpop.permute.xlu0 %812
    %v814 = vsel %vm137, %v131, 0
    %v816 = vsel %vm137, %v813, 0
    %818 = vmatprep.subr.mxu0 0.0
    %819 = vmatpush1.xpose.msra.mxu0 %v816
    %820 = vmatprep.subr.mxu0 0.0
    %821 = vmatpush1.xpose.msra.mxu0 0.0
    %822 = vmatprep.subr.mxu0 0.0
    %823 = vmatpush1.xpose.msra.mxu0 0.0
    %824 = vmatprep.subr.mxu0 0.0
    %825 = vmatpush1.xpose.msra.mxu0 0.0
    %826 = vmatprep.subr.mxu0 0.0
    %827 = vmatpush1.xpose.msra.mxu0 0.0
    %828 = vmatprep.subr.mxu0 0.0
    %829 = vmatpush1.xpose.msra.mxu0 0.0
    %830 = vmatprep.subr.mxu0 0.0
    %831 = vmatpush1.xpose.msra.mxu0 0.0
    %832 = vmatprep.subr.mxu0 0.0
    %833 = vmatpush1.xpose.msra.mxu0 0.0
    %834 = vmatprep.subr.mxu0 0.0
    %835 = vmatpush1.xpose.msra.mxu0 0.0
    %836 = vmatprep.subr.mxu0 0.0
    %837 = vmatpush1.xpose.msra.mxu0 0.0
    %838 = vmatprep.subr.mxu0 0.0
    %839 = vmatpush1.xpose.msra.mxu0 0.0
    %840 = vmatprep.subr.mxu0 0.0
    %841 = vmatpush1.xpose.msra.mxu0 0.0
    %842 = vmatprep.subr.mxu0 0.0
    %843 = vmatpush1.xpose.msra.mxu0 0.0
    %844 = vmatprep.subr.mxu0 0.0
    %845 = vmatpush1.xpose.msra.mxu0 0.0
    %846 = vmatprep.subr.mxu0 0.0
    %847 = vmatpush1.xpose.msra.mxu0 0.0
    %848 = vmatprep.subr.mxu0 0.0
    %849 = vmatpush1.xpose.msra.mxu0 0.0
    %850 = vmatprep.subr.mxu0 0.0
    %851 = vmatpush1.xpose.msra.mxu0 0.0
    %852 = vmatprep.subr.mxu0 0.0
    %853 = vmatpush1.xpose.msra.mxu0 0.0
    %854 = vmatprep.subr.mxu0 0.0
    %855 = vmatpush1.xpose.msra.mxu0 0.0
    %856 = vmatprep.subr.mxu0 0.0
    %857 = vmatpush1.xpose.msra.mxu0 0.0
    %858 = vmatprep.subr.mxu0 0.0
    %859 = vmatpush1.xpose.msra.mxu0 0.0
    %860 = vmatprep.subr.mxu0 0.0
    %861 = vmatpush1.xpose.msra.mxu0 0.0
    %862 = vmatprep.subr.mxu0 0.0
    %863 = vmatpush1.xpose.msra.mxu0 0.0
    %864 = vmatprep.subr.mxu0 0.0
    %865 = vmatpush1.xpose.msra.mxu0 0.0
    %866 = vmatprep.subr.mxu0 0.0
    %867 = vmatpush1.xpose.msra.mxu0 0.0
    %868 = vmatprep.subr.mxu0 0.0
    %869 = vmatpush1.xpose.msra.mxu0 0.0
    %870 = vmatprep.subr.mxu0 0.0
    %871 = vmatpush1.xpose.msra.mxu0 0.0
    %872 = vmatprep.subr.mxu0 0.0
    %873 = vmatpush1.xpose.msra.mxu0 0.0
    %874 = vmatprep.subr.mxu0 0.0
    %875 = vmatpush1.xpose.msra.mxu0 0.0
    %876 = vmatprep.subr.mxu0 0.0
    %877 = vmatpush1.xpose.msra.mxu0 0.0
    %878 = vmatprep.subr.mxu0 0.0
    %879 = vmatpush1.xpose.msra.mxu0 0.0
    %880 = vmatprep.subr.mxu0 0.0
    %881 = vmatpush1.xpose.msra.mxu0 0.0
    %882 = vmatprep.mubr.f32.mxu0 0.0
    %883 = vmatmul.mubr.f32.gmra.mrb[0].mxu0 %v814
    %v884 = vpop.f32.mrb[0].mxu0
    %v885 = vadd.f32 0.0, %v884
    %v886 = vpop.f32.mrb[0].mxu0
    %887 = vdwg.mxu0
    %v888 = vsel %vm137, %v885, -inf
    %889 = vmax.xlane.f32.xlu0 %v888
    %v890 = vpop.xlane.xlu0 %889
    %v891 = vsub.f32 %v885, %v890
    %v892 = vmul.f32 %v891, 1.442695
    %v893 = vpow.pop %v892
    %v894 = vsel %vm137, %v893, 0.0
    %895 = vadd.xlane.f32.xlu0 %v894
    %v896 = vpop.xlane.xlu0 %895
    %v897 = vrcp.pop %v896
    %v898 = vmul.f32 %v893, %v897
    %899 = vrot.lane.b32.xlu0 %v131, 64
    %v900 = vpop.permute.xlu0 %899
    %v903 = vsel %vm137, %v898, 0
    %905 = vmatprep.subr.mxu0 0.0
    %906 = vmatpush1.msra.mxu0 %v900
    %907 = vmatprep.subr.mxu0 0.0
    %908 = vmatpush1.msra.mxu0 0.0
    %909 = vmatprep.subr.mxu0 0.0
    %910 = vmatpush1.msra.mxu0 0.0
    %911 = vmatprep.subr.mxu0 0.0
    %912 = vmatpush1.msra.mxu0 0.0
    %913 = vmatprep.subr.mxu0 0.0
    %914 = vmatpush1.msra.mxu0 0.0
    %915 = vmatprep.subr.mxu0 0.0
    %916 = vmatpush1.msra.mxu0 0.0
    %917 = vmatprep.subr.mxu0 0.0
    %918 = vmatpush1.msra.mxu0 0.0
    %919 = vmatprep.subr.mxu0 0.0
    %920 = vmatpush1.msra.mxu0 0.0
    %921 = vmatprep.subr.mxu0 0.0
    %922 = vmatpush1.msra.mxu0 0.0
    %923 = vmatprep.subr.mxu0 0.0
    %924 = vmatpush1.msra.mxu0 0.0
    %925 = vmatprep.subr.mxu0 0.0
    %926 = vmatpush1.msra.mxu0 0.0
    %927 = vmatprep.subr.mxu0 0.0
    %928 = vmatpush1.msra.mxu0 0.0
    %929 = vmatprep.subr.mxu0 0.0
    %930 = vmatpush1.msra.mxu0 0.0
    %931 = vmatprep.subr.mxu0 0.0
    %932 = vmatpush1.msra.mxu0 0.0
    %933 = vmatprep.subr.mxu0 0.0
    %934 = vmatpush1.msra.mxu0 0.0
    %935 = vmatprep.subr.mxu0 0.0
    %936 = vmatpush1.msra.mxu0 0.0
    %937 = vmatprep.subr.mxu0 0.0
    %938 = vmatpush1.msra.mxu0 0.0
    %939 = vmatprep.subr.mxu0 0.0
    %940 = vmatpush1.msra.mxu0 0.0
    %941 = vmatprep.subr.mxu0 0.0
    %942 = vmatpush1.msra.mxu0 0.0
    %943 = vmatprep.subr.mxu0 0.0
    %944 = vmatpush1.msra.mxu0 0.0
    %945 = vmatprep.subr.mxu0 0.0
    %946 = vmatpush1.msra.mxu0 0.0
    %947 = vmatprep.subr.mxu0 0.0
    %948 = vmatpush1.msra.mxu0 0.0
    %949 = vmatprep.subr.mxu0 0.0
    %950 = vmatpush1.msra.mxu0 0.0
    %951 = vmatprep.subr.mxu0 0.0
    %952 = vmatpush1.msra.mxu0 0.0
    %953 = vmatprep.subr.mxu0 0.0
    %954 = vmatpush1.msra.mxu0 0.0
    %955 = vmatprep.subr.mxu0 0.0
    %956 = vmatpush1.msra.mxu0 0.0
    %957 = vmatprep.subr.mxu0 0.0
    %958 = vmatpush1.msra.mxu0 0.0
    %959 = vmatprep.subr.mxu0 0.0
    %960 = vmatpush1.msra.mxu0 0.0
    %961 = vmatprep.subr.mxu0 0.0
    %962 = vmatpush1.msra.mxu0 0.0
    %963 = vmatprep.subr.mxu0 0.0
    %964 = vmatpush1.msra.mxu0 0.0
    %965 = vmatprep.subr.mxu0 0.0
    %966 = vmatpush1.msra.mxu0 0.0
    %967 = vmatprep.subr.mxu0 0.0
    %968 = vmatpush1.msra.mxu0 0.0
    %969 = vmatprep.mubr.f32.mxu0 0.0
    %970 = vmatmul.mubr.f32.gmra.mrb[0].mxu0 %v903
    %v971 = vpop.f32.mrb[0].mxu0
    %v972 = vadd.f32 0.0, %v971
    %v973 = vpop.f32.mrb[0].mxu0
    %974 = vdwg.mxu0
    %975 = vrot.lane.b32.xlu0 %v131, 120
    %v976 = vpop.permute.xlu0 %975
    %977 = vrot.lane.b32.xlu0 %v131, 88
    %v978 = vpop.permute.xlu0 %977
    %v979 = vsel %vm137, %v976, 0
    %v981 = vsel %vm137, %v978, 0
    %983 = vmatprep.subr.mxu0 0.0
    %984 = vmatpush1.xpose.msra.mxu0 %v981
    %985 = vmatprep.subr.mxu0 0.0
    %986 = vmatpush1.xpose.msra.mxu0 0.0
    %987 = vmatprep.subr.mxu0 0.0
    %988 = vmatpush1.xpose.msra.mxu0 0.0
    %989 = vmatprep.subr.mxu0 0.0
    %990 = vmatpush1.xpose.msra.mxu0 0.0
    %991 = vmatprep.subr.mxu0 0.0
    %992 = vmatpush1.xpose.msra.mxu0 0.0
    %993 = vmatprep.subr.mxu0 0.0
    %994 = vmatpush1.xpose.msra.mxu0 0.0
    %995 = vmatprep.subr.mxu0 0.0
    %996 = vmatpush1.xpose.msra.mxu0 0.0
    %997 = vmatprep.subr.mxu0 0.0
    %998 = vmatpush1.xpose.msra.mxu0 0.0
    %999 = vmatprep.subr.mxu0 0.0
    %1000 = vmatpush1.xpose.msra.mxu0 0.0
    %1001 = vmatprep.subr.mxu0 0.0
    %1002 = vmatpush1.xpose.msra.mxu0 0.0
    %1003 = vmatprep.subr.mxu0 0.0
    %1004 = vmatpush1.xpose.msra.mxu0 0.0
    %1005 = vmatprep.subr.mxu0 0.0
    %1006 = vmatpush1.xpose.msra.mxu0 0.0
    %1007 = vmatprep.subr.mxu0 0.0
    %1008 = vmatpush1.xpose.msra.mxu0 0.0
    %1009 = vmatprep.subr.mxu0 0.0
    %1010 = vmatpush1.xpose.msra.mxu0 0.0
    %1011 = vmatprep.subr.mxu0 0.0
    %1012 = vmatpush1.xpose.msra.mxu0 0.0
    %1013 = vmatprep.subr.mxu0 0.0
    %1014 = vmatpush1.xpose.msra.mxu0 0.0
    %1015 = vmatprep.subr.mxu0 0.0
    %1016 = vmatpush1.xpose.msra.mxu0 0.0
    %1017 = vmatprep.subr.mxu0 0.0
    %1018 = vmatpush1.xpose.msra.mxu0 0.0
    %1019 = vmatprep.subr.mxu0 0.0
    %1020 = vmatpush1.xpose.msra.mxu0 0.0
    %1021 = vmatprep.subr.mxu0 0.0
    %1022 = vmatpush1.xpose.msra.mxu0 0.0
    %1023 = vmatprep.subr.mxu0 0.0
    %1024 = vmatpush1.xpose.msra.mxu0 0.0
    %1025 = vmatprep.subr.mxu0 0.0
    %1026 = vmatpush1.xpose.msra.mxu0 0.0
    %1027 = vmatprep.subr.mxu0 0.0
    %1028 = vmatpush1.xpose.msra.mxu0 0.0
    %1029 = vmatprep.subr.mxu0 0.0
    %1030 = vmatpush1.xpose.msra.mxu0 0.0
    %1031 = vmatprep.subr.mxu0 0.0
    %1032 = vmatpush1.xpose.msra.mxu0 0.0
    %1033 = vmatprep.subr.mxu0 0.0
    %1034 = vmatpush1.xpose.msra.mxu0 0.0
    %1035 = vmatprep.subr.mxu0 0.0
    %1036 = vmatpush1.xpose.msra.mxu0 0.0
    %1037 = vmatprep.subr.mxu0 0.0
    %1038 = vmatpush1.xpose.msra.mxu0 0.0
    %1039 = vmatprep.subr.mxu0 0.0
    %1040 = vmatpush1.xpose.msra.mxu0 0.0
    %1041 = vmatprep.subr.mxu0 0.0
    %1042 = vmatpush1.xpose.msra.mxu0 0.0
    %1043 = vmatprep.subr.mxu0 0.0
    %1044 = vmatpush1.xpose.msra.mxu0 0.0
    %1045 = vmatprep.subr.mxu0 0.0
    %1046 = vmatpush1.xpose.msra.mxu0 0.0
    %1047 = vmatprep.mubr.f32.mxu0 0.0
    %1048 = vmatmul.mubr.f32.gmra.mrb[0].mxu0 %v979
    %v1049 = vpop.f32.mrb[0].mxu0
    %v1050 = vadd.f32 0.0, %v1049
    %v1051 = vpop.f32.mrb[0].mxu0
    %1052 = vdwg.mxu0
    %v1053 = vsel %vm137, %v1050, -inf
    %1054 = vmax.xlane.f32.xlu0 %v1053
    %v1055 = vpop.xlane.xlu0 %1054
    %v1056 = vsub.f32 %v1050, %v1055
    %v1057 = vmul.f32 %v1056, 1.442695
    %v1058 = vpow.pop %v1057
    %v1059 = vsel %vm137, %v1058, 0.0
    %1060 = vadd.xlane.f32.xlu0 %v1059
    %v1061 = vpop.xlane.xlu0 %1060
    %v1062 = vrcp.pop %v1061
    %v1063 = vmul.f32 %v1058, %v1062
    %1064 = vrot.lane.b32.xlu0 %v131, 56
    %v1065 = vpop.permute.xlu0 %1064
    %v1068 = vsel %vm137, %v1063, 0
    %1070 = vmatprep.subr.mxu0 0.0
    %1071 = vmatpush1.msra.mxu0 %v1065
    %1072 = vmatprep.subr.mxu0 0.0
    %1073 = vmatpush1.msra.mxu0 0.0
    %1074 = vmatprep.subr.mxu0 0.0
    %1075 = vmatpush1.msra.mxu0 0.0
    %1076 = vmatprep.subr.mxu0 0.0
    %1077 = vmatpush1.msra.mxu0 0.0
    %1078 = vmatprep.subr.mxu0 0.0
    %1079 = vmatpush1.msra.mxu0 0.0
    %1080 = vmatprep.subr.mxu0 0.0
    %1081 = vmatpush1.msra.mxu0 0.0
    %1082 = vmatprep.subr.mxu0 0.0
    %1083 = vmatpush1.msra.mxu0 0.0
    %1084 = vmatprep.subr.mxu0 0.0
    %1085 = vmatpush1.msra.mxu0 0.0
    %1086 = vmatprep.subr.mxu0 0.0
    %1087 = vmatpush1.msra.mxu0 0.0
    %1088 = vmatprep.subr.mxu0 0.0
    %1089 = vmatpush1.msra.mxu0 0.0
    %1090 = vmatprep.subr.mxu0 0.0
    %1091 = vmatpush1.msra.mxu0 0.0
    %1092 = vmatprep.subr.mxu0 0.0
    %1093 = vmatpush1.msra.mxu0 0.0
    %1094 = vmatprep.subr.mxu0 0.0
    %1095 = vmatpush1.msra.mxu0 0.0
    %1096 = vmatprep.subr.mxu0 0.0
    %1097 = vmatpush1.msra.mxu0 0.0
    %1098 = vmatprep.subr.mxu0 0.0
    %1099 = vmatpush1.msra.mxu0 0.0
    %1100 = vmatprep.subr.mxu0 0.0
    %1101 = vmatpush1.msra.mxu0 0.0
    %1102 = vmatprep.subr.mxu0 0.0
    %1103 = vmatpush1.msra.mxu0 0.0
    %1104 = vmatprep.subr.mxu0 0.0
    %1105 = vmatpush1.msra.mxu0 0.0
    %1106 = vmatprep.subr.mxu0 0.0
    %1107 = vmatpush1.msra.mxu0 0.0
    %1108 = vmatprep.subr.mxu0 0.0
    %1109 = vmatpush1.msra.mxu0 0.0
    %1110 = vmatprep.subr.mxu0 0.0
    %1111 = vmatpush1.msra.mxu0 0.0
    %1112 = vmatprep.subr.mxu0 0.0
    %1113 = vmatpush1.msra.mxu0 0.0
    %1114 = vmatprep.subr.mxu0 0.0
    %1115 = vmatpush1.msra.mxu0 0.0
    %1116 = vmatprep.subr.mxu0 0.0
    %1117 = vmatpush1.msra.mxu0 0.0
    %1118 = vmatprep.subr.mxu0 0.0
    %1119 = vmatpush1.msra.mxu0 0.0
    %1120 = vmatprep.subr.mxu0 0.0
    %1121 = vmatpush1.msra.mxu0 0.0
    %1122 = vmatprep.subr.mxu0 0.0
    %1123 = vmatpush1.msra.mxu0 0.0
    %1124 = vmatprep.subr.mxu0 0.0
    %1125 = vmatpush1.msra.mxu0 0.0
    %1126 = vmatprep.subr.mxu0 0.0
    %1127 = vmatpush1.msra.mxu0 0.0
    %1128 = vmatprep.subr.mxu0 0.0
    %1129 = vmatpush1.msra.mxu0 0.0
    %1130 = vmatprep.subr.mxu0 0.0
    %1131 = vmatpush1.msra.mxu0 0.0
    %1132 = vmatprep.subr.mxu0 0.0
    %1133 = vmatpush1.msra.mxu0 0.0
    %1134 = vmatprep.mubr.f32.mxu0 0.0
    %1135 = vmatmul.mubr.f32.gmra.mrb[0].mxu0 %v1068
    %v1136 = vpop.f32.mrb[0].mxu0
    %v1137 = vadd.f32 0.0, %v1136
    %v1138 = vpop.f32.mrb[0].mxu0
    %1139 = vdwg.mxu0
    %1140 = vrot.lane.b32.xlu0 %v131, 112
    %v1141 = vpop.permute.xlu0 %1140
    %1142 = vrot.lane.b32.xlu0 %v131, 80
    %v1143 = vpop.permute.xlu0 %1142
    %v1144 = vsel %vm137, %v1141, 0
    %v1146 = vsel %vm137, %v1143, 0
    %1148 = vmatprep.subr.mxu0 0.0
    %1149 = vmatpush1.xpose.msra.mxu0 %v1146
    %1150 = vmatprep.subr.mxu0 0.0
    %1151 = vmatpush1.xpose.msra.mxu0 0.0
    %1152 = vmatprep.subr.mxu0 0.0
    %1153 = vmatpush1.xpose.msra.mxu0 0.0
    %1154 = vmatprep.subr.mxu0 0.0
    %1155 = vmatpush1.xpose.msra.mxu0 0.0
    %1156 = vmatprep.subr.mxu0 0.0
    %1157 = vmatpush1.xpose.msra.mxu0 0.0
    %1158 = vmatprep.subr.mxu0 0.0
    %1159 = vmatpush1.xpose.msra.mxu0 0.0
    %1160 = vmatprep.subr.mxu0 0.0
    %1161 = vmatpush1.xpose.msra.mxu0 0.0
    %1162 = vmatprep.subr.mxu0 0.0
    %1163 = vmatpush1.xpose.msra.mxu0 0.0
    %1164 = vmatprep.subr.mxu0 0.0
    %1165 = vmatpush1.xpose.msra.mxu0 0.0
    %1166 = vmatprep.subr.mxu0 0.0
    %1167 = vmatpush1.xpose.msra.mxu0 0.0
    %1168 = vmatprep.subr.mxu0 0.0
    %1169 = vmatpush1.xpose.msra.mxu0 0.0
    %1170 = vmatprep.subr.mxu0 0.0
    %1171 = vmatpush1.xpose.msra.mxu0 0.0
    %1172 = vmatprep.subr.mxu0 0.0
    %1173 = vmatpush1.xpose.msra.mxu0 0.0
    %1174 = vmatprep.subr.mxu0 0.0
    %1175 = vmatpush1.xpose.msra.mxu0 0.0
    %1176 = vmatprep.subr.mxu0 0.0
    %1177 = vmatpush1.xpose.msra.mxu0 0.0
    %1178 = vmatprep.subr.mxu0 0.0
    %1179 = vmatpush1.xpose.msra.mxu0 0.0
    %1180 = vmatprep.subr.mxu0 0.0
    %1181 = vmatpush1.xpose.msra.mxu0 0.0
    %1182 = vmatprep.subr.mxu0 0.0
    %1183 = vmatpush1.xpose.msra.mxu0 0.0
    %1184 = vmatprep.subr.mxu0 0.0
    %1185 = vmatpush1.xpose.msra.mxu0 0.0
    %1186 = vmatprep.subr.mxu0 0.0
    %1187 = vmatpush1.xpose.msra.mxu0 0.0
    %1188 = vmatprep.subr.mxu0 0.0
    %1189 = vmatpush1.xpose.msra.mxu0 0.0
    %1190 = vmatprep.subr.mxu0 0.0
    %1191 = vmatpush1.xpose.msra.mxu0 0.0
    %1192 = vmatprep.subr.mxu0 0.0
    %1193 = vmatpush1.xpose.msra.mxu0 0.0
    %1194 = vmatprep.subr.mxu0 0.0
    %1195 = vmatpush1.xpose.msra.mxu0 0.0
    %1196 = vmatprep.subr.mxu0 0.0
    %1197 = vmatpush1.xpose.msra.mxu0 0.0
    %1198 = vmatprep.subr.mxu0 0.0
    %1199 = vmatpush1.xpose.msra.mxu0 0.0
    %1200 = vmatprep.subr.mxu0 0.0
    %1201 = vmatpush1.xpose.msra.mxu0 0.0
    %1202 = vmatprep.subr.mxu0 0.0
    %1203 = vmatpush1.xpose.msra.mxu0 0.0
    %1204 = vmatprep.subr.mxu0 0.0
    %1205 = vmatpush1.xpose.msra.mxu0 0.0
    %1206 = vmatprep.subr.mxu0 0.0
    %1207 = vmatpush1.xpose.msra.mxu0 0.0
    %1208 = vmatprep.subr.mxu0 0.0
    %1209 = vmatpush1.xpose.msra.mxu0 0.0
    %1210 = vmatprep.subr.mxu0 0.0
    %1211 = vmatpush1.xpose.msra.mxu0 0.0
    %1212 = vmatprep.mubr.f32.mxu0 0.0
    %1213 = vmatmul.mubr.f32.gmra.mrb[0].mxu0 %v1144
    %v1214 = vpop.f32.mrb[0].mxu0
    %v1215 = vadd.f32 0.0, %v1214
    %v1216 = vpop.f32.mrb[0].mxu0
    %1217 = vdwg.mxu0
    %v1218 = vsel %vm137, %v1215, -inf
    %1219 = vmax.xlane.f32.xlu0 %v1218
    %v1220 = vpop.xlane.xlu0 %1219
    %v1221 = vsub.f32 %v1215, %v1220
    %v1222 = vmul.f32 %v1221, 1.442695
    %v1223 = vpow.pop %v1222
    %v1224 = vsel %vm137, %v1223, 0.0
    %1225 = vadd.xlane.f32.xlu0 %v1224
    %v1226 = vpop.xlane.xlu0 %1225
    %v1227 = vrcp.pop %v1226
    %v1228 = vmul.f32 %v1223, %v1227
    %1229 = vrot.lane.b32.xlu0 %v131, 48
    %v1230 = vpop.permute.xlu0 %1229
    %v1233 = vsel %vm137, %v1228, 0
    %1235 = vmatprep.subr.mxu0 0.0
    %1236 = vmatpush1.msra.mxu0 %v1230
    %1237 = vmatprep.subr.mxu0 0.0
    %1238 = vmatpush1.msra.mxu0 0.0
    %1239 = vmatprep.subr.mxu0 0.0
    %1240 = vmatpush1.msra.mxu0 0.0
    %1241 = vmatprep.subr.mxu0 0.0
    %1242 = vmatpush1.msra.mxu0 0.0
    %1243 = vmatprep.subr.mxu0 0.0
    %1244 = vmatpush1.msra.mxu0 0.0
    %1245 = vmatprep.subr.mxu0 0.0
    %1246 = vmatpush1.msra.mxu0 0.0
    %1247 = vmatprep.subr.mxu0 0.0
    %1248 = vmatpush1.msra.mxu0 0.0
    %1249 = vmatprep.subr.mxu0 0.0
    %1250 = vmatpush1.msra.mxu0 0.0
    %1251 = vmatprep.subr.mxu0 0.0
    %1252 = vmatpush1.msra.mxu0 0.0
    %1253 = vmatprep.subr.mxu0 0.0
    %1254 = vmatpush1.msra.mxu0 0.0
    %1255 = vmatprep.subr.mxu0 0.0
    %1256 = vmatpush1.msra.mxu0 0.0
    %1257 = vmatprep.subr.mxu0 0.0
    %1258 = vmatpush1.msra.mxu0 0.0
    %1259 = vmatprep.subr.mxu0 0.0
    %1260 = vmatpush1.msra.mxu0 0.0
    %1261 = vmatprep.subr.mxu0 0.0
    %1262 = vmatpush1.msra.mxu0 0.0
    %1263 = vmatprep.subr.mxu0 0.0
    %1264 = vmatpush1.msra.mxu0 0.0
    %1265 = vmatprep.subr.mxu0 0.0
    %1266 = vmatpush1.msra.mxu0 0.0
    %1267 = vmatprep.subr.mxu0 0.0
    %1268 = vmatpush1.msra.mxu0 0.0
    %1269 = vmatprep.subr.mxu0 0.0
    %1270 = vmatpush1.msra.mxu0 0.0
    %1271 = vmatprep.subr.mxu0 0.0
    %1272 = vmatpush1.msra.mxu0 0.0
    %1273 = vmatprep.subr.mxu0 0.0
    %1274 = vmatpush1.msra.mxu0 0.0
    %1275 = vmatprep.subr.mxu0 0.0
    %1276 = vmatpush1.msra.mxu0 0.0
    %1277 = vmatprep.subr.mxu0 0.0
    %1278 = vmatpush1.msra.mxu0 0.0
    %1279 = vmatprep.subr.mxu0 0.0
    %1280 = vmatpush1.msra.mxu0 0.0
    %1281 = vmatprep.subr.mxu0 0.0
    %1282 = vmatpush1.msra.mxu0 0.0
    %1283 = vmatprep.subr.mxu0 0.0
    %1284 = vmatpush1.msra.mxu0 0.0
    %1285 = vmatprep.subr.mxu0 0.0
    %1286 = vmatpush1.msra.mxu0 0.0
    %1287 = vmatprep.subr.mxu0 0.0
    %1288 = vmatpush1.msra.mxu0 0.0
    %1289 = vmatprep.subr.mxu0 0.0
    %1290 = vmatpush1.msra.mxu0 0.0
    %1291 = vmatprep.subr.mxu0 0.0
    %1292 = vmatpush1.msra.mxu0 0.0
    %1293 = vmatprep.subr.mxu0 0.0
    %1294 = vmatpush1.msra.mxu0 0.0
    %1295 = vmatprep.subr.mxu0 0.0
    %1296 = vmatpush1.msra.mxu0 0.0
    %1297 = vmatprep.subr.mxu0 0.0
    %1298 = vmatpush1.msra.mxu0 0.0
    %1299 = vmatprep.mubr.f32.mxu0 0.0
    %1300 = vmatmul.mubr.f32.gmra.mrb[0].mxu0 %v1233
    %v1301 = vpop.f32.mrb[0].mxu0
    %v1302 = vadd.f32 0.0, %v1301
    %v1303 = vpop.f32.mrb[0].mxu0
    %1304 = vdwg.mxu0
    %1305 = vrot.lane.b32.xlu0 %v131, 104
    %v1306 = vpop.permute.xlu0 %1305
    %1307 = vrot.lane.b32.xlu0 %v131, 72
    %v1308 = vpop.permute.xlu0 %1307
    %v1309 = vsel %vm137, %v1306, 0
    %v1311 = vsel %vm137, %v1308, 0
    %1313 = vmatprep.subr.mxu0 0.0
    %1314 = vmatpush1.xpose.msra.mxu0 %v1311
    %1315 = vmatprep.subr.mxu0 0.0
    %1316 = vmatpush1.xpose.msra.mxu0 0.0
    %1317 = vmatprep.subr.mxu0 0.0
    %1318 = vmatpush1.xpose.msra.mxu0 0.0
    %1319 = vmatprep.subr.mxu0 0.0
    %1320 = vmatpush1.xpose.msra.mxu0 0.0
    %1321 = vmatprep.subr.mxu0 0.0
    %1322 = vmatpush1.xpose.msra.mxu0 0.0
    %1323 = vmatprep.subr.mxu0 0.0
    %1324 = vmatpush1.xpose.msra.mxu0 0.0
    %1325 = vmatprep.subr.mxu0 0.0
    %1326 = vmatpush1.xpose.msra.mxu0 0.0
    %1327 = vmatprep.subr.mxu0 0.0
    %1328 = vmatpush1.xpose.msra.mxu0 0.0
    %1329 = vmatprep.subr.mxu0 0.0
    %1330 = vmatpush1.xpose.msra.mxu0 0.0
    %1331 = vmatprep.subr.mxu0 0.0
    %1332 = vmatpush1.xpose.msra.mxu0 0.0
    %1333 = vmatprep.subr.mxu0 0.0
    %1334 = vmatpush1.xpose.msra.mxu0 0.0
    %1335 = vmatprep.subr.mxu0 0.0
    %1336 = vmatpush1.xpose.msra.mxu0 0.0
    %1337 = vmatprep.subr.mxu0 0.0
    %1338 = vmatpush1.xpose.msra.mxu0 0.0
    %1339 = vmatprep.subr.mxu0 0.0
    %1340 = vmatpush1.xpose.msra.mxu0 0.0
    %1341 = vmatprep.subr.mxu0 0.0
    %1342 = vmatpush1.xpose.msra.mxu0 0.0
    %1343 = vmatprep.subr.mxu0 0.0
    %1344 = vmatpush1.xpose.msra.mxu0 0.0
    %1345 = vmatprep.subr.mxu0 0.0
    %1346 = vmatpush1.xpose.msra.mxu0 0.0
    %1347 = vmatprep.subr.mxu0 0.0
    %1348 = vmatpush1.xpose.msra.mxu0 0.0
    %1349 = vmatprep.subr.mxu0 0.0
    %1350 = vmatpush1.xpose.msra.mxu0 0.0
    %1351 = vmatprep.subr.mxu0 0.0
    %1352 = vmatpush1.xpose.msra.mxu0 0.0
    %1353 = vmatprep.subr.mxu0 0.0
    %1354 = vmatpush1.xpose.msra.mxu0 0.0
    %1355 = vmatprep.subr.mxu0 0.0
    %1356 = vmatpush1.xpose.msra.mxu0 0.0
    %1357 = vmatprep.subr.mxu0 0.0
    %1358 = vmatpush1.xpose.msra.mxu0 0.0
    %1359 = vmatprep.subr.mxu0 0.0
    %1360 = vmatpush1.xpose.msra.mxu0 0.0
    %1361 = vmatprep.subr.mxu0 0.0
    %1362 = vmatpush1.xpose.msra.mxu0 0.0
    %1363 = vmatprep.subr.mxu0 0.0
    %1364 = vmatpush1.xpose.msra.mxu0 0.0
    %1365 = vmatprep.subr.mxu0 0.0
    %1366 = vmatpush1.xpose.msra.mxu0 0.0
    %1367 = vmatprep.subr.mxu0 0.0
    %1368 = vmatpush1.xpose.msra.mxu0 0.0
    %1369 = vmatprep.subr.mxu0 0.0
    %1370 = vmatpush1.xpose.msra.mxu0 0.0
    %1371 = vmatprep.subr.mxu0 0.0
    %1372 = vmatpush1.xpose.msra.mxu0 0.0
    %1373 = vmatprep.subr.mxu0 0.0
    %1374 = vmatpush1.xpose.msra.mxu0 0.0
    %1375 = vmatprep.subr.mxu0 0.0
    %1376 = vmatpush1.xpose.msra.mxu0 0.0
    %1377 = vmatprep.mubr.f32.mxu0 0.0
    %1378 = vmatmul.mubr.f32.gmra.mrb[0].mxu0 %v1309
    %v1379 = vpop.f32.mrb[0].mxu0
    %v1380 = vadd.f32 0.0, %v1379
    %v1381 = vpop.f32.mrb[0].mxu0
    %1382 = vdwg.mxu0
    %v1383 = vsel %vm137, %v1380, -inf
    %1384 = vmax.xlane.f32.xlu0 %v1383
    %v1385 = vpop.xlane.xlu0 %1384
    %v1386 = vsub.f32 %v1380, %v1385
    %v1387 = vmul.f32 %v1386, 1.442695
    %v1388 = vpow.pop %v1387
    %v1389 = vsel %vm137, %v1388, 0.0
    %1390 = vadd.xlane.f32.xlu0 %v1389
    %v1391 = vpop.xlane.xlu0 %1390
    %v1392 = vrcp.pop %v1391
    %v1393 = vmul.f32 %v1388, %v1392
    %1394 = vrot.lane.b32.xlu0 %v131, 40
    %v1395 = vpop.permute.xlu0 %1394
    %v1398 = vsel %vm137, %v1393, 0
    %1400 = vmatprep.subr.mxu0 0.0
    %1401 = vmatpush1.msra.mxu0 %v1395
    %1402 = vmatprep.subr.mxu0 0.0
    %1403 = vmatpush1.msra.mxu0 0.0
    %1404 = vmatprep.subr.mxu0 0.0
    %1405 = vmatpush1.msra.mxu0 0.0
    %1406 = vmatprep.subr.mxu0 0.0
    %1407 = vmatpush1.msra.mxu0 0.0
    %1408 = vmatprep.subr.mxu0 0.0
    %1409 = vmatpush1.msra.mxu0 0.0
    %1410 = vmatprep.subr.mxu0 0.0
    %1411 = vmatpush1.msra.mxu0 0.0
    %1412 = vmatprep.subr.mxu0 0.0
    %1413 = vmatpush1.msra.mxu0 0.0
    %1414 = vmatprep.subr.mxu0 0.0
    %1415 = vmatpush1.msra.mxu0 0.0
    %1416 = vmatprep.subr.mxu0 0.0
    %1417 = vmatpush1.msra.mxu0 0.0
    %1418 = vmatprep.subr.mxu0 0.0
    %1419 = vmatpush1.msra.mxu0 0.0
    %1420 = vmatprep.subr.mxu0 0.0
    %1421 = vmatpush1.msra.mxu0 0.0
    %1422 = vmatprep.subr.mxu0 0.0
    %1423 = vmatpush1.msra.mxu0 0.0
    %1424 = vmatprep.subr.mxu0 0.0
    %1425 = vmatpush1.msra.mxu0 0.0
    %1426 = vmatprep.subr.mxu0 0.0
    %1427 = vmatpush1.msra.mxu0 0.0
    %1428 = vmatprep.subr.mxu0 0.0
    %1429 = vmatpush1.msra.mxu0 0.0
    %1430 = vmatprep.subr.mxu0 0.0
    %1431 = vmatpush1.msra.mxu0 0.0
    %1432 = vmatprep.subr.mxu0 0.0
    %1433 = vmatpush1.msra.mxu0 0.0
    %1434 = vmatprep.subr.mxu0 0.0
    %1435 = vmatpush1.msra.mxu0 0.0
    %1436 = vmatprep.subr.mxu0 0.0
    %1437 = vmatpush1.msra.mxu0 0.0
    %1438 = vmatprep.subr.mxu0 0.0
    %1439 = vmatpush1.msra.mxu0 0.0
    %1440 = vmatprep.subr.mxu0 0.0
    %1441 = vmatpush1.msra.mxu0 0.0
    %1442 = vmatprep.subr.mxu0 0.0
    %1443 = vmatpush1.msra.mxu0 0.0
    %1444 = vmatprep.subr.mxu0 0.0
    %1445 = vmatpush1.msra.mxu0 0.0
    %1446 = vmatprep.subr.mxu0 0.0
    %1447 = vmatpush1.msra.mxu0 0.0
    %1448 = vmatprep.subr.mxu0 0.0
    %1449 = vmatpush1.msra.mxu0 0.0
    %1450 = vmatprep.subr.mxu0 0.0
    %1451 = vmatpush1.msra.mxu0 0.0
    %1452 = vmatprep.subr.mxu0 0.0
    %1453 = vmatpush1.msra.mxu0 0.0
    %1454 = vmatprep.subr.mxu0 0.0
    %1455 = vmatpush1.msra.mxu0 0.0
    %1456 = vmatprep.subr.mxu0 0.0
    %1457 = vmatpush1.msra.mxu0 0.0
    %1458 = vmatprep.subr.mxu0 0.0
    %1459 = vmatpush1.msra.mxu0 0.0
    %1460 = vmatprep.subr.mxu0 0.0
    %1461 = vmatpush1.msra.mxu0 0.0
    %1462 = vmatprep.subr.mxu0 0.0
    %1463 = vmatpush1.msra.mxu0 0.0
    %1464 = vmatprep.mubr.f32.mxu0 0.0
    %1465 = vmatmul.mubr.f32.gmra.mrb[0].mxu0 %v1398
    %v1466 = vpop.f32.mrb[0].mxu0
    %v1467 = vadd.f32 0.0, %v1466
    %v1468 = vpop.f32.mrb[0].mxu0
    %1469 = vdwg.mxu0
    %1471 = vrot.lane.b32.xlu0 %v1137, 8
    %v1472 = vpop.permute.xlu0 %1471
    %1475 = vrot.lane.b32.xlu0 %v1302, 16
    %v1476 = vpop.permute.xlu0 %1475
    %1479 = vrot.lane.b32.xlu0 %v1467, 24
    %v1480 = vpop.permute.xlu0 %1479
    %v1482 = vsel %vm137, %v972, %v1472
    %v1483 = vsel %vm807, %v1482, %v1476
    %v1484 = vsel %vm809, %v1483, %v1480
    %v1485 = vld [vmem:[%s2] sm:$0xff]
    %v1486 = vld [vmem:[%s2 + $0x8] sm:$0xff]
    %v1487 = vld [vmem:[%s2 + $0x10] sm:$0xff]
    %v1488 = vld [vmem:[%s2 + $0x18] sm:$0xff]
    %v1489 = vlaneseq
    %v1490 = vshrl.u32 %v1489, 7
    %v1491 = vsub.s32 0, %v1490
    %v1492 = vrot.slane %v47, %v1491
    %v1494 = vsel %vm52, %v810, 0
    %v1497 = vsel %vm52, %v1484, 0
    %1499 = vmatprep.subr.mxu0 0.0
    %1500 = vmatpush1.msra.mxu0 %v1485
    %1501 = vmatprep.subr.mxu0 0.0
    %1502 = vmatpush1.msra.mxu0 %v1486
    %1503 = vmatprep.subr.mxu0 0.0
    %1504 = vmatpush1.msra.mxu0 %v1487
    %1505 = vmatprep.subr.mxu0 0.0
    %1506 = vmatpush1.msra.mxu0 %v1488
    %1507 = vmatprep.subr.mxu0 0.0
    %1508 = vmatpush1.msra.mxu0 0.0
    %1509 = vmatprep.subr.mxu0 0.0
    %1510 = vmatpush1.msra.mxu0 0.0
    %1511 = vmatprep.subr.mxu0 0.0
    %1512 = vmatpush1.msra.mxu0 0.0
    %1513 = vmatprep.subr.mxu0 0.0
    %1514 = vmatpush1.msra.mxu0 0.0
    %1515 = vmatprep.subr.mxu0 0.0
    %1516 = vmatpush1.msra.mxu0 0.0
    %1517 = vmatprep.subr.mxu0 0.0
    %1518 = vmatpush1.msra.mxu0 0.0
    %1519 = vmatprep.subr.mxu0 0.0
    %1520 = vmatpush1.msra.mxu0 0.0
    %1521 = vmatprep.subr.mxu0 0.0
    %1522 = vmatpush1.msra.mxu0 0.0
    %1523 = vmatprep.subr.mxu0 0.0
    %1524 = vmatpush1.msra.mxu0 0.0
    %1525 = vmatprep.subr.mxu0 0.0
    %1526 = vmatpush1.msra.mxu0 0.0
    %1527 = vmatprep.subr.mxu0 0.0
    %1528 = vmatpush1.msra.mxu0 0.0
    %1529 = vmatprep.subr.mxu0 0.0
    %1530 = vmatpush1.msra.mxu0 0.0
    %1531 = vmatprep.subr.mxu0 0.0
    %1532 = vmatpush1.msra.mxu0 0.0
    %1533 = vmatprep.subr.mxu0 0.0
    %1534 = vmatpush1.msra.mxu0 0.0
    %1535 = vmatprep.subr.mxu0 0.0
    %1536 = vmatpush1.msra.mxu0 0.0
    %1537 = vmatprep.subr.mxu0 0.0
    %1538 = vmatpush1.msra.mxu0 0.0
    %1539 = vmatprep.subr.mxu0 0.0
    %1540 = vmatpush1.msra.mxu0 0.0
    %1541 = vmatprep.subr.mxu0 0.0
    %1542 = vmatpush1.msra.mxu0 0.0
    %1543 = vmatprep.subr.mxu0 0.0
    %1544 = vmatpush1.msra.mxu0 0.0
    %1545 = vmatprep.subr.mxu0 0.0
    %1546 = vmatpush1.msra.mxu0 0.0
    %1547 = vmatprep.subr.mxu0 0.0
    %1548 = vmatpush1.msra.mxu0 0.0
    %1549 = vmatprep.subr.mxu0 0.0
    %1550 = vmatpush1.msra.mxu0 0.0
    %1551 = vmatprep.subr.mxu0 0.0
    %1552 = vmatpush1.msra.mxu0 0.0
    %1553 = vmatprep.subr.mxu0 0.0
    %1554 = vmatpush1.msra.mxu0 0.0
    %1555 = vmatprep.subr.mxu0 0.0
    %1556 = vmatpush1.msra.mxu0 0.0
    %1557 = vmatprep.subr.mxu0 0.0
    %1558 = vmatpush1.msra.mxu0 0.0
    %1559 = vmatprep.subr.mxu0 0.0
    %1560 = vmatpush1.msra.mxu0 0.0
    %1561 = vmatprep.subr.mxu0 0.0
    %1562 = vmatpush1.msra.mxu0 0.0
    %1563 = vmatprep.mubr.f32.mxu0 0.0
    %1564 = vmatmul.mubr.f32.gmra.mrb[0].mxu0 %v1494
    %v1565 = vpop.f32.mrb[0].mxu0
    %v1566 = vadd.f32 %v1492, %v1565
    %v1567 = vpop.f32.mrb[0].mxu0
    %1568 = vmatprep.mubr.f32.mxu0 0.0
    %1569 = vmatmul.mubr.f32.gmra.mrb[0].mxu0 %v1497
    %v1570 = vpop.f32.mrb[0].mxu0
    %v1571 = vadd.f32 %v1492, %v1570
    %v1572 = vpop.f32.mrb[0].mxu0
    %1573 = vdwg.mxu0
    %v1574 = vadd.f32 %v1566, %v45
    %v1575 = vadd.f32 %v1571, %v46
    %v1576 = vsel %vm52, %v1574, 0.0
    %1577 = vadd.xlane.f32.xlu0 %v1576
    %v1578 = vpop.xlane.xlu0 %1577
    %v1579 = vsel %vm52, %v1575, 0.0
    %1580 = vadd.xlane.f32.xlu0 %v1579
    %v1581 = vpop.xlane.xlu0 %1580
    %v1582 = vrcp.pop 32.0
    %v1583 = vmul.f32 %v1578, %v1582
    %v1584 = vmul.f32 %v1581, %v1582
    %v1585 = vsub.f32 %v1574, %v1583
    %v1586 = vsub.f32 %v1575, %v1584
    %v1587 = vmul.f32 %v1585, %v1585
    %v1588 = vmul.f32 %v1586, %v1586
    %v1589 = vsel %vm52, %v1587, 0.0
    %1590 = vadd.xlane.f32.xlu0 %v1589
    %v1591 = vpop.xlane.xlu0 %1590
    %v1592 = vsel %vm52, %v1588, 0.0
    %1593 = vadd.xlane.f32.xlu0 %v1592
    %v1594 = vpop.xlane.xlu0 %1593
    %v1595 = vmul.f32 %v1591, %v1582
    %v1596 = vmul.f32 %v1594, %v1582
    %v1597 = vadd.f32 %v1595, 1e-05
    %v1598 = vadd.f32 %v1596, 1e-05
    %v1599 = vrsqrt.pop %v1597
    %v1600 = vrsqrt.pop %v1598
    %v1601 = vmul.f32 %v1585, %v1599
    %v1602 = vmul.f32 %v1586, %v1600
    %v1603 = vlaneseq
    %v1604 = vshrl.u32 %v1603, 7
    %v1605 = vsub.s32 1, %v1604
    %v1606 = vrot.slane %v47, %v1605
    %v1607 = vmul.f32 %v1601, %v1606
    %v1608 = vmul.f32 %v1602, %v1606
    %v1609 = vlaneseq
    %v1610 = vshrl.u32 %v1609, 7
    %v1611 = vsub.s32 2, %v1610
    %v1612 = vrot.slane %v47, %v1611
    %v1613 = vadd.f32 %v1607, %v1612
    %v1614 = vadd.f32 %v1608, %v1612
    %v1615 = vld [vmem:[%s3] sm:$0xff]
    %v1616 = vld [vmem:[%s3 + $0x8] sm:$0xff]
    %v1617 = vld [vmem:[%s3 + $0x10] sm:$0xff]
    %v1618 = vld [vmem:[%s3 + $0x18] sm:$0xff]
    %v1619 = vlaneseq
    %v1620 = vshrl.u32 %v1619, 7
    %v1621 = vsub.s32 3, %v1620
    %v1622 = vrot.slane %v47, %v1621
    %v1624 = vsel %vm52, %v1613, 0
    %v1627 = vsel %vm52, %v1614, 0
    %1629 = vmatprep.subr.mxu0 0.0
    %1630 = vmatpush1.msra.mxu0 %v1615
    %1631 = vmatprep.subr.mxu0 0.0
    %1632 = vmatpush1.msra.mxu0 %v1616
    %1633 = vmatprep.subr.mxu0 0.0
    %1634 = vmatpush1.msra.mxu0 %v1617
    %1635 = vmatprep.subr.mxu0 0.0
    %1636 = vmatpush1.msra.mxu0 %v1618
    %1637 = vmatprep.subr.mxu0 0.0
    %1638 = vmatpush1.msra.mxu0 0.0
    %1639 = vmatprep.subr.mxu0 0.0
    %1640 = vmatpush1.msra.mxu0 0.0
    %1641 = vmatprep.subr.mxu0 0.0
    %1642 = vmatpush1.msra.mxu0 0.0
    %1643 = vmatprep.subr.mxu0 0.0
    %1644 = vmatpush1.msra.mxu0 0.0
    %1645 = vmatprep.subr.mxu0 0.0
    %1646 = vmatpush1.msra.mxu0 0.0
    %1647 = vmatprep.subr.mxu0 0.0
    %1648 = vmatpush1.msra.mxu0 0.0
    %1649 = vmatprep.subr.mxu0 0.0
    %1650 = vmatpush1.msra.mxu0 0.0
    %1651 = vmatprep.subr.mxu0 0.0
    %1652 = vmatpush1.msra.mxu0 0.0
    %1653 = vmatprep.subr.mxu0 0.0
    %1654 = vmatpush1.msra.mxu0 0.0
    %1655 = vmatprep.subr.mxu0 0.0
    %1656 = vmatpush1.msra.mxu0 0.0
    %1657 = vmatprep.subr.mxu0 0.0
    %1658 = vmatpush1.msra.mxu0 0.0
    %1659 = vmatprep.subr.mxu0 0.0
    %1660 = vmatpush1.msra.mxu0 0.0
    %1661 = vmatprep.subr.mxu0 0.0
    %1662 = vmatpush1.msra.mxu0 0.0
    %1663 = vmatprep.subr.mxu0 0.0
    %1664 = vmatpush1.msra.mxu0 0.0
    %1665 = vmatprep.subr.mxu0 0.0
    %1666 = vmatpush1.msra.mxu0 0.0
    %1667 = vmatprep.subr.mxu0 0.0
    %1668 = vmatpush1.msra.mxu0 0.0
    %1669 = vmatprep.subr.mxu0 0.0
    %1670 = vmatpush1.msra.mxu0 0.0
    %1671 = vmatprep.subr.mxu0 0.0
    %1672 = vmatpush1.msra.mxu0 0.0
    %1673 = vmatprep.subr.mxu0 0.0
    %1674 = vmatpush1.msra.mxu0 0.0
    %1675 = vmatprep.subr.mxu0 0.0
    %1676 = vmatpush1.msra.mxu0 0.0
    %1677 = vmatprep.subr.mxu0 0.0
    %1678 = vmatpush1.msra.mxu0 0.0
    %1679 = vmatprep.subr.mxu0 0.0
    %1680 = vmatpush1.msra.mxu0 0.0
    %1681 = vmatprep.subr.mxu0 0.0
    %1682 = vmatpush1.msra.mxu0 0.0
    %1683 = vmatprep.subr.mxu0 0.0
    %1684 = vmatpush1.msra.mxu0 0.0
    %1685 = vmatprep.subr.mxu0 0.0
    %1686 = vmatpush1.msra.mxu0 0.0
    %1687 = vmatprep.subr.mxu0 0.0
    %1688 = vmatpush1.msra.mxu0 0.0
    %1689 = vmatprep.subr.mxu0 0.0
    %1690 = vmatpush1.msra.mxu0 0.0
    %1691 = vmatprep.subr.mxu0 0.0
    %1692 = vmatpush1.msra.mxu0 0.0
    %1693 = vmatprep.mubr.f32.mxu0 0.0
    %1694 = vmatmul.mubr.f32.gmra.mrb[0].mxu0 %v1624
    %v1695 = vpop.f32.mrb[0].mxu0
    %v1696 = vadd.f32 %v1622, %v1695
    %v1697 = vpop.f32.mrb[0].mxu0
    %1698 = vmatprep.mubr.f32.mxu0 0.0
    %1699 = vmatmul.mubr.f32.gmra.mrb[0].mxu0 %v1627
    %v1700 = vpop.f32.mrb[0].mxu0
    %v1701 = vadd.f32 %v1622, %v1700
    %v1702 = vpop.f32.mrb[0].mxu0
    %1703 = vdwg.mxu0
    %v1704 = vmax.f32 %v1696, 0.0
    %v1705 = vmax.f32 %v1701, 0.0
    %v1706 = vld [vmem:[%s4] sm:$0xff]
    %v1707 = vld [vmem:[%s4 + $0x8] sm:$0xff]
    %v1708 = vld [vmem:[%s4 + $0x10] sm:$0xff]
    %v1709 = vld [vmem:[%s4 + $0x18] sm:$0xff]
    %v1710 = vld [vmem:[%s4 + $0x20] sm:$0xff]
    %v1711 = vld [vmem:[%s4 + $0x28] sm:$0xff]
    %v1712 = vld [vmem:[%s4 + $0x30] sm:$0xff]
    %v1713 = vld [vmem:[%s4 + $0x38] sm:$0xff]
    %v1714 = vld [vmem:[%s4 + $0x40] sm:$0xff]
    %v1715 = vld [vmem:[%s4 + $0x48] sm:$0xff]
    %v1716 = vld [vmem:[%s4 + $0x50] sm:$0xff]
    %v1717 = vld [vmem:[%s4 + $0x58] sm:$0xff]
    %v1718 = vld [vmem:[%s4 + $0x60] sm:$0xff]
    %v1719 = vld [vmem:[%s4 + $0x68] sm:$0xff]
    %v1720 = vld [vmem:[%s4 + $0x70] sm:$0xff]
    %v1721 = vld [vmem:[%s4 + $0x78] sm:$0xff]
    %v1722 = vlaneseq
    %v1723 = vshrl.u32 %v1722, 7
    %v1724 = vsub.s32 4, %v1723
    %v1725 = vrot.slane %v47, %v1724
    %1726 = vmatprep.subr.mxu0 0.0
    %1727 = vmatpush1.msra.mxu0 %v1706
    %1728 = vmatprep.subr.mxu0 0.0
    %1729 = vmatpush1.msra.mxu0 %v1707
    %1730 = vmatprep.subr.mxu0 0.0
    %1731 = vmatpush1.msra.mxu0 %v1708
    %1732 = vmatprep.subr.mxu0 0.0
    %1733 = vmatpush1.msra.mxu0 %v1709
    %1734 = vmatprep.subr.mxu0 0.0
    %1735 = vmatpush1.msra.mxu0 %v1710
    %1736 = vmatprep.subr.mxu0 0.0
    %1737 = vmatpush1.msra.mxu0 %v1711
    %1738 = vmatprep.subr.mxu0 0.0
    %1739 = vmatpush1.msra.mxu0 %v1712
    %1740 = vmatprep.subr.mxu0 0.0
    %1741 = vmatpush1.msra.mxu0 %v1713
    %1742 = vmatprep.subr.mxu0 0.0
    %1743 = vmatpush1.msra.mxu0 %v1714
    %1744 = vmatprep.subr.mxu0 0.0
    %1745 = vmatpush1.msra.mxu0 %v1715
    %1746 = vmatprep.subr.mxu0 0.0
    %1747 = vmatpush1.msra.mxu0 %v1716
    %1748 = vmatprep.subr.mxu0 0.0
    %1749 = vmatpush1.msra.mxu0 %v1717
    %1750 = vmatprep.subr.mxu0 0.0
    %1751 = vmatpush1.msra.mxu0 %v1718
    %1752 = vmatprep.subr.mxu0 0.0
    %1753 = vmatpush1.msra.mxu0 %v1719
    %1754 = vmatprep.subr.mxu0 0.0
    %1755 = vmatpush1.msra.mxu0 %v1720
    %1756 = vmatprep.subr.mxu0 0.0
    %1757 = vmatpush1.msra.mxu0 %v1721
    %1758 = vmatprep.subr.mxu0 0.0
    %1759 = vmatpush1.msra.mxu0 0.0
    %1760 = vmatprep.subr.mxu0 0.0
    %1761 = vmatpush1.msra.mxu0 0.0
    %1762 = vmatprep.subr.mxu0 0.0
    %1763 = vmatpush1.msra.mxu0 0.0
    %1764 = vmatprep.subr.mxu0 0.0
    %1765 = vmatpush1.msra.mxu0 0.0
    %1766 = vmatprep.subr.mxu0 0.0
    %1767 = vmatpush1.msra.mxu0 0.0
    %1768 = vmatprep.subr.mxu0 0.0
    %1769 = vmatpush1.msra.mxu0 0.0
    %1770 = vmatprep.subr.mxu0 0.0
    %1771 = vmatpush1.msra.mxu0 0.0
    %1772 = vmatprep.subr.mxu0 0.0
    %1773 = vmatpush1.msra.mxu0 0.0
    %1774 = vmatprep.subr.mxu0 0.0
    %1775 = vmatpush1.msra.mxu0 0.0
    %1776 = vmatprep.subr.mxu0 0.0
    %1777 = vmatpush1.msra.mxu0 0.0
    %1778 = vmatprep.subr.mxu0 0.0
    %1779 = vmatpush1.msra.mxu0 0.0
    %1780 = vmatprep.subr.mxu0 0.0
    %1781 = vmatpush1.msra.mxu0 0.0
    %1782 = vmatprep.subr.mxu0 0.0
    %1783 = vmatpush1.msra.mxu0 0.0
    %1784 = vmatprep.subr.mxu0 0.0
    %1785 = vmatpush1.msra.mxu0 0.0
    %1786 = vmatprep.subr.mxu0 0.0
    %1787 = vmatpush1.msra.mxu0 0.0
    %1788 = vmatprep.subr.mxu0 0.0
    %1789 = vmatpush1.msra.mxu0 0.0
    %1790 = vmatprep.mubr.f32.mxu0 0.0
    %1791 = vmatmul.mubr.f32.gmra.mrb[0].mxu0 %v1704
    %v1792 = vpop.f32.mrb[0].mxu0
    %v1793 = vadd.f32 %v1725, %v1792
    %v1794 = vpop.f32.mrb[0].mxu0
    %1795 = vmatprep.mubr.f32.mxu0 0.0
    %1796 = vmatmul.mubr.f32.gmra.mrb[0].mxu0 %v1705
    %v1797 = vpop.f32.mrb[0].mxu0
    %v1798 = vadd.f32 %v1725, %v1797
    %v1799 = vpop.f32.mrb[0].mxu0
    %1800 = vdwg.mxu0
    %v1801 = vadd.f32 %v1793, %v1613
    %v1802 = vadd.f32 %v1798, %v1614
    %v1803 = vsel %vm52, %v1801, 0.0
    %1804 = vadd.xlane.f32.xlu0 %v1803
    %v1805 = vpop.xlane.xlu0 %1804
    %v1806 = vsel %vm52, %v1802, 0.0
    %1807 = vadd.xlane.f32.xlu0 %v1806
    %v1808 = vpop.xlane.xlu0 %1807
    %v1809 = vmul.f32 %v1805, %v1582
    %v1810 = vmul.f32 %v1808, %v1582
    %v1811 = vsub.f32 %v1801, %v1809
    %v1812 = vsub.f32 %v1802, %v1810
    %v1813 = vmul.f32 %v1811, %v1811
    %v1814 = vmul.f32 %v1812, %v1812
    %v1815 = vsel %vm52, %v1813, 0.0
    %1816 = vadd.xlane.f32.xlu0 %v1815
    %v1817 = vpop.xlane.xlu0 %1816
    %v1818 = vsel %vm52, %v1814, 0.0
    %1819 = vadd.xlane.f32.xlu0 %v1818
    %v1820 = vpop.xlane.xlu0 %1819
    %v1821 = vmul.f32 %v1817, %v1582
    %v1822 = vmul.f32 %v1820, %v1582
    %v1823 = vadd.f32 %v1821, 1e-05
    %v1824 = vadd.f32 %v1822, 1e-05
    %v1825 = vrsqrt.pop %v1823
    %v1826 = vrsqrt.pop %v1824
    %v1827 = vmul.f32 %v1811, %v1825
    %v1828 = vmul.f32 %v1812, %v1826
    %v1829 = vlaneseq
    %v1830 = vshrl.u32 %v1829, 7
    %v1831 = vsub.s32 5, %v1830
    %v1832 = vrot.slane %v47, %v1831
    %v1833 = vmul.f32 %v1827, %v1832
    %v1834 = vmul.f32 %v1828, %v1832
    %v1835 = vlaneseq
    %v1836 = vshrl.u32 %v1835, 7
    %v1837 = vsub.s32 6, %v1836
    %v1838 = vrot.slane %v47, %v1837
    %v1839 = vadd.f32 %v1833, %v1838
    %v1840 = vadd.f32 %v1834, %v1838
    %v1841 = vld [vmem:[%s10] sm:$0xff]
    %v1842 = vld [vmem:[%s6] sm:$0xff]
    %v1843 = vld [vmem:[%s6 + $0x8] sm:$0xff]
    %v1844 = vld [vmem:[%s6 + $0x10] sm:$0xff]
    %v1845 = vld [vmem:[%s6 + $0x18] sm:$0xff]
    %v1847 = vsel %vm52, %v1839, 0
    %v1850 = vsel %vm52, %v1840, 0
    %1852 = vmatprep.subr.mxu0 0.0
    %1853 = vmatpush1.msra.mxu0 %v1842
    %1854 = vmatprep.subr.mxu0 0.0
    %1855 = vmatpush1.msra.mxu0 %v1843
    %1856 = vmatprep.subr.mxu0 0.0
    %1857 = vmatpush1.msra.mxu0 %v1844
    %1858 = vmatprep.subr.mxu0 0.0
    %1859 = vmatpush1.msra.mxu0 %v1845
    %1860 = vmatprep.subr.mxu0 0.0
    %1861 = vmatpush1.msra.mxu0 0.0
    %1862 = vmatprep.subr.mxu0 0.0
    %1863 = vmatpush1.msra.mxu0 0.0
    %1864 = vmatprep.subr.mxu0 0.0
    %1865 = vmatpush1.msra.mxu0 0.0
    %1866 = vmatprep.subr.mxu0 0.0
    %1867 = vmatpush1.msra.mxu0 0.0
    %1868 = vmatprep.subr.mxu0 0.0
    %1869 = vmatpush1.msra.mxu0 0.0
    %1870 = vmatprep.subr.mxu0 0.0
    %1871 = vmatpush1.msra.mxu0 0.0
    %1872 = vmatprep.subr.mxu0 0.0
    %1873 = vmatpush1.msra.mxu0 0.0
    %1874 = vmatprep.subr.mxu0 0.0
    %1875 = vmatpush1.msra.mxu0 0.0
    %1876 = vmatprep.subr.mxu0 0.0
    %1877 = vmatpush1.msra.mxu0 0.0
    %1878 = vmatprep.subr.mxu0 0.0
    %1879 = vmatpush1.msra.mxu0 0.0
    %1880 = vmatprep.subr.mxu0 0.0
    %1881 = vmatpush1.msra.mxu0 0.0
    %1882 = vmatprep.subr.mxu0 0.0
    %1883 = vmatpush1.msra.mxu0 0.0
    %1884 = vmatprep.subr.mxu0 0.0
    %1885 = vmatpush1.msra.mxu0 0.0
    %1886 = vmatprep.subr.mxu0 0.0
    %1887 = vmatpush1.msra.mxu0 0.0
    %1888 = vmatprep.subr.mxu0 0.0
    %1889 = vmatpush1.msra.mxu0 0.0
    %1890 = vmatprep.subr.mxu0 0.0
    %1891 = vmatpush1.msra.mxu0 0.0
    %1892 = vmatprep.subr.mxu0 0.0
    %1893 = vmatpush1.msra.mxu0 0.0
    %1894 = vmatprep.subr.mxu0 0.0
    %1895 = vmatpush1.msra.mxu0 0.0
    %1896 = vmatprep.subr.mxu0 0.0
    %1897 = vmatpush1.msra.mxu0 0.0
    %1898 = vmatprep.subr.mxu0 0.0
    %1899 = vmatpush1.msra.mxu0 0.0
    %1900 = vmatprep.subr.mxu0 0.0
    %1901 = vmatpush1.msra.mxu0 0.0
    %1902 = vmatprep.subr.mxu0 0.0
    %1903 = vmatpush1.msra.mxu0 0.0
    %1904 = vmatprep.subr.mxu0 0.0
    %1905 = vmatpush1.msra.mxu0 0.0
    %1906 = vmatprep.subr.mxu0 0.0
    %1907 = vmatpush1.msra.mxu0 0.0
    %1908 = vmatprep.subr.mxu0 0.0
    %1909 = vmatpush1.msra.mxu0 0.0
    %1910 = vmatprep.subr.mxu0 0.0
    %1911 = vmatpush1.msra.mxu0 0.0
    %1912 = vmatprep.subr.mxu0 0.0
    %1913 = vmatpush1.msra.mxu0 0.0
    %1914 = vmatprep.subr.mxu0 0.0
    %1915 = vmatpush1.msra.mxu0 0.0
    %1916 = vmatprep.mubr.f32.mxu0 0.0
    %1917 = vmatmul.mubr.f32.gmra.mrb[0].mxu0 %v1847
    %v1918 = vpop.f32.mrb[0].mxu0
    %v1919 = vadd.f32 0.0, %v1918
    %v1920 = vpop.f32.mrb[0].mxu0
    %1921 = vmatprep.mubr.f32.mxu0 0.0
    %1922 = vmatmul.mubr.f32.gmra.mrb[0].mxu0 %v1850
    %v1923 = vpop.f32.mrb[0].mxu0
    %v1924 = vadd.f32 0.0, %v1923
    %v1925 = vpop.f32.mrb[0].mxu0
    %1926 = vdwg.mxu0
    %1928 = vrot.lane.b32.xlu0 %v1919, 96
    %v1929 = vpop.permute.xlu0 %1928
    %v1930 = vsel %vm137, %v1919, 0
    %v1932 = vsel %vm137, %v1929, 0
    %1934 = vmatprep.subr.mxu0 0.0
    %1935 = vmatpush1.xpose.msra.mxu0 %v1932
    %1936 = vmatprep.subr.mxu0 0.0
    %1937 = vmatpush1.xpose.msra.mxu0 0.0
    %1938 = vmatprep.subr.mxu0 0.0
    %1939 = vmatpush1.xpose.msra.mxu0 0.0
    %1940 = vmatprep.subr.mxu0 0.0
    %1941 = vmatpush1.xpose.msra.mxu0 0.0
    %1942 = vmatprep.subr.mxu0 0.0
    %1943 = vmatpush1.xpose.msra.mxu0 0.0
    %1944 = vmatprep.subr.mxu0 0.0
    %1945 = vmatpush1.xpose.msra.mxu0 0.0
    %1946 = vmatprep.subr.mxu0 0.0
    %1947 = vmatpush1.xpose.msra.mxu0 0.0
    %1948 = vmatprep.subr.mxu0 0.0
    %1949 = vmatpush1.xpose.msra.mxu0 0.0
    %1950 = vmatprep.subr.mxu0 0.0
    %1951 = vmatpush1.xpose.msra.mxu0 0.0
    %1952 = vmatprep.subr.mxu0 0.0
    %1953 = vmatpush1.xpose.msra.mxu0 0.0
    %1954 = vmatprep.subr.mxu0 0.0
    %1955 = vmatpush1.xpose.msra.mxu0 0.0
    %1956 = vmatprep.subr.mxu0 0.0
    %1957 = vmatpush1.xpose.msra.mxu0 0.0
    %1958 = vmatprep.subr.mxu0 0.0
    %1959 = vmatpush1.xpose.msra.mxu0 0.0
    %1960 = vmatprep.subr.mxu0 0.0
    %1961 = vmatpush1.xpose.msra.mxu0 0.0
    %1962 = vmatprep.subr.mxu0 0.0
    %1963 = vmatpush1.xpose.msra.mxu0 0.0
    %1964 = vmatprep.subr.mxu0 0.0
    %1965 = vmatpush1.xpose.msra.mxu0 0.0
    %1966 = vmatprep.subr.mxu0 0.0
    %1967 = vmatpush1.xpose.msra.mxu0 0.0
    %1968 = vmatprep.subr.mxu0 0.0
    %1969 = vmatpush1.xpose.msra.mxu0 0.0
    %1970 = vmatprep.subr.mxu0 0.0
    %1971 = vmatpush1.xpose.msra.mxu0 0.0
    %1972 = vmatprep.subr.mxu0 0.0
    %1973 = vmatpush1.xpose.msra.mxu0 0.0
    %1974 = vmatprep.subr.mxu0 0.0
    %1975 = vmatpush1.xpose.msra.mxu0 0.0
    %1976 = vmatprep.subr.mxu0 0.0
    %1977 = vmatpush1.xpose.msra.mxu0 0.0
    %1978 = vmatprep.subr.mxu0 0.0
    %1979 = vmatpush1.xpose.msra.mxu0 0.0
    %1980 = vmatprep.subr.mxu0 0.0
    %1981 = vmatpush1.xpose.msra.mxu0 0.0
    %1982 = vmatprep.subr.mxu0 0.0
    %1983 = vmatpush1.xpose.msra.mxu0 0.0
    %1984 = vmatprep.subr.mxu0 0.0
    %1985 = vmatpush1.xpose.msra.mxu0 0.0
    %1986 = vmatprep.subr.mxu0 0.0
    %1987 = vmatpush1.xpose.msra.mxu0 0.0
    %1988 = vmatprep.subr.mxu0 0.0
    %1989 = vmatpush1.xpose.msra.mxu0 0.0
    %1990 = vmatprep.subr.mxu0 0.0
    %1991 = vmatpush1.xpose.msra.mxu0 0.0
    %1992 = vmatprep.subr.mxu0 0.0
    %1993 = vmatpush1.xpose.msra.mxu0 0.0
    %1994 = vmatprep.subr.mxu0 0.0
    %1995 = vmatpush1.xpose.msra.mxu0 0.0
    %1996 = vmatprep.subr.mxu0 0.0
    %1997 = vmatpush1.xpose.msra.mxu0 0.0
    %1998 = vmatprep.mubr.f32.mxu0 0.0
    %1999 = vmatmul.mubr.f32.gmra.mrb[0].mxu0 %v1930
    %v2000 = vpop.f32.mrb[0].mxu0
    %v2001 = vadd.f32 0.0, %v2000
    %v2002 = vpop.f32.mrb[0].mxu0
    %2003 = vdwg.mxu0
    %v2004 = vsel %vm137, %v2001, -inf
    %2005 = vmax.xlane.f32.xlu0 %v2004
    %v2006 = vpop.xlane.xlu0 %2005
    %v2007 = vsub.f32 %v2001, %v2006
    %v2008 = vmul.f32 %v2007, 1.442695
    %v2009 = vpow.pop %v2008
    %v2010 = vsel %vm137, %v2009, 0.0
    %2011 = vadd.xlane.f32.xlu0 %v2010
    %v2012 = vpop.xlane.xlu0 %2011
    %v2013 = vrcp.pop %v2012
    %v2014 = vmul.f32 %v2009, %v2013
    %2015 = vrot.lane.b32.xlu0 %v1919, 64
    %v2016 = vpop.permute.xlu0 %2015
    %v2019 = vsel %vm137, %v2014, 0
    %2021 = vmatprep.subr.mxu0 0.0
    %2022 = vmatpush1.msra.mxu0 %v2016
    %2023 = vmatprep.subr.mxu0 0.0
    %2024 = vmatpush1.msra.mxu0 0.0
    %2025 = vmatprep.subr.mxu0 0.0
    %2026 = vmatpush1.msra.mxu0 0.0
    %2027 = vmatprep.subr.mxu0 0.0
    %2028 = vmatpush1.msra.mxu0 0.0
    %2029 = vmatprep.subr.mxu0 0.0
    %2030 = vmatpush1.msra.mxu0 0.0
    %2031 = vmatprep.subr.mxu0 0.0
    %2032 = vmatpush1.msra.mxu0 0.0
    %2033 = vmatprep.subr.mxu0 0.0
    %2034 = vmatpush1.msra.mxu0 0.0
    %2035 = vmatprep.subr.mxu0 0.0
    %2036 = vmatpush1.msra.mxu0 0.0
    %2037 = vmatprep.subr.mxu0 0.0
    %2038 = vmatpush1.msra.mxu0 0.0
    %2039 = vmatprep.subr.mxu0 0.0
    %2040 = vmatpush1.msra.mxu0 0.0
    %2041 = vmatprep.subr.mxu0 0.0
    %2042 = vmatpush1.msra.mxu0 0.0
    %2043 = vmatprep.subr.mxu0 0.0
    %2044 = vmatpush1.msra.mxu0 0.0
    %2045 = vmatprep.subr.mxu0 0.0
    %2046 = vmatpush1.msra.mxu0 0.0
    %2047 = vmatprep.subr.mxu0 0.0
    %2048 = vmatpush1.msra.mxu0 0.0
    %2049 = vmatprep.subr.mxu0 0.0
    %2050 = vmatpush1.msra.mxu0 0.0
    %2051 = vmatprep.subr.mxu0 0.0
    %2052 = vmatpush1.msra.mxu0 0.0
    %2053 = vmatprep.subr.mxu0 0.0
    %2054 = vmatpush1.msra.mxu0 0.0
    %2055 = vmatprep.subr.mxu0 0.0
    %2056 = vmatpush1.msra.mxu0 0.0
    %2057 = vmatprep.subr.mxu0 0.0
    %2058 = vmatpush1.msra.mxu0 0.0
    %2059 = vmatprep.subr.mxu0 0.0
    %2060 = vmatpush1.msra.mxu0 0.0
    %2061 = vmatprep.subr.mxu0 0.0
    %2062 = vmatpush1.msra.mxu0 0.0
    %2063 = vmatprep.subr.mxu0 0.0
    %2064 = vmatpush1.msra.mxu0 0.0
    %2065 = vmatprep.subr.mxu0 0.0
    %2066 = vmatpush1.msra.mxu0 0.0
    %2067 = vmatprep.subr.mxu0 0.0
    %2068 = vmatpush1.msra.mxu0 0.0
    %2069 = vmatprep.subr.mxu0 0.0
    %2070 = vmatpush1.msra.mxu0 0.0
    %2071 = vmatprep.subr.mxu0 0.0
    %2072 = vmatpush1.msra.mxu0 0.0
    %2073 = vmatprep.subr.mxu0 0.0
    %2074 = vmatpush1.msra.mxu0 0.0
    %2075 = vmatprep.subr.mxu0 0.0
    %2076 = vmatpush1.msra.mxu0 0.0
    %2077 = vmatprep.subr.mxu0 0.0
    %2078 = vmatpush1.msra.mxu0 0.0
    %2079 = vmatprep.subr.mxu0 0.0
    %2080 = vmatpush1.msra.mxu0 0.0
    %2081 = vmatprep.subr.mxu0 0.0
    %2082 = vmatpush1.msra.mxu0 0.0
    %2083 = vmatprep.subr.mxu0 0.0
    %2084 = vmatpush1.msra.mxu0 0.0
    %2085 = vmatprep.mubr.f32.mxu0 0.0
    %2086 = vmatmul.mubr.f32.gmra.mrb[0].mxu0 %v2019
    %v2087 = vpop.f32.mrb[0].mxu0
    %v2088 = vadd.f32 0.0, %v2087
    %v2089 = vpop.f32.mrb[0].mxu0
    %2090 = vdwg.mxu0
    %2091 = vrot.lane.b32.xlu0 %v1919, 120
    %v2092 = vpop.permute.xlu0 %2091
    %2093 = vrot.lane.b32.xlu0 %v1919, 88
    %v2094 = vpop.permute.xlu0 %2093
    %v2095 = vsel %vm137, %v2092, 0
    %v2097 = vsel %vm137, %v2094, 0
    %2099 = vmatprep.subr.mxu0 0.0
    %2100 = vmatpush1.xpose.msra.mxu0 %v2097
    %2101 = vmatprep.subr.mxu0 0.0
    %2102 = vmatpush1.xpose.msra.mxu0 0.0
    %2103 = vmatprep.subr.mxu0 0.0
    %2104 = vmatpush1.xpose.msra.mxu0 0.0
    %2105 = vmatprep.subr.mxu0 0.0
    %2106 = vmatpush1.xpose.msra.mxu0 0.0
    %2107 = vmatprep.subr.mxu0 0.0
    %2108 = vmatpush1.xpose.msra.mxu0 0.0
    %2109 = vmatprep.subr.mxu0 0.0
    %2110 = vmatpush1.xpose.msra.mxu0 0.0
    %2111 = vmatprep.subr.mxu0 0.0
    %2112 = vmatpush1.xpose.msra.mxu0 0.0
    %2113 = vmatprep.subr.mxu0 0.0
    %2114 = vmatpush1.xpose.msra.mxu0 0.0
    %2115 = vmatprep.subr.mxu0 0.0
    %2116 = vmatpush1.xpose.msra.mxu0 0.0
    %2117 = vmatprep.subr.mxu0 0.0
    %2118 = vmatpush1.xpose.msra.mxu0 0.0
    %2119 = vmatprep.subr.mxu0 0.0
    %2120 = vmatpush1.xpose.msra.mxu0 0.0
    %2121 = vmatprep.subr.mxu0 0.0
    %2122 = vmatpush1.xpose.msra.mxu0 0.0
    %2123 = vmatprep.subr.mxu0 0.0
    %2124 = vmatpush1.xpose.msra.mxu0 0.0
    %2125 = vmatprep.subr.mxu0 0.0
    %2126 = vmatpush1.xpose.msra.mxu0 0.0
    %2127 = vmatprep.subr.mxu0 0.0
    %2128 = vmatpush1.xpose.msra.mxu0 0.0
    %2129 = vmatprep.subr.mxu0 0.0
    %2130 = vmatpush1.xpose.msra.mxu0 0.0
    %2131 = vmatprep.subr.mxu0 0.0
    %2132 = vmatpush1.xpose.msra.mxu0 0.0
    %2133 = vmatprep.subr.mxu0 0.0
    %2134 = vmatpush1.xpose.msra.mxu0 0.0
    %2135 = vmatprep.subr.mxu0 0.0
    %2136 = vmatpush1.xpose.msra.mxu0 0.0
    %2137 = vmatprep.subr.mxu0 0.0
    %2138 = vmatpush1.xpose.msra.mxu0 0.0
    %2139 = vmatprep.subr.mxu0 0.0
    %2140 = vmatpush1.xpose.msra.mxu0 0.0
    %2141 = vmatprep.subr.mxu0 0.0
    %2142 = vmatpush1.xpose.msra.mxu0 0.0
    %2143 = vmatprep.subr.mxu0 0.0
    %2144 = vmatpush1.xpose.msra.mxu0 0.0
    %2145 = vmatprep.subr.mxu0 0.0
    %2146 = vmatpush1.xpose.msra.mxu0 0.0
    %2147 = vmatprep.subr.mxu0 0.0
    %2148 = vmatpush1.xpose.msra.mxu0 0.0
    %2149 = vmatprep.subr.mxu0 0.0
    %2150 = vmatpush1.xpose.msra.mxu0 0.0
    %2151 = vmatprep.subr.mxu0 0.0
    %2152 = vmatpush1.xpose.msra.mxu0 0.0
    %2153 = vmatprep.subr.mxu0 0.0
    %2154 = vmatpush1.xpose.msra.mxu0 0.0
    %2155 = vmatprep.subr.mxu0 0.0
    %2156 = vmatpush1.xpose.msra.mxu0 0.0
    %2157 = vmatprep.subr.mxu0 0.0
    %2158 = vmatpush1.xpose.msra.mxu0 0.0
    %2159 = vmatprep.subr.mxu0 0.0
    %2160 = vmatpush1.xpose.msra.mxu0 0.0
    %2161 = vmatprep.subr.mxu0 0.0
    %2162 = vmatpush1.xpose.msra.mxu0 0.0
    %2163 = vmatprep.mubr.f32.mxu0 0.0
    %2164 = vmatmul.mubr.f32.gmra.mrb[0].mxu0 %v2095
    %v2165 = vpop.f32.mrb[0].mxu0
    %v2166 = vadd.f32 0.0, %v2165
    %v2167 = vpop.f32.mrb[0].mxu0
    %2168 = vdwg.mxu0
    %v2169 = vsel %vm137, %v2166, -inf
    %2170 = vmax.xlane.f32.xlu0 %v2169
    %v2171 = vpop.xlane.xlu0 %2170
    %v2172 = vsub.f32 %v2166, %v2171
    %v2173 = vmul.f32 %v2172, 1.442695
    %v2174 = vpow.pop %v2173
    %v2175 = vsel %vm137, %v2174, 0.0
    %2176 = vadd.xlane.f32.xlu0 %v2175
    %v2177 = vpop.xlane.xlu0 %2176
    %v2178 = vrcp.pop %v2177
    %v2179 = vmul.f32 %v2174, %v2178
    %2180 = vrot.lane.b32.xlu0 %v1919, 56
    %v2181 = vpop.permute.xlu0 %2180
    %v2184 = vsel %vm137, %v2179, 0
    %2186 = vmatprep.subr.mxu0 0.0
    %2187 = vmatpush1.msra.mxu0 %v2181
    %2188 = vmatprep.subr.mxu0 0.0
    %2189 = vmatpush1.msra.mxu0 0.0
    %2190 = vmatprep.subr.mxu0 0.0
    %2191 = vmatpush1.msra.mxu0 0.0
    %2192 = vmatprep.subr.mxu0 0.0
    %2193 = vmatpush1.msra.mxu0 0.0
    %2194 = vmatprep.subr.mxu0 0.0
    %2195 = vmatpush1.msra.mxu0 0.0
    %2196 = vmatprep.subr.mxu0 0.0
    %2197 = vmatpush1.msra.mxu0 0.0
    %2198 = vmatprep.subr.mxu0 0.0
    %2199 = vmatpush1.msra.mxu0 0.0
    %2200 = vmatprep.subr.mxu0 0.0
    %2201 = vmatpush1.msra.mxu0 0.0
    %2202 = vmatprep.subr.mxu0 0.0
    %2203 = vmatpush1.msra.mxu0 0.0
    %2204 = vmatprep.subr.mxu0 0.0
    %2205 = vmatpush1.msra.mxu0 0.0
    %2206 = vmatprep.subr.mxu0 0.0
    %2207 = vmatpush1.msra.mxu0 0.0
    %2208 = vmatprep.subr.mxu0 0.0
    %2209 = vmatpush1.msra.mxu0 0.0
    %2210 = vmatprep.subr.mxu0 0.0
    %2211 = vmatpush1.msra.mxu0 0.0
    %2212 = vmatprep.subr.mxu0 0.0
    %2213 = vmatpush1.msra.mxu0 0.0
    %2214 = vmatprep.subr.mxu0 0.0
    %2215 = vmatpush1.msra.mxu0 0.0
    %2216 = vmatprep.subr.mxu0 0.0
    %2217 = vmatpush1.msra.mxu0 0.0
    %2218 = vmatprep.subr.mxu0 0.0
    %2219 = vmatpush1.msra.mxu0 0.0
    %2220 = vmatprep.subr.mxu0 0.0
    %2221 = vmatpush1.msra.mxu0 0.0
    %2222 = vmatprep.subr.mxu0 0.0
    %2223 = vmatpush1.msra.mxu0 0.0
    %2224 = vmatprep.subr.mxu0 0.0
    %2225 = vmatpush1.msra.mxu0 0.0
    %2226 = vmatprep.subr.mxu0 0.0
    %2227 = vmatpush1.msra.mxu0 0.0
    %2228 = vmatprep.subr.mxu0 0.0
    %2229 = vmatpush1.msra.mxu0 0.0
    %2230 = vmatprep.subr.mxu0 0.0
    %2231 = vmatpush1.msra.mxu0 0.0
    %2232 = vmatprep.subr.mxu0 0.0
    %2233 = vmatpush1.msra.mxu0 0.0
    %2234 = vmatprep.subr.mxu0 0.0
    %2235 = vmatpush1.msra.mxu0 0.0
    %2236 = vmatprep.subr.mxu0 0.0
    %2237 = vmatpush1.msra.mxu0 0.0
    %2238 = vmatprep.subr.mxu0 0.0
    %2239 = vmatpush1.msra.mxu0 0.0
    %2240 = vmatprep.subr.mxu0 0.0
    %2241 = vmatpush1.msra.mxu0 0.0
    %2242 = vmatprep.subr.mxu0 0.0
    %2243 = vmatpush1.msra.mxu0 0.0
    %2244 = vmatprep.subr.mxu0 0.0
    %2245 = vmatpush1.msra.mxu0 0.0
    %2246 = vmatprep.subr.mxu0 0.0
    %2247 = vmatpush1.msra.mxu0 0.0
    %2248 = vmatprep.subr.mxu0 0.0
    %2249 = vmatpush1.msra.mxu0 0.0
    %2250 = vmatprep.mubr.f32.mxu0 0.0
    %2251 = vmatmul.mubr.f32.gmra.mrb[0].mxu0 %v2184
    %v2252 = vpop.f32.mrb[0].mxu0
    %v2253 = vadd.f32 0.0, %v2252
    %v2254 = vpop.f32.mrb[0].mxu0
    %2255 = vdwg.mxu0
    %2256 = vrot.lane.b32.xlu0 %v1919, 112
    %v2257 = vpop.permute.xlu0 %2256
    %2258 = vrot.lane.b32.xlu0 %v1919, 80
    %v2259 = vpop.permute.xlu0 %2258
    %v2260 = vsel %vm137, %v2257, 0
    %v2262 = vsel %vm137, %v2259, 0
    %2264 = vmatprep.subr.mxu0 0.0
    %2265 = vmatpush1.xpose.msra.mxu0 %v2262
    %2266 = vmatprep.subr.mxu0 0.0
    %2267 = vmatpush1.xpose.msra.mxu0 0.0
    %2268 = vmatprep.subr.mxu0 0.0
    %2269 = vmatpush1.xpose.msra.mxu0 0.0
    %2270 = vmatprep.subr.mxu0 0.0
    %2271 = vmatpush1.xpose.msra.mxu0 0.0
    %2272 = vmatprep.subr.mxu0 0.0
    %2273 = vmatpush1.xpose.msra.mxu0 0.0
    %2274 = vmatprep.subr.mxu0 0.0
    %2275 = vmatpush1.xpose.msra.mxu0 0.0
    %2276 = vmatprep.subr.mxu0 0.0
    %2277 = vmatpush1.xpose.msra.mxu0 0.0
    %2278 = vmatprep.subr.mxu0 0.0
    %2279 = vmatpush1.xpose.msra.mxu0 0.0
    %2280 = vmatprep.subr.mxu0 0.0
    %2281 = vmatpush1.xpose.msra.mxu0 0.0
    %2282 = vmatprep.subr.mxu0 0.0
    %2283 = vmatpush1.xpose.msra.mxu0 0.0
    %2284 = vmatprep.subr.mxu0 0.0
    %2285 = vmatpush1.xpose.msra.mxu0 0.0
    %2286 = vmatprep.subr.mxu0 0.0
    %2287 = vmatpush1.xpose.msra.mxu0 0.0
    %2288 = vmatprep.subr.mxu0 0.0
    %2289 = vmatpush1.xpose.msra.mxu0 0.0
    %2290 = vmatprep.subr.mxu0 0.0
    %2291 = vmatpush1.xpose.msra.mxu0 0.0
    %2292 = vmatprep.subr.mxu0 0.0
    %2293 = vmatpush1.xpose.msra.mxu0 0.0
    %2294 = vmatprep.subr.mxu0 0.0
    %2295 = vmatpush1.xpose.msra.mxu0 0.0
    %2296 = vmatprep.subr.mxu0 0.0
    %2297 = vmatpush1.xpose.msra.mxu0 0.0
    %2298 = vmatprep.subr.mxu0 0.0
    %2299 = vmatpush1.xpose.msra.mxu0 0.0
    %2300 = vmatprep.subr.mxu0 0.0
    %2301 = vmatpush1.xpose.msra.mxu0 0.0
    %2302 = vmatprep.subr.mxu0 0.0
    %2303 = vmatpush1.xpose.msra.mxu0 0.0
    %2304 = vmatprep.subr.mxu0 0.0
    %2305 = vmatpush1.xpose.msra.mxu0 0.0
    %2306 = vmatprep.subr.mxu0 0.0
    %2307 = vmatpush1.xpose.msra.mxu0 0.0
    %2308 = vmatprep.subr.mxu0 0.0
    %2309 = vmatpush1.xpose.msra.mxu0 0.0
    %2310 = vmatprep.subr.mxu0 0.0
    %2311 = vmatpush1.xpose.msra.mxu0 0.0
    %2312 = vmatprep.subr.mxu0 0.0
    %2313 = vmatpush1.xpose.msra.mxu0 0.0
    %2314 = vmatprep.subr.mxu0 0.0
    %2315 = vmatpush1.xpose.msra.mxu0 0.0
    %2316 = vmatprep.subr.mxu0 0.0
    %2317 = vmatpush1.xpose.msra.mxu0 0.0
    %2318 = vmatprep.subr.mxu0 0.0
    %2319 = vmatpush1.xpose.msra.mxu0 0.0
    %2320 = vmatprep.subr.mxu0 0.0
    %2321 = vmatpush1.xpose.msra.mxu0 0.0
    %2322 = vmatprep.subr.mxu0 0.0
    %2323 = vmatpush1.xpose.msra.mxu0 0.0
    %2324 = vmatprep.subr.mxu0 0.0
    %2325 = vmatpush1.xpose.msra.mxu0 0.0
    %2326 = vmatprep.subr.mxu0 0.0
    %2327 = vmatpush1.xpose.msra.mxu0 0.0
    %2328 = vmatprep.mubr.f32.mxu0 0.0
    %2329 = vmatmul.mubr.f32.gmra.mrb[0].mxu0 %v2260
    %v2330 = vpop.f32.mrb[0].mxu0
    %v2331 = vadd.f32 0.0, %v2330
    %v2332 = vpop.f32.mrb[0].mxu0
    %2333 = vdwg.mxu0
    %v2334 = vsel %vm137, %v2331, -inf
    %2335 = vmax.xlane.f32.xlu0 %v2334
    %v2336 = vpop.xlane.xlu0 %2335
    %v2337 = vsub.f32 %v2331, %v2336
    %v2338 = vmul.f32 %v2337, 1.442695
    %v2339 = vpow.pop %v2338
    %v2340 = vsel %vm137, %v2339, 0.0
    %2341 = vadd.xlane.f32.xlu0 %v2340
    %v2342 = vpop.xlane.xlu0 %2341
    %v2343 = vrcp.pop %v2342
    %v2344 = vmul.f32 %v2339, %v2343
    %2345 = vrot.lane.b32.xlu0 %v1919, 48
    %v2346 = vpop.permute.xlu0 %2345
    %v2349 = vsel %vm137, %v2344, 0
    %2351 = vmatprep.subr.mxu0 0.0
    %2352 = vmatpush1.msra.mxu0 %v2346
    %2353 = vmatprep.subr.mxu0 0.0
    %2354 = vmatpush1.msra.mxu0 0.0
    %2355 = vmatprep.subr.mxu0 0.0
    %2356 = vmatpush1.msra.mxu0 0.0
    %2357 = vmatprep.subr.mxu0 0.0
    %2358 = vmatpush1.msra.mxu0 0.0
    %2359 = vmatprep.subr.mxu0 0.0
    %2360 = vmatpush1.msra.mxu0 0.0
    %2361 = vmatprep.subr.mxu0 0.0
    %2362 = vmatpush1.msra.mxu0 0.0
    %2363 = vmatprep.subr.mxu0 0.0
    %2364 = vmatpush1.msra.mxu0 0.0
    %2365 = vmatprep.subr.mxu0 0.0
    %2366 = vmatpush1.msra.mxu0 0.0
    %2367 = vmatprep.subr.mxu0 0.0
    %2368 = vmatpush1.msra.mxu0 0.0
    %2369 = vmatprep.subr.mxu0 0.0
    %2370 = vmatpush1.msra.mxu0 0.0
    %2371 = vmatprep.subr.mxu0 0.0
    %2372 = vmatpush1.msra.mxu0 0.0
    %2373 = vmatprep.subr.mxu0 0.0
    %2374 = vmatpush1.msra.mxu0 0.0
    %2375 = vmatprep.subr.mxu0 0.0
    %2376 = vmatpush1.msra.mxu0 0.0
    %2377 = vmatprep.subr.mxu0 0.0
    %2378 = vmatpush1.msra.mxu0 0.0
    %2379 = vmatprep.subr.mxu0 0.0
    %2380 = vmatpush1.msra.mxu0 0.0
    %2381 = vmatprep.subr.mxu0 0.0
    %2382 = vmatpush1.msra.mxu0 0.0
    %2383 = vmatprep.subr.mxu0 0.0
    %2384 = vmatpush1.msra.mxu0 0.0
    %2385 = vmatprep.subr.mxu0 0.0
    %2386 = vmatpush1.msra.mxu0 0.0
    %2387 = vmatprep.subr.mxu0 0.0
    %2388 = vmatpush1.msra.mxu0 0.0
    %2389 = vmatprep.subr.mxu0 0.0
    %2390 = vmatpush1.msra.mxu0 0.0
    %2391 = vmatprep.subr.mxu0 0.0
    %2392 = vmatpush1.msra.mxu0 0.0
    %2393 = vmatprep.subr.mxu0 0.0
    %2394 = vmatpush1.msra.mxu0 0.0
    %2395 = vmatprep.subr.mxu0 0.0
    %2396 = vmatpush1.msra.mxu0 0.0
    %2397 = vmatprep.subr.mxu0 0.0
    %2398 = vmatpush1.msra.mxu0 0.0
    %2399 = vmatprep.subr.mxu0 0.0
    %2400 = vmatpush1.msra.mxu0 0.0
    %2401 = vmatprep.subr.mxu0 0.0
    %2402 = vmatpush1.msra.mxu0 0.0
    %2403 = vmatprep.subr.mxu0 0.0
    %2404 = vmatpush1.msra.mxu0 0.0
    %2405 = vmatprep.subr.mxu0 0.0
    %2406 = vmatpush1.msra.mxu0 0.0
    %2407 = vmatprep.subr.mxu0 0.0
    %2408 = vmatpush1.msra.mxu0 0.0
    %2409 = vmatprep.subr.mxu0 0.0
    %2410 = vmatpush1.msra.mxu0 0.0
    %2411 = vmatprep.subr.mxu0 0.0
    %2412 = vmatpush1.msra.mxu0 0.0
    %2413 = vmatprep.subr.mxu0 0.0
    %2414 = vmatpush1.msra.mxu0 0.0
    %2415 = vmatprep.mubr.f32.mxu0 0.0
    %2416 = vmatmul.mubr.f32.gmra.mrb[0].mxu0 %v2349
    %v2417 = vpop.f32.mrb[0].mxu0
    %v2418 = vadd.f32 0.0, %v2417
    %v2419 = vpop.f32.mrb[0].mxu0
    %2420 = vdwg.mxu0
    %2421 = vrot.lane.b32.xlu0 %v1919, 104
    %v2422 = vpop.permute.xlu0 %2421
    %2423 = vrot.lane.b32.xlu0 %v1919, 72
    %v2424 = vpop.permute.xlu0 %2423
    %v2425 = vsel %vm137, %v2422, 0
    %v2427 = vsel %vm137, %v2424, 0
    %2429 = vmatprep.subr.mxu0 0.0
    %2430 = vmatpush1.xpose.msra.mxu0 %v2427
    %2431 = vmatprep.subr.mxu0 0.0
    %2432 = vmatpush1.xpose.msra.mxu0 0.0
    %2433 = vmatprep.subr.mxu0 0.0
    %2434 = vmatpush1.xpose.msra.mxu0 0.0
    %2435 = vmatprep.subr.mxu0 0.0
    %2436 = vmatpush1.xpose.msra.mxu0 0.0
    %2437 = vmatprep.subr.mxu0 0.0
    %2438 = vmatpush1.xpose.msra.mxu0 0.0
    %2439 = vmatprep.subr.mxu0 0.0
    %2440 = vmatpush1.xpose.msra.mxu0 0.0
    %2441 = vmatprep.subr.mxu0 0.0
    %2442 = vmatpush1.xpose.msra.mxu0 0.0
    %2443 = vmatprep.subr.mxu0 0.0
    %2444 = vmatpush1.xpose.msra.mxu0 0.0
    %2445 = vmatprep.subr.mxu0 0.0
    %2446 = vmatpush1.xpose.msra.mxu0 0.0
    %2447 = vmatprep.subr.mxu0 0.0
    %2448 = vmatpush1.xpose.msra.mxu0 0.0
    %2449 = vmatprep.subr.mxu0 0.0
    %2450 = vmatpush1.xpose.msra.mxu0 0.0
    %2451 = vmatprep.subr.mxu0 0.0
    %2452 = vmatpush1.xpose.msra.mxu0 0.0
    %2453 = vmatprep.subr.mxu0 0.0
    %2454 = vmatpush1.xpose.msra.mxu0 0.0
    %2455 = vmatprep.subr.mxu0 0.0
    %2456 = vmatpush1.xpose.msra.mxu0 0.0
    %2457 = vmatprep.subr.mxu0 0.0
    %2458 = vmatpush1.xpose.msra.mxu0 0.0
    %2459 = vmatprep.subr.mxu0 0.0
    %2460 = vmatpush1.xpose.msra.mxu0 0.0
    %2461 = vmatprep.subr.mxu0 0.0
    %2462 = vmatpush1.xpose.msra.mxu0 0.0
    %2463 = vmatprep.subr.mxu0 0.0
    %2464 = vmatpush1.xpose.msra.mxu0 0.0
    %2465 = vmatprep.subr.mxu0 0.0
    %2466 = vmatpush1.xpose.msra.mxu0 0.0
    %2467 = vmatprep.subr.mxu0 0.0
    %2468 = vmatpush1.xpose.msra.mxu0 0.0
    %2469 = vmatprep.subr.mxu0 0.0
    %2470 = vmatpush1.xpose.msra.mxu0 0.0
    %2471 = vmatprep.subr.mxu0 0.0
    %2472 = vmatpush1.xpose.msra.mxu0 0.0
    %2473 = vmatprep.subr.mxu0 0.0
    %2474 = vmatpush1.xpose.msra.mxu0 0.0
    %2475 = vmatprep.subr.mxu0 0.0
    %2476 = vmatpush1.xpose.msra.mxu0 0.0
    %2477 = vmatprep.subr.mxu0 0.0
    %2478 = vmatpush1.xpose.msra.mxu0 0.0
    %2479 = vmatprep.subr.mxu0 0.0
    %2480 = vmatpush1.xpose.msra.mxu0 0.0
    %2481 = vmatprep.subr.mxu0 0.0
    %2482 = vmatpush1.xpose.msra.mxu0 0.0
    %2483 = vmatprep.subr.mxu0 0.0
    %2484 = vmatpush1.xpose.msra.mxu0 0.0
    %2485 = vmatprep.subr.mxu0 0.0
    %2486 = vmatpush1.xpose.msra.mxu0 0.0
    %2487 = vmatprep.subr.mxu0 0.0
    %2488 = vmatpush1.xpose.msra.mxu0 0.0
    %2489 = vmatprep.subr.mxu0 0.0
    %2490 = vmatpush1.xpose.msra.mxu0 0.0
    %2491 = vmatprep.subr.mxu0 0.0
    %2492 = vmatpush1.xpose.msra.mxu0 0.0
    %2493 = vmatprep.mubr.f32.mxu0 0.0
    %2494 = vmatmul.mubr.f32.gmra.mrb[0].mxu0 %v2425
    %v2495 = vpop.f32.mrb[0].mxu0
    %v2496 = vadd.f32 0.0, %v2495
    %v2497 = vpop.f32.mrb[0].mxu0
    %2498 = vdwg.mxu0
    %v2499 = vsel %vm137, %v2496, -inf
    %2500 = vmax.xlane.f32.xlu0 %v2499
    %v2501 = vpop.xlane.xlu0 %2500
    %v2502 = vsub.f32 %v2496, %v2501
    %v2503 = vmul.f32 %v2502, 1.442695
    %v2504 = vpow.pop %v2503
    %v2505 = vsel %vm137, %v2504, 0.0
    %2506 = vadd.xlane.f32.xlu0 %v2505
    %v2507 = vpop.xlane.xlu0 %2506
    %v2508 = vrcp.pop %v2507
    %v2509 = vmul.f32 %v2504, %v2508
    %2510 = vrot.lane.b32.xlu0 %v1919, 40
    %v2511 = vpop.permute.xlu0 %2510
    %v2514 = vsel %vm137, %v2509, 0
    %2516 = vmatprep.subr.mxu0 0.0
    %2517 = vmatpush1.msra.mxu0 %v2511
    %2518 = vmatprep.subr.mxu0 0.0
    %2519 = vmatpush1.msra.mxu0 0.0
    %2520 = vmatprep.subr.mxu0 0.0
    %2521 = vmatpush1.msra.mxu0 0.0
    %2522 = vmatprep.subr.mxu0 0.0
    %2523 = vmatpush1.msra.mxu0 0.0
    %2524 = vmatprep.subr.mxu0 0.0
    %2525 = vmatpush1.msra.mxu0 0.0
    %2526 = vmatprep.subr.mxu0 0.0
    %2527 = vmatpush1.msra.mxu0 0.0
    %2528 = vmatprep.subr.mxu0 0.0
    %2529 = vmatpush1.msra.mxu0 0.0
    %2530 = vmatprep.subr.mxu0 0.0
    %2531 = vmatpush1.msra.mxu0 0.0
    %2532 = vmatprep.subr.mxu0 0.0
    %2533 = vmatpush1.msra.mxu0 0.0
    %2534 = vmatprep.subr.mxu0 0.0
    %2535 = vmatpush1.msra.mxu0 0.0
    %2536 = vmatprep.subr.mxu0 0.0
    %2537 = vmatpush1.msra.mxu0 0.0
    %2538 = vmatprep.subr.mxu0 0.0
    %2539 = vmatpush1.msra.mxu0 0.0
    %2540 = vmatprep.subr.mxu0 0.0
    %2541 = vmatpush1.msra.mxu0 0.0
    %2542 = vmatprep.subr.mxu0 0.0
    %2543 = vmatpush1.msra.mxu0 0.0
    %2544 = vmatprep.subr.mxu0 0.0
    %2545 = vmatpush1.msra.mxu0 0.0
    %2546 = vmatprep.subr.mxu0 0.0
    %2547 = vmatpush1.msra.mxu0 0.0
    %2548 = vmatprep.subr.mxu0 0.0
    %2549 = vmatpush1.msra.mxu0 0.0
    %2550 = vmatprep.subr.mxu0 0.0
    %2551 = vmatpush1.msra.mxu0 0.0
    %2552 = vmatprep.subr.mxu0 0.0
    %2553 = vmatpush1.msra.mxu0 0.0
    %2554 = vmatprep.subr.mxu0 0.0
    %2555 = vmatpush1.msra.mxu0 0.0
    %2556 = vmatprep.subr.mxu0 0.0
    %2557 = vmatpush1.msra.mxu0 0.0
    %2558 = vmatprep.subr.mxu0 0.0
    %2559 = vmatpush1.msra.mxu0 0.0
    %2560 = vmatprep.subr.mxu0 0.0
    %2561 = vmatpush1.msra.mxu0 0.0
    %2562 = vmatprep.subr.mxu0 0.0
    %2563 = vmatpush1.msra.mxu0 0.0
    %2564 = vmatprep.subr.mxu0 0.0
    %2565 = vmatpush1.msra.mxu0 0.0
    %2566 = vmatprep.subr.mxu0 0.0
    %2567 = vmatpush1.msra.mxu0 0.0
    %2568 = vmatprep.subr.mxu0 0.0
    %2569 = vmatpush1.msra.mxu0 0.0
    %2570 = vmatprep.subr.mxu0 0.0
    %2571 = vmatpush1.msra.mxu0 0.0
    %2572 = vmatprep.subr.mxu0 0.0
    %2573 = vmatpush1.msra.mxu0 0.0
    %2574 = vmatprep.subr.mxu0 0.0
    %2575 = vmatpush1.msra.mxu0 0.0
    %2576 = vmatprep.subr.mxu0 0.0
    %2577 = vmatpush1.msra.mxu0 0.0
    %2578 = vmatprep.subr.mxu0 0.0
    %2579 = vmatpush1.msra.mxu0 0.0
    %2580 = vmatprep.mubr.f32.mxu0 0.0
    %2581 = vmatmul.mubr.f32.gmra.mrb[0].mxu0 %v2514
    %v2582 = vpop.f32.mrb[0].mxu0
    %v2583 = vadd.f32 0.0, %v2582
    %v2584 = vpop.f32.mrb[0].mxu0
    %2585 = vdwg.mxu0
    %2587 = vrot.lane.b32.xlu0 %v2253, 8
    %v2588 = vpop.permute.xlu0 %2587
    %2591 = vrot.lane.b32.xlu0 %v2418, 16
    %v2592 = vpop.permute.xlu0 %2591
    %2595 = vrot.lane.b32.xlu0 %v2583, 24
    %v2596 = vpop.permute.xlu0 %2595
    %v2598 = vsel %vm137, %v2088, %v2588
    %v2599 = vsel %vm807, %v2598, %v2592
    %v2600 = vsel %vm809, %v2599, %v2596
    %2602 = vrot.lane.b32.xlu0 %v1924, 96
    %v2603 = vpop.permute.xlu0 %2602
    %v2604 = vsel %vm137, %v1924, 0
    %v2606 = vsel %vm137, %v2603, 0
    %2608 = vmatprep.subr.mxu0 0.0
    %2609 = vmatpush1.xpose.msra.mxu0 %v2606
    %2610 = vmatprep.subr.mxu0 0.0
    %2611 = vmatpush1.xpose.msra.mxu0 0.0
    %2612 = vmatprep.subr.mxu0 0.0
    %2613 = vmatpush1.xpose.msra.mxu0 0.0
    %2614 = vmatprep.subr.mxu0 0.0
    %2615 = vmatpush1.xpose.msra.mxu0 0.0
    %2616 = vmatprep.subr.mxu0 0.0
    %2617 = vmatpush1.xpose.msra.mxu0 0.0
    %2618 = vmatprep.subr.mxu0 0.0
    %2619 = vmatpush1.xpose.msra.mxu0 0.0
    %2620 = vmatprep.subr.mxu0 0.0
    %2621 = vmatpush1.xpose.msra.mxu0 0.0
    %2622 = vmatprep.subr.mxu0 0.0
    %2623 = vmatpush1.xpose.msra.mxu0 0.0
    %2624 = vmatprep.subr.mxu0 0.0
    %2625 = vmatpush1.xpose.msra.mxu0 0.0
    %2626 = vmatprep.subr.mxu0 0.0
    %2627 = vmatpush1.xpose.msra.mxu0 0.0
    %2628 = vmatprep.subr.mxu0 0.0
    %2629 = vmatpush1.xpose.msra.mxu0 0.0
    %2630 = vmatprep.subr.mxu0 0.0
    %2631 = vmatpush1.xpose.msra.mxu0 0.0
    %2632 = vmatprep.subr.mxu0 0.0
    %2633 = vmatpush1.xpose.msra.mxu0 0.0
    %2634 = vmatprep.subr.mxu0 0.0
    %2635 = vmatpush1.xpose.msra.mxu0 0.0
    %2636 = vmatprep.subr.mxu0 0.0
    %2637 = vmatpush1.xpose.msra.mxu0 0.0
    %2638 = vmatprep.subr.mxu0 0.0
    %2639 = vmatpush1.xpose.msra.mxu0 0.0
    %2640 = vmatprep.subr.mxu0 0.0
    %2641 = vmatpush1.xpose.msra.mxu0 0.0
    %2642 = vmatprep.subr.mxu0 0.0
    %2643 = vmatpush1.xpose.msra.mxu0 0.0
    %2644 = vmatprep.subr.mxu0 0.0
    %2645 = vmatpush1.xpose.msra.mxu0 0.0
    %2646 = vmatprep.subr.mxu0 0.0
    %2647 = vmatpush1.xpose.msra.mxu0 0.0
    %2648 = vmatprep.subr.mxu0 0.0
    %2649 = vmatpush1.xpose.msra.mxu0 0.0
    %2650 = vmatprep.subr.mxu0 0.0
    %2651 = vmatpush1.xpose.msra.mxu0 0.0
    %2652 = vmatprep.subr.mxu0 0.0
    %2653 = vmatpush1.xpose.msra.mxu0 0.0
    %2654 = vmatprep.subr.mxu0 0.0
    %2655 = vmatpush1.xpose.msra.mxu0 0.0
    %2656 = vmatprep.subr.mxu0 0.0
    %2657 = vmatpush1.xpose.msra.mxu0 0.0
    %2658 = vmatprep.subr.mxu0 0.0
    %2659 = vmatpush1.xpose.msra.mxu0 0.0
    %2660 = vmatprep.subr.mxu0 0.0
    %2661 = vmatpush1.xpose.msra.mxu0 0.0
    %2662 = vmatprep.subr.mxu0 0.0
    %2663 = vmatpush1.xpose.msra.mxu0 0.0
    %2664 = vmatprep.subr.mxu0 0.0
    %2665 = vmatpush1.xpose.msra.mxu0 0.0
    %2666 = vmatprep.subr.mxu0 0.0
    %2667 = vmatpush1.xpose.msra.mxu0 0.0
    %2668 = vmatprep.subr.mxu0 0.0
    %2669 = vmatpush1.xpose.msra.mxu0 0.0
    %2670 = vmatprep.subr.mxu0 0.0
    %2671 = vmatpush1.xpose.msra.mxu0 0.0
    %2672 = vmatprep.mubr.f32.mxu0 0.0
    %2673 = vmatmul.mubr.f32.gmra.mrb[0].mxu0 %v2604
    %v2674 = vpop.f32.mrb[0].mxu0
    %v2675 = vadd.f32 0.0, %v2674
    %v2676 = vpop.f32.mrb[0].mxu0
    %2677 = vdwg.mxu0
    %v2678 = vsel %vm137, %v2675, -inf
    %2679 = vmax.xlane.f32.xlu0 %v2678
    %v2680 = vpop.xlane.xlu0 %2679
    %v2681 = vsub.f32 %v2675, %v2680
    %v2682 = vmul.f32 %v2681, 1.442695
    %v2683 = vpow.pop %v2682
    %v2684 = vsel %vm137, %v2683, 0.0
    %2685 = vadd.xlane.f32.xlu0 %v2684
    %v2686 = vpop.xlane.xlu0 %2685
    %v2687 = vrcp.pop %v2686
    %v2688 = vmul.f32 %v2683, %v2687
    %2689 = vrot.lane.b32.xlu0 %v1924, 64
    %v2690 = vpop.permute.xlu0 %2689
    %v2693 = vsel %vm137, %v2688, 0
    %2695 = vmatprep.subr.mxu0 0.0
    %2696 = vmatpush1.msra.mxu0 %v2690
    %2697 = vmatprep.subr.mxu0 0.0
    %2698 = vmatpush1.msra.mxu0 0.0
    %2699 = vmatprep.subr.mxu0 0.0
    %2700 = vmatpush1.msra.mxu0 0.0
    %2701 = vmatprep.subr.mxu0 0.0
    %2702 = vmatpush1.msra.mxu0 0.0
    %2703 = vmatprep.subr.mxu0 0.0
    %2704 = vmatpush1.msra.mxu0 0.0
    %2705 = vmatprep.subr.mxu0 0.0
    %2706 = vmatpush1.msra.mxu0 0.0
    %2707 = vmatprep.subr.mxu0 0.0
    %2708 = vmatpush1.msra.mxu0 0.0
    %2709 = vmatprep.subr.mxu0 0.0
    %2710 = vmatpush1.msra.mxu0 0.0
    %2711 = vmatprep.subr.mxu0 0.0
    %2712 = vmatpush1.msra.mxu0 0.0
    %2713 = vmatprep.subr.mxu0 0.0
    %2714 = vmatpush1.msra.mxu0 0.0
    %2715 = vmatprep.subr.mxu0 0.0
    %2716 = vmatpush1.msra.mxu0 0.0
    %2717 = vmatprep.subr.mxu0 0.0
    %2718 = vmatpush1.msra.mxu0 0.0
    %2719 = vmatprep.subr.mxu0 0.0
    %2720 = vmatpush1.msra.mxu0 0.0
    %2721 = vmatprep.subr.mxu0 0.0
    %2722 = vmatpush1.msra.mxu0 0.0
    %2723 = vmatprep.subr.mxu0 0.0
    %2724 = vmatpush1.msra.mxu0 0.0
    %2725 = vmatprep.subr.mxu0 0.0
    %2726 = vmatpush1.msra.mxu0 0.0
    %2727 = vmatprep.subr.mxu0 0.0
    %2728 = vmatpush1.msra.mxu0 0.0
    %2729 = vmatprep.subr.mxu0 0.0
    %2730 = vmatpush1.msra.mxu0 0.0
    %2731 = vmatprep.subr.mxu0 0.0
    %2732 = vmatpush1.msra.mxu0 0.0
    %2733 = vmatprep.subr.mxu0 0.0
    %2734 = vmatpush1.msra.mxu0 0.0
    %2735 = vmatprep.subr.mxu0 0.0
    %2736 = vmatpush1.msra.mxu0 0.0
    %2737 = vmatprep.subr.mxu0 0.0
    %2738 = vmatpush1.msra.mxu0 0.0
    %2739 = vmatprep.subr.mxu0 0.0
    %2740 = vmatpush1.msra.mxu0 0.0
    %2741 = vmatprep.subr.mxu0 0.0
    %2742 = vmatpush1.msra.mxu0 0.0
    %2743 = vmatprep.subr.mxu0 0.0
    %2744 = vmatpush1.msra.mxu0 0.0
    %2745 = vmatprep.subr.mxu0 0.0
    %2746 = vmatpush1.msra.mxu0 0.0
    %2747 = vmatprep.subr.mxu0 0.0
    %2748 = vmatpush1.msra.mxu0 0.0
    %2749 = vmatprep.subr.mxu0 0.0
    %2750 = vmatpush1.msra.mxu0 0.0
    %2751 = vmatprep.subr.mxu0 0.0
    %2752 = vmatpush1.msra.mxu0 0.0
    %2753 = vmatprep.subr.mxu0 0.0
    %2754 = vmatpush1.msra.mxu0 0.0
    %2755 = vmatprep.subr.mxu0 0.0
    %2756 = vmatpush1.msra.mxu0 0.0
    %2757 = vmatprep.subr.mxu0 0.0
    %2758 = vmatpush1.msra.mxu0 0.0
    %2759 = vmatprep.mubr.f32.mxu0 0.0
    %2760 = vmatmul.mubr.f32.gmra.mrb[0].mxu0 %v2693
    %v2761 = vpop.f32.mrb[0].mxu0
    %v2762 = vadd.f32 0.0, %v2761
    %v2763 = vpop.f32.mrb[0].mxu0
    %2764 = vdwg.mxu0
    %2765 = vrot.lane.b32.xlu0 %v1924, 120
    %v2766 = vpop.permute.xlu0 %2765
    %2767 = vrot.lane.b32.xlu0 %v1924, 88
    %v2768 = vpop.permute.xlu0 %2767
    %v2769 = vsel %vm137, %v2766, 0
    %v2771 = vsel %vm137, %v2768, 0
    %2773 = vmatprep.subr.mxu0 0.0
    %2774 = vmatpush1.xpose.msra.mxu0 %v2771
    %2775 = vmatprep.subr.mxu0 0.0
    %2776 = vmatpush1.xpose.msra.mxu0 0.0
    %2777 = vmatprep.subr.mxu0 0.0
    %2778 = vmatpush1.xpose.msra.mxu0 0.0
    %2779 = vmatprep.subr.mxu0 0.0
    %2780 = vmatpush1.xpose.msra.mxu0 0.0
    %2781 = vmatprep.subr.mxu0 0.0
    %2782 = vmatpush1.xpose.msra.mxu0 0.0
    %2783 = vmatprep.subr.mxu0 0.0
    %2784 = vmatpush1.xpose.msra.mxu0 0.0
    %2785 = vmatprep.subr.mxu0 0.0
    %2786 = vmatpush1.xpose.msra.mxu0 0.0
    %2787 = vmatprep.subr.mxu0 0.0
    %2788 = vmatpush1.xpose.msra.mxu0 0.0
    %2789 = vmatprep.subr.mxu0 0.0
    %2790 = vmatpush1.xpose.msra.mxu0 0.0
    %2791 = vmatprep.subr.mxu0 0.0
    %2792 = vmatpush1.xpose.msra.mxu0 0.0
    %2793 = vmatprep.subr.mxu0 0.0
    %2794 = vmatpush1.xpose.msra.mxu0 0.0
    %2795 = vmatprep.subr.mxu0 0.0
    %2796 = vmatpush1.xpose.msra.mxu0 0.0
    %2797 = vmatprep.subr.mxu0 0.0
    %2798 = vmatpush1.xpose.msra.mxu0 0.0
    %2799 = vmatprep.subr.mxu0 0.0
    %2800 = vmatpush1.xpose.msra.mxu0 0.0
    %2801 = vmatprep.subr.mxu0 0.0
    %2802 = vmatpush1.xpose.msra.mxu0 0.0
    %2803 = vmatprep.subr.mxu0 0.0
    %2804 = vmatpush1.xpose.msra.mxu0 0.0
    %2805 = vmatprep.subr.mxu0 0.0
    %2806 = vmatpush1.xpose.msra.mxu0 0.0
    %2807 = vmatprep.subr.mxu0 0.0
    %2808 = vmatpush1.xpose.msra.mxu0 0.0
    %2809 = vmatprep.subr.mxu0 0.0
    %2810 = vmatpush1.xpose.msra.mxu0 0.0
    %2811 = vmatprep.subr.mxu0 0.0
    %2812 = vmatpush1.xpose.msra.mxu0 0.0
    %2813 = vmatprep.subr.mxu0 0.0
    %2814 = vmatpush1.xpose.msra.mxu0 0.0
    %2815 = vmatprep.subr.mxu0 0.0
    %2816 = vmatpush1.xpose.msra.mxu0 0.0
    %2817 = vmatprep.subr.mxu0 0.0
    %2818 = vmatpush1.xpose.msra.mxu0 0.0
    %2819 = vmatprep.subr.mxu0 0.0
    %2820 = vmatpush1.xpose.msra.mxu0 0.0
    %2821 = vmatprep.subr.mxu0 0.0
    %2822 = vmatpush1.xpose.msra.mxu0 0.0
    %2823 = vmatprep.subr.mxu0 0.0
    %2824 = vmatpush1.xpose.msra.mxu0 0.0
    %2825 = vmatprep.subr.mxu0 0.0
    %2826 = vmatpush1.xpose.msra.mxu0 0.0
    %2827 = vmatprep.subr.mxu0 0.0
    %2828 = vmatpush1.xpose.msra.mxu0 0.0
    %2829 = vmatprep.subr.mxu0 0.0
    %2830 = vmatpush1.xpose.msra.mxu0 0.0
    %2831 = vmatprep.subr.mxu0 0.0
    %2832 = vmatpush1.xpose.msra.mxu0 0.0
    %2833 = vmatprep.subr.mxu0 0.0
    %2834 = vmatpush1.xpose.msra.mxu0 0.0
    %2835 = vmatprep.subr.mxu0 0.0
    %2836 = vmatpush1.xpose.msra.mxu0 0.0
    %2837 = vmatprep.mubr.f32.mxu0 0.0
    %2838 = vmatmul.mubr.f32.gmra.mrb[0].mxu0 %v2769
    %v2839 = vpop.f32.mrb[0].mxu0
    %v2840 = vadd.f32 0.0, %v2839
    %v2841 = vpop.f32.mrb[0].mxu0
    %2842 = vdwg.mxu0
    %v2843 = vsel %vm137, %v2840, -inf
    %2844 = vmax.xlane.f32.xlu0 %v2843
    %v2845 = vpop.xlane.xlu0 %2844
    %v2846 = vsub.f32 %v2840, %v2845
    %v2847 = vmul.f32 %v2846, 1.442695
    %v2848 = vpow.pop %v2847
    %v2849 = vsel %vm137, %v2848, 0.0
    %2850 = vadd.xlane.f32.xlu0 %v2849
    %v2851 = vpop.xlane.xlu0 %2850
    %v2852 = vrcp.pop %v2851
    %v2853 = vmul.f32 %v2848, %v2852
    %2854 = vrot.lane.b32.xlu0 %v1924, 56
    %v2855 = vpop.permute.xlu0 %2854
    %v2858 = vsel %vm137, %v2853, 0
    %2860 = vmatprep.subr.mxu0 0.0
    %2861 = vmatpush1.msra.mxu0 %v2855
    %2862 = vmatprep.subr.mxu0 0.0
    %2863 = vmatpush1.msra.mxu0 0.0
    %2864 = vmatprep.subr.mxu0 0.0
    %2865 = vmatpush1.msra.mxu0 0.0
    %2866 = vmatprep.subr.mxu0 0.0
    %2867 = vmatpush1.msra.mxu0 0.0
    %2868 = vmatprep.subr.mxu0 0.0
    %2869 = vmatpush1.msra.mxu0 0.0
    %2870 = vmatprep.subr.mxu0 0.0
    %2871 = vmatpush1.msra.mxu0 0.0
    %2872 = vmatprep.subr.mxu0 0.0
    %2873 = vmatpush1.msra.mxu0 0.0
    %2874 = vmatprep.subr.mxu0 0.0
    %2875 = vmatpush1.msra.mxu0 0.0
    %2876 = vmatprep.subr.mxu0 0.0
    %2877 = vmatpush1.msra.mxu0 0.0
    %2878 = vmatprep.subr.mxu0 0.0
    %2879 = vmatpush1.msra.mxu0 0.0
    %2880 = vmatprep.subr.mxu0 0.0
    %2881 = vmatpush1.msra.mxu0 0.0
    %2882 = vmatprep.subr.mxu0 0.0
    %2883 = vmatpush1.msra.mxu0 0.0
    %2884 = vmatprep.subr.mxu0 0.0
    %2885 = vmatpush1.msra.mxu0 0.0
    %2886 = vmatprep.subr.mxu0 0.0
    %2887 = vmatpush1.msra.mxu0 0.0
    %2888 = vmatprep.subr.mxu0 0.0
    %2889 = vmatpush1.msra.mxu0 0.0
    %2890 = vmatprep.subr.mxu0 0.0
    %2891 = vmatpush1.msra.mxu0 0.0
    %2892 = vmatprep.subr.mxu0 0.0
    %2893 = vmatpush1.msra.mxu0 0.0
    %2894 = vmatprep.subr.mxu0 0.0
    %2895 = vmatpush1.msra.mxu0 0.0
    %2896 = vmatprep.subr.mxu0 0.0
    %2897 = vmatpush1.msra.mxu0 0.0
    %2898 = vmatprep.subr.mxu0 0.0
    %2899 = vmatpush1.msra.mxu0 0.0
    %2900 = vmatprep.subr.mxu0 0.0
    %2901 = vmatpush1.msra.mxu0 0.0
    %2902 = vmatprep.subr.mxu0 0.0
    %2903 = vmatpush1.msra.mxu0 0.0
    %2904 = vmatprep.subr.mxu0 0.0
    %2905 = vmatpush1.msra.mxu0 0.0
    %2906 = vmatprep.subr.mxu0 0.0
    %2907 = vmatpush1.msra.mxu0 0.0
    %2908 = vmatprep.subr.mxu0 0.0
    %2909 = vmatpush1.msra.mxu0 0.0
    %2910 = vmatprep.subr.mxu0 0.0
    %2911 = vmatpush1.msra.mxu0 0.0
    %2912 = vmatprep.subr.mxu0 0.0
    %2913 = vmatpush1.msra.mxu0 0.0
    %2914 = vmatprep.subr.mxu0 0.0
    %2915 = vmatpush1.msra.mxu0 0.0
    %2916 = vmatprep.subr.mxu0 0.0
    %2917 = vmatpush1.msra.mxu0 0.0
    %2918 = vmatprep.subr.mxu0 0.0
    %2919 = vmatpush1.msra.mxu0 0.0
    %2920 = vmatprep.subr.mxu0 0.0
    %2921 = vmatpush1.msra.mxu0 0.0
    %2922 = vmatprep.subr.mxu0 0.0
    %2923 = vmatpush1.msra.mxu0 0.0
    %2924 = vmatprep.mubr.f32.mxu0 0.0
    %2925 = vmatmul.mubr.f32.gmra.mrb[0].mxu0 %v2858
    %v2926 = vpop.f32.mrb[0].mxu0
    %v2927 = vadd.f32 0.0, %v2926
    %v2928 = vpop.f32.mrb[0].mxu0
    %2929 = vdwg.mxu0
    %2930 = vrot.lane.b32.xlu0 %v1924, 112
    %v2931 = vpop.permute.xlu0 %2930
    %2932 = vrot.lane.b32.xlu0 %v1924, 80
    %v2933 = vpop.permute.xlu0 %2932
    %v2934 = vsel %vm137, %v2931, 0
    %v2936 = vsel %vm137, %v2933, 0
    %2938 = vmatprep.subr.mxu0 0.0
    %2939 = vmatpush1.xpose.msra.mxu0 %v2936
    %2940 = vmatprep.subr.mxu0 0.0
    %2941 = vmatpush1.xpose.msra.mxu0 0.0
    %2942 = vmatprep.subr.mxu0 0.0
    %2943 = vmatpush1.xpose.msra.mxu0 0.0
    %2944 = vmatprep.subr.mxu0 0.0
    %2945 = vmatpush1.xpose.msra.mxu0 0.0
    %2946 = vmatprep.subr.mxu0 0.0
    %2947 = vmatpush1.xpose.msra.mxu0 0.0
    %2948 = vmatprep.subr.mxu0 0.0
    %2949 = vmatpush1.xpose.msra.mxu0 0.0
    %2950 = vmatprep.subr.mxu0 0.0
    %2951 = vmatpush1.xpose.msra.mxu0 0.0
    %2952 = vmatprep.subr.mxu0 0.0
    %2953 = vmatpush1.xpose.msra.mxu0 0.0
    %2954 = vmatprep.subr.mxu0 0.0
    %2955 = vmatpush1.xpose.msra.mxu0 0.0
    %2956 = vmatprep.subr.mxu0 0.0
    %2957 = vmatpush1.xpose.msra.mxu0 0.0
    %2958 = vmatprep.subr.mxu0 0.0
    %2959 = vmatpush1.xpose.msra.mxu0 0.0
    %2960 = vmatprep.subr.mxu0 0.0
    %2961 = vmatpush1.xpose.msra.mxu0 0.0
    %2962 = vmatprep.subr.mxu0 0.0
    %2963 = vmatpush1.xpose.msra.mxu0 0.0
    %2964 = vmatprep.subr.mxu0 0.0
    %2965 = vmatpush1.xpose.msra.mxu0 0.0
    %2966 = vmatprep.subr.mxu0 0.0
    %2967 = vmatpush1.xpose.msra.mxu0 0.0
    %2968 = vmatprep.subr.mxu0 0.0
    %2969 = vmatpush1.xpose.msra.mxu0 0.0
    %2970 = vmatprep.subr.mxu0 0.0
    %2971 = vmatpush1.xpose.msra.mxu0 0.0
    %2972 = vmatprep.subr.mxu0 0.0
    %2973 = vmatpush1.xpose.msra.mxu0 0.0
    %2974 = vmatprep.subr.mxu0 0.0
    %2975 = vmatpush1.xpose.msra.mxu0 0.0
    %2976 = vmatprep.subr.mxu0 0.0
    %2977 = vmatpush1.xpose.msra.mxu0 0.0
    %2978 = vmatprep.subr.mxu0 0.0
    %2979 = vmatpush1.xpose.msra.mxu0 0.0
    %2980 = vmatprep.subr.mxu0 0.0
    %2981 = vmatpush1.xpose.msra.mxu0 0.0
    %2982 = vmatprep.subr.mxu0 0.0
    %2983 = vmatpush1.xpose.msra.mxu0 0.0
    %2984 = vmatprep.subr.mxu0 0.0
    %2985 = vmatpush1.xpose.msra.mxu0 0.0
    %2986 = vmatprep.subr.mxu0 0.0
    %2987 = vmatpush1.xpose.msra.mxu0 0.0
    %2988 = vmatprep.subr.mxu0 0.0
    %2989 = vmatpush1.xpose.msra.mxu0 0.0
    %2990 = vmatprep.subr.mxu0 0.0
    %2991 = vmatpush1.xpose.msra.mxu0 0.0
    %2992 = vmatprep.subr.mxu0 0.0
    %2993 = vmatpush1.xpose.msra.mxu0 0.0
    %2994 = vmatprep.subr.mxu0 0.0
    %2995 = vmatpush1.xpose.msra.mxu0 0.0
    %2996 = vmatprep.subr.mxu0 0.0
    %2997 = vmatpush1.xpose.msra.mxu0 0.0
    %2998 = vmatprep.subr.mxu0 0.0
    %2999 = vmatpush1.xpose.msra.mxu0 0.0
    %3000 = vmatprep.subr.mxu0 0.0
    %3001 = vmatpush1.xpose.msra.mxu0 0.0
    %3002 = vmatprep.mubr.f32.mxu0 0.0
    %3003 = vmatmul.mubr.f32.gmra.mrb[0].mxu0 %v2934
    %v3004 = vpop.f32.mrb[0].mxu0
    %v3005 = vadd.f32 0.0, %v3004
    %v3006 = vpop.f32.mrb[0].mxu0
    %3007 = vdwg.mxu0
    %v3008 = vsel %vm137, %v3005, -inf
    %3009 = vmax.xlane.f32.xlu0 %v3008
    %v3010 = vpop.xlane.xlu0 %3009
    %v3011 = vsub.f32 %v3005, %v3010
    %v3012 = vmul.f32 %v3011, 1.442695
    %v3013 = vpow.pop %v3012
    %v3014 = vsel %vm137, %v3013, 0.0
    %3015 = vadd.xlane.f32.xlu0 %v3014
    %v3016 = vpop.xlane.xlu0 %3015
    %v3017 = vrcp.pop %v3016
    %v3018 = vmul.f32 %v3013, %v3017
    %3019 = vrot.lane.b32.xlu0 %v1924, 48
    %v3020 = vpop.permute.xlu0 %3019
    %v3023 = vsel %vm137, %v3018, 0
    %3025 = vmatprep.subr.mxu0 0.0
    %3026 = vmatpush1.msra.mxu0 %v3020
    %3027 = vmatprep.subr.mxu0 0.0
    %3028 = vmatpush1.msra.mxu0 0.0
    %3029 = vmatprep.subr.mxu0 0.0
    %3030 = vmatpush1.msra.mxu0 0.0
    %3031 = vmatprep.subr.mxu0 0.0
    %3032 = vmatpush1.msra.mxu0 0.0
    %3033 = vmatprep.subr.mxu0 0.0
    %3034 = vmatpush1.msra.mxu0 0.0
    %3035 = vmatprep.subr.mxu0 0.0
    %3036 = vmatpush1.msra.mxu0 0.0
    %3037 = vmatprep.subr.mxu0 0.0
    %3038 = vmatpush1.msra.mxu0 0.0
    %3039 = vmatprep.subr.mxu0 0.0
    %3040 = vmatpush1.msra.mxu0 0.0
    %3041 = vmatprep.subr.mxu0 0.0
    %3042 = vmatpush1.msra.mxu0 0.0
    %3043 = vmatprep.subr.mxu0 0.0
    %3044 = vmatpush1.msra.mxu0 0.0
    %3045 = vmatprep.subr.mxu0 0.0
    %3046 = vmatpush1.msra.mxu0 0.0
    %3047 = vmatprep.subr.mxu0 0.0
    %3048 = vmatpush1.msra.mxu0 0.0
    %3049 = vmatprep.subr.mxu0 0.0
    %3050 = vmatpush1.msra.mxu0 0.0
    %3051 = vmatprep.subr.mxu0 0.0
    %3052 = vmatpush1.msra.mxu0 0.0
    %3053 = vmatprep.subr.mxu0 0.0
    %3054 = vmatpush1.msra.mxu0 0.0
    %3055 = vmatprep.subr.mxu0 0.0
    %3056 = vmatpush1.msra.mxu0 0.0
    %3057 = vmatprep.subr.mxu0 0.0
    %3058 = vmatpush1.msra.mxu0 0.0
    %3059 = vmatprep.subr.mxu0 0.0
    %3060 = vmatpush1.msra.mxu0 0.0
    %3061 = vmatprep.subr.mxu0 0.0
    %3062 = vmatpush1.msra.mxu0 0.0
    %3063 = vmatprep.subr.mxu0 0.0
    %3064 = vmatpush1.msra.mxu0 0.0
    %3065 = vmatprep.subr.mxu0 0.0
    %3066 = vmatpush1.msra.mxu0 0.0
    %3067 = vmatprep.subr.mxu0 0.0
    %3068 = vmatpush1.msra.mxu0 0.0
    %3069 = vmatprep.subr.mxu0 0.0
    %3070 = vmatpush1.msra.mxu0 0.0
    %3071 = vmatprep.subr.mxu0 0.0
    %3072 = vmatpush1.msra.mxu0 0.0
    %3073 = vmatprep.subr.mxu0 0.0
    %3074 = vmatpush1.msra.mxu0 0.0
    %3075 = vmatprep.subr.mxu0 0.0
    %3076 = vmatpush1.msra.mxu0 0.0
    %3077 = vmatprep.subr.mxu0 0.0
    %3078 = vmatpush1.msra.mxu0 0.0
    %3079 = vmatprep.subr.mxu0 0.0
    %3080 = vmatpush1.msra.mxu0 0.0
    %3081 = vmatprep.subr.mxu0 0.0
    %3082 = vmatpush1.msra.mxu0 0.0
    %3083 = vmatprep.subr.mxu0 0.0
    %3084 = vmatpush1.msra.mxu0 0.0
    %3085 = vmatprep.subr.mxu0 0.0
    %3086 = vmatpush1.msra.mxu0 0.0
    %3087 = vmatprep.subr.mxu0 0.0
    %3088 = vmatpush1.msra.mxu0 0.0
    %3089 = vmatprep.mubr.f32.mxu0 0.0
    %3090 = vmatmul.mubr.f32.gmra.mrb[0].mxu0 %v3023
    %v3091 = vpop.f32.mrb[0].mxu0
    %v3092 = vadd.f32 0.0, %v3091
    %v3093 = vpop.f32.mrb[0].mxu0
    %3094 = vdwg.mxu0
    %3095 = vrot.lane.b32.xlu0 %v1924, 104
    %v3096 = vpop.permute.xlu0 %3095
    %3097 = vrot.lane.b32.xlu0 %v1924, 72
    %v3098 = vpop.permute.xlu0 %3097
    %v3099 = vsel %vm137, %v3096, 0
    %v3101 = vsel %vm137, %v3098, 0
    %3103 = vmatprep.subr.mxu0 0.0
    %3104 = vmatpush1.xpose.msra.mxu0 %v3101
    %3105 = vmatprep.subr.mxu0 0.0
    %3106 = vmatpush1.xpose.msra.mxu0 0.0
    %3107 = vmatprep.subr.mxu0 0.0
    %3108 = vmatpush1.xpose.msra.mxu0 0.0
    %3109 = vmatprep.subr.mxu0 0.0
    %3110 = vmatpush1.xpose.msra.mxu0 0.0
    %3111 = vmatprep.subr.mxu0 0.0
    %3112 = vmatpush1.xpose.msra.mxu0 0.0
    %3113 = vmatprep.subr.mxu0 0.0
    %3114 = vmatpush1.xpose.msra.mxu0 0.0
    %3115 = vmatprep.subr.mxu0 0.0
    %3116 = vmatpush1.xpose.msra.mxu0 0.0
    %3117 = vmatprep.subr.mxu0 0.0
    %3118 = vmatpush1.xpose.msra.mxu0 0.0
    %3119 = vmatprep.subr.mxu0 0.0
    %3120 = vmatpush1.xpose.msra.mxu0 0.0
    %3121 = vmatprep.subr.mxu0 0.0
    %3122 = vmatpush1.xpose.msra.mxu0 0.0
    %3123 = vmatprep.subr.mxu0 0.0
    %3124 = vmatpush1.xpose.msra.mxu0 0.0
    %3125 = vmatprep.subr.mxu0 0.0
    %3126 = vmatpush1.xpose.msra.mxu0 0.0
    %3127 = vmatprep.subr.mxu0 0.0
    %3128 = vmatpush1.xpose.msra.mxu0 0.0
    %3129 = vmatprep.subr.mxu0 0.0
    %3130 = vmatpush1.xpose.msra.mxu0 0.0
    %3131 = vmatprep.subr.mxu0 0.0
    %3132 = vmatpush1.xpose.msra.mxu0 0.0
    %3133 = vmatprep.subr.mxu0 0.0
    %3134 = vmatpush1.xpose.msra.mxu0 0.0
    %3135 = vmatprep.subr.mxu0 0.0
    %3136 = vmatpush1.xpose.msra.mxu0 0.0
    %3137 = vmatprep.subr.mxu0 0.0
    %3138 = vmatpush1.xpose.msra.mxu0 0.0
    %3139 = vmatprep.subr.mxu0 0.0
    %3140 = vmatpush1.xpose.msra.mxu0 0.0
    %3141 = vmatprep.subr.mxu0 0.0
    %3142 = vmatpush1.xpose.msra.mxu0 0.0
    %3143 = vmatprep.subr.mxu0 0.0
    %3144 = vmatpush1.xpose.msra.mxu0 0.0
    %3145 = vmatprep.subr.mxu0 0.0
    %3146 = vmatpush1.xpose.msra.mxu0 0.0
    %3147 = vmatprep.subr.mxu0 0.0
    %3148 = vmatpush1.xpose.msra.mxu0 0.0
    %3149 = vmatprep.subr.mxu0 0.0
    %3150 = vmatpush1.xpose.msra.mxu0 0.0
    %3151 = vmatprep.subr.mxu0 0.0
    %3152 = vmatpush1.xpose.msra.mxu0 0.0
    %3153 = vmatprep.subr.mxu0 0.0
    %3154 = vmatpush1.xpose.msra.mxu0 0.0
    %3155 = vmatprep.subr.mxu0 0.0
    %3156 = vmatpush1.xpose.msra.mxu0 0.0
    %3157 = vmatprep.subr.mxu0 0.0
    %3158 = vmatpush1.xpose.msra.mxu0 0.0
    %3159 = vmatprep.subr.mxu0 0.0
    %3160 = vmatpush1.xpose.msra.mxu0 0.0
    %3161 = vmatprep.subr.mxu0 0.0
    %3162 = vmatpush1.xpose.msra.mxu0 0.0
    %3163 = vmatprep.subr.mxu0 0.0
    %3164 = vmatpush1.xpose.msra.mxu0 0.0
    %3165 = vmatprep.subr.mxu0 0.0
    %3166 = vmatpush1.xpose.msra.mxu0 0.0
    %3167 = vmatprep.mubr.f32.mxu0 0.0
    %3168 = vmatmul.mubr.f32.gmra.mrb[0].mxu0 %v3099
    %v3169 = vpop.f32.mrb[0].mxu0
    %v3170 = vadd.f32 0.0, %v3169
    %v3171 = vpop.f32.mrb[0].mxu0
    %3172 = vdwg.mxu0
    %v3173 = vsel %vm137, %v3170, -inf
    %3174 = vmax.xlane.f32.xlu0 %v3173
    %v3175 = vpop.xlane.xlu0 %3174
    %v3176 = vsub.f32 %v3170, %v3175
    %v3177 = vmul.f32 %v3176, 1.442695
    %v3178 = vpow.pop %v3177
    %v3179 = vsel %vm137, %v3178, 0.0
    %3180 = vadd.xlane.f32.xlu0 %v3179
    %v3181 = vpop.xlane.xlu0 %3180
    %v3182 = vrcp.pop %v3181
    %v3183 = vmul.f32 %v3178, %v3182
    %3184 = vrot.lane.b32.xlu0 %v1924, 40
    %v3185 = vpop.permute.xlu0 %3184
    %v3188 = vsel %vm137, %v3183, 0
    %3190 = vmatprep.subr.mxu0 0.0
    %3191 = vmatpush1.msra.mxu0 %v3185
    %3192 = vmatprep.subr.mxu0 0.0
    %3193 = vmatpush1.msra.mxu0 0.0
    %3194 = vmatprep.subr.mxu0 0.0
    %3195 = vmatpush1.msra.mxu0 0.0
    %3196 = vmatprep.subr.mxu0 0.0
    %3197 = vmatpush1.msra.mxu0 0.0
    %3198 = vmatprep.subr.mxu0 0.0
    %3199 = vmatpush1.msra.mxu0 0.0
    %3200 = vmatprep.subr.mxu0 0.0
    %3201 = vmatpush1.msra.mxu0 0.0
    %3202 = vmatprep.subr.mxu0 0.0
    %3203 = vmatpush1.msra.mxu0 0.0
    %3204 = vmatprep.subr.mxu0 0.0
    %3205 = vmatpush1.msra.mxu0 0.0
    %3206 = vmatprep.subr.mxu0 0.0
    %3207 = vmatpush1.msra.mxu0 0.0
    %3208 = vmatprep.subr.mxu0 0.0
    %3209 = vmatpush1.msra.mxu0 0.0
    %3210 = vmatprep.subr.mxu0 0.0
    %3211 = vmatpush1.msra.mxu0 0.0
    %3212 = vmatprep.subr.mxu0 0.0
    %3213 = vmatpush1.msra.mxu0 0.0
    %3214 = vmatprep.subr.mxu0 0.0
    %3215 = vmatpush1.msra.mxu0 0.0
    %3216 = vmatprep.subr.mxu0 0.0
    %3217 = vmatpush1.msra.mxu0 0.0
    %3218 = vmatprep.subr.mxu0 0.0
    %3219 = vmatpush1.msra.mxu0 0.0
    %3220 = vmatprep.subr.mxu0 0.0
    %3221 = vmatpush1.msra.mxu0 0.0
    %3222 = vmatprep.subr.mxu0 0.0
    %3223 = vmatpush1.msra.mxu0 0.0
    %3224 = vmatprep.subr.mxu0 0.0
    %3225 = vmatpush1.msra.mxu0 0.0
    %3226 = vmatprep.subr.mxu0 0.0
    %3227 = vmatpush1.msra.mxu0 0.0
    %3228 = vmatprep.subr.mxu0 0.0
    %3229 = vmatpush1.msra.mxu0 0.0
    %3230 = vmatprep.subr.mxu0 0.0
    %3231 = vmatpush1.msra.mxu0 0.0
    %3232 = vmatprep.subr.mxu0 0.0
    %3233 = vmatpush1.msra.mxu0 0.0
    %3234 = vmatprep.subr.mxu0 0.0
    %3235 = vmatpush1.msra.mxu0 0.0
    %3236 = vmatprep.subr.mxu0 0.0
    %3237 = vmatpush1.msra.mxu0 0.0
    %3238 = vmatprep.subr.mxu0 0.0
    %3239 = vmatpush1.msra.mxu0 0.0
    %3240 = vmatprep.subr.mxu0 0.0
    %3241 = vmatpush1.msra.mxu0 0.0
    %3242 = vmatprep.subr.mxu0 0.0
    %3243 = vmatpush1.msra.mxu0 0.0
    %3244 = vmatprep.subr.mxu0 0.0
    %3245 = vmatpush1.msra.mxu0 0.0
    %3246 = vmatprep.subr.mxu0 0.0
    %3247 = vmatpush1.msra.mxu0 0.0
    %3248 = vmatprep.subr.mxu0 0.0
    %3249 = vmatpush1.msra.mxu0 0.0
    %3250 = vmatprep.subr.mxu0 0.0
    %3251 = vmatpush1.msra.mxu0 0.0
    %3252 = vmatprep.subr.mxu0 0.0
    %3253 = vmatpush1.msra.mxu0 0.0
    %3254 = vmatprep.mubr.f32.mxu0 0.0
    %3255 = vmatmul.mubr.f32.gmra.mrb[0].mxu0 %v3188
    %v3256 = vpop.f32.mrb[0].mxu0
    %v3257 = vadd.f32 0.0, %v3256
    %v3258 = vpop.f32.mrb[0].mxu0
    %3259 = vdwg.mxu0
    %3261 = vrot.lane.b32.xlu0 %v2927, 8
    %v3262 = vpop.permute.xlu0 %3261
    %3265 = vrot.lane.b32.xlu0 %v3092, 16
    %v3266 = vpop.permute.xlu0 %3265
    %3269 = vrot.lane.b32.xlu0 %v3257, 24
    %v3270 = vpop.permute.xlu0 %3269
    %v3272 = vsel %vm137, %v2762, %v3262
    %v3273 = vsel %vm807, %v3272, %v3266
    %v3274 = vsel %vm809, %v3273, %v3270
    %v3275 = vld [vmem:[%s7] sm:$0xff]
    %v3276 = vld [vmem:[%s7 + $0x8] sm:$0xff]
    %v3277 = vld [vmem:[%s7 + $0x10] sm:$0xff]
    %v3278 = vld [vmem:[%s7 + $0x18] sm:$0xff]
    %v3279 = vlaneseq
    %v3280 = vshrl.u32 %v3279, 7
    %v3281 = vsub.s32 0, %v3280
    %v3282 = vrot.slane %v1841, %v3281
    %v3284 = vsel %vm52, %v2600, 0
    %v3287 = vsel %vm52, %v3274, 0
    %3289 = vmatprep.subr.mxu0 0.0
    %3290 = vmatpush1.msra.mxu0 %v3275
    %3291 = vmatprep.subr.mxu0 0.0
    %3292 = vmatpush1.msra.mxu0 %v3276
    %3293 = vmatprep.subr.mxu0 0.0
    %3294 = vmatpush1.msra.mxu0 %v3277
    %3295 = vmatprep.subr.mxu0 0.0
    %3296 = vmatpush1.msra.mxu0 %v3278
    %3297 = vmatprep.subr.mxu0 0.0
    %3298 = vmatpush1.msra.mxu0 0.0
    %3299 = vmatprep.subr.mxu0 0.0
    %3300 = vmatpush1.msra.mxu0 0.0
    %3301 = vmatprep.subr.mxu0 0.0
    %3302 = vmatpush1.msra.mxu0 0.0
    %3303 = vmatprep.subr.mxu0 0.0
    %3304 = vmatpush1.msra.mxu0 0.0
    %3305 = vmatprep.subr.mxu0 0.0
    %3306 = vmatpush1.msra.mxu0 0.0
    %3307 = vmatprep.subr.mxu0 0.0
    %3308 = vmatpush1.msra.mxu0 0.0
    %3309 = vmatprep.subr.mxu0 0.0
    %3310 = vmatpush1.msra.mxu0 0.0
    %3311 = vmatprep.subr.mxu0 0.0
    %3312 = vmatpush1.msra.mxu0 0.0
    %3313 = vmatprep.subr.mxu0 0.0
    %3314 = vmatpush1.msra.mxu0 0.0
    %3315 = vmatprep.subr.mxu0 0.0
    %3316 = vmatpush1.msra.mxu0 0.0
    %3317 = vmatprep.subr.mxu0 0.0
    %3318 = vmatpush1.msra.mxu0 0.0
    %3319 = vmatprep.subr.mxu0 0.0
    %3320 = vmatpush1.msra.mxu0 0.0
    %3321 = vmatprep.subr.mxu0 0.0
    %3322 = vmatpush1.msra.mxu0 0.0
    %3323 = vmatprep.subr.mxu0 0.0
    %3324 = vmatpush1.msra.mxu0 0.0
    %3325 = vmatprep.subr.mxu0 0.0
    %3326 = vmatpush1.msra.mxu0 0.0
    %3327 = vmatprep.subr.mxu0 0.0
    %3328 = vmatpush1.msra.mxu0 0.0
    %3329 = vmatprep.subr.mxu0 0.0
    %3330 = vmatpush1.msra.mxu0 0.0
    %3331 = vmatprep.subr.mxu0 0.0
    %3332 = vmatpush1.msra.mxu0 0.0
    %3333 = vmatprep.subr.mxu0 0.0
    %3334 = vmatpush1.msra.mxu0 0.0
    %3335 = vmatprep.subr.mxu0 0.0
    %3336 = vmatpush1.msra.mxu0 0.0
    %3337 = vmatprep.subr.mxu0 0.0
    %3338 = vmatpush1.msra.mxu0 0.0
    %3339 = vmatprep.subr.mxu0 0.0
    %3340 = vmatpush1.msra.mxu0 0.0
    %3341 = vmatprep.subr.mxu0 0.0
    %3342 = vmatpush1.msra.mxu0 0.0
    %3343 = vmatprep.subr.mxu0 0.0
    %3344 = vmatpush1.msra.mxu0 0.0
    %3345 = vmatprep.subr.mxu0 0.0
    %3346 = vmatpush1.msra.mxu0 0.0
    %3347 = vmatprep.subr.mxu0 0.0
    %3348 = vmatpush1.msra.mxu0 0.0
    %3349 = vmatprep.subr.mxu0 0.0
    %3350 = vmatpush1.msra.mxu0 0.0
    %3351 = vmatprep.subr.mxu0 0.0
    %3352 = vmatpush1.msra.mxu0 0.0
    %3353 = vmatprep.mubr.f32.mxu0 0.0
    %3354 = vmatmul.mubr.f32.gmra.mrb[0].mxu0 %v3284
    %v3355 = vpop.f32.mrb[0].mxu0
    %v3356 = vadd.f32 %v3282, %v3355
    %v3357 = vpop.f32.mrb[0].mxu0
    %3358 = vmatprep.mubr.f32.mxu0 0.0
    %3359 = vmatmul.mubr.f32.gmra.mrb[0].mxu0 %v3287
    %v3360 = vpop.f32.mrb[0].mxu0
    %v3361 = vadd.f32 %v3282, %v3360
    %v3362 = vpop.f32.mrb[0].mxu0
    %3363 = vdwg.mxu0
    %v3364 = vadd.f32 %v3356, %v1839
    %v3365 = vadd.f32 %v3361, %v1840
    %v3366 = vsel %vm52, %v3364, 0.0
    %3367 = vadd.xlane.f32.xlu0 %v3366
    %v3368 = vpop.xlane.xlu0 %3367
    %v3369 = vsel %vm52, %v3365, 0.0
    %3370 = vadd.xlane.f32.xlu0 %v3369
    %v3371 = vpop.xlane.xlu0 %3370
    %v3372 = vmul.f32 %v3368, %v1582
    %v3373 = vmul.f32 %v3371, %v1582
    %v3374 = vsub.f32 %v3364, %v3372
    %v3375 = vsub.f32 %v3365, %v3373
    %v3376 = vmul.f32 %v3374, %v3374
    %v3377 = vmul.f32 %v3375, %v3375
    %v3378 = vsel %vm52, %v3376, 0.0
    %3379 = vadd.xlane.f32.xlu0 %v3378
    %v3380 = vpop.xlane.xlu0 %3379
    %v3381 = vsel %vm52, %v3377, 0.0
    %3382 = vadd.xlane.f32.xlu0 %v3381
    %v3383 = vpop.xlane.xlu0 %3382
    %v3384 = vmul.f32 %v3380, %v1582
    %v3385 = vmul.f32 %v3383, %v1582
    %v3386 = vadd.f32 %v3384, 1e-05
    %v3387 = vadd.f32 %v3385, 1e-05
    %v3388 = vrsqrt.pop %v3386
    %v3389 = vrsqrt.pop %v3387
    %v3390 = vmul.f32 %v3374, %v3388
    %v3391 = vmul.f32 %v3375, %v3389
    %v3392 = vlaneseq
    %v3393 = vshrl.u32 %v3392, 7
    %v3394 = vsub.s32 1, %v3393
    %v3395 = vrot.slane %v1841, %v3394
    %v3396 = vmul.f32 %v3390, %v3395
    %v3397 = vmul.f32 %v3391, %v3395
    %v3398 = vlaneseq
    %v3399 = vshrl.u32 %v3398, 7
    %v3400 = vsub.s32 2, %v3399
    %v3401 = vrot.slane %v1841, %v3400
    %v3402 = vadd.f32 %v3396, %v3401
    %v3403 = vadd.f32 %v3397, %v3401
    %v3404 = vld [vmem:[%s8] sm:$0xff]
    %v3405 = vld [vmem:[%s8 + $0x8] sm:$0xff]
    %v3406 = vld [vmem:[%s8 + $0x10] sm:$0xff]
    %v3407 = vld [vmem:[%s8 + $0x18] sm:$0xff]
    %v3408 = vlaneseq
    %v3409 = vshrl.u32 %v3408, 7
    %v3410 = vsub.s32 3, %v3409
    %v3411 = vrot.slane %v1841, %v3410
    %v3413 = vsel %vm52, %v3402, 0
    %v3416 = vsel %vm52, %v3403, 0
    %3418 = vmatprep.subr.mxu0 0.0
    %3419 = vmatpush1.msra.mxu0 %v3404
    %3420 = vmatprep.subr.mxu0 0.0
    %3421 = vmatpush1.msra.mxu0 %v3405
    %3422 = vmatprep.subr.mxu0 0.0
    %3423 = vmatpush1.msra.mxu0 %v3406
    %3424 = vmatprep.subr.mxu0 0.0
    %3425 = vmatpush1.msra.mxu0 %v3407
    %3426 = vmatprep.subr.mxu0 0.0
    %3427 = vmatpush1.msra.mxu0 0.0
    %3428 = vmatprep.subr.mxu0 0.0
    %3429 = vmatpush1.msra.mxu0 0.0
    %3430 = vmatprep.subr.mxu0 0.0
    %3431 = vmatpush1.msra.mxu0 0.0
    %3432 = vmatprep.subr.mxu0 0.0
    %3433 = vmatpush1.msra.mxu0 0.0
    %3434 = vmatprep.subr.mxu0 0.0
    %3435 = vmatpush1.msra.mxu0 0.0
    %3436 = vmatprep.subr.mxu0 0.0
    %3437 = vmatpush1.msra.mxu0 0.0
    %3438 = vmatprep.subr.mxu0 0.0
    %3439 = vmatpush1.msra.mxu0 0.0
    %3440 = vmatprep.subr.mxu0 0.0
    %3441 = vmatpush1.msra.mxu0 0.0
    %3442 = vmatprep.subr.mxu0 0.0
    %3443 = vmatpush1.msra.mxu0 0.0
    %3444 = vmatprep.subr.mxu0 0.0
    %3445 = vmatpush1.msra.mxu0 0.0
    %3446 = vmatprep.subr.mxu0 0.0
    %3447 = vmatpush1.msra.mxu0 0.0
    %3448 = vmatprep.subr.mxu0 0.0
    %3449 = vmatpush1.msra.mxu0 0.0
    %3450 = vmatprep.subr.mxu0 0.0
    %3451 = vmatpush1.msra.mxu0 0.0
    %3452 = vmatprep.subr.mxu0 0.0
    %3453 = vmatpush1.msra.mxu0 0.0
    %3454 = vmatprep.subr.mxu0 0.0
    %3455 = vmatpush1.msra.mxu0 0.0
    %3456 = vmatprep.subr.mxu0 0.0
    %3457 = vmatpush1.msra.mxu0 0.0
    %3458 = vmatprep.subr.mxu0 0.0
    %3459 = vmatpush1.msra.mxu0 0.0
    %3460 = vmatprep.subr.mxu0 0.0
    %3461 = vmatpush1.msra.mxu0 0.0
    %3462 = vmatprep.subr.mxu0 0.0
    %3463 = vmatpush1.msra.mxu0 0.0
    %3464 = vmatprep.subr.mxu0 0.0
    %3465 = vmatpush1.msra.mxu0 0.0
    %3466 = vmatprep.subr.mxu0 0.0
    %3467 = vmatpush1.msra.mxu0 0.0
    %3468 = vmatprep.subr.mxu0 0.0
    %3469 = vmatpush1.msra.mxu0 0.0
    %3470 = vmatprep.subr.mxu0 0.0
    %3471 = vmatpush1.msra.mxu0 0.0
    %3472 = vmatprep.subr.mxu0 0.0
    %3473 = vmatpush1.msra.mxu0 0.0
    %3474 = vmatprep.subr.mxu0 0.0
    %3475 = vmatpush1.msra.mxu0 0.0
    %3476 = vmatprep.subr.mxu0 0.0
    %3477 = vmatpush1.msra.mxu0 0.0
    %3478 = vmatprep.subr.mxu0 0.0
    %3479 = vmatpush1.msra.mxu0 0.0
    %3480 = vmatprep.subr.mxu0 0.0
    %3481 = vmatpush1.msra.mxu0 0.0
    %3482 = vmatprep.mubr.f32.mxu0 0.0
    %3483 = vmatmul.mubr.f32.gmra.mrb[0].mxu0 %v3413
    %v3484 = vpop.f32.mrb[0].mxu0
    %v3485 = vadd.f32 %v3411, %v3484
    %v3486 = vpop.f32.mrb[0].mxu0
    %3487 = vmatprep.mubr.f32.mxu0 0.0
    %3488 = vmatmul.mubr.f32.gmra.mrb[0].mxu0 %v3416
    %v3489 = vpop.f32.mrb[0].mxu0
    %v3490 = vadd.f32 %v3411, %v3489
    %v3491 = vpop.f32.mrb[0].mxu0
    %3492 = vdwg.mxu0
    %v3493 = vmax.f32 %v3485, 0.0
    %v3494 = vmax.f32 %v3490, 0.0
    %v3495 = vld [vmem:[%s9] sm:$0xff]
    %v3496 = vld [vmem:[%s9 + $0x8] sm:$0xff]
    %v3497 = vld [vmem:[%s9 + $0x10] sm:$0xff]
    %v3498 = vld [vmem:[%s9 + $0x18] sm:$0xff]
    %v3499 = vld [vmem:[%s9 + $0x20] sm:$0xff]
    %v3500 = vld [vmem:[%s9 + $0x28] sm:$0xff]
    %v3501 = vld [vmem:[%s9 + $0x30] sm:$0xff]
    %v3502 = vld [vmem:[%s9 + $0x38] sm:$0xff]
    %v3503 = vld [vmem:[%s9 + $0x40] sm:$0xff]
    %v3504 = vld [vmem:[%s9 + $0x48] sm:$0xff]
    %v3505 = vld [vmem:[%s9 + $0x50] sm:$0xff]
    %v3506 = vld [vmem:[%s9 + $0x58] sm:$0xff]
    %v3507 = vld [vmem:[%s9 + $0x60] sm:$0xff]
    %v3508 = vld [vmem:[%s9 + $0x68] sm:$0xff]
    %v3509 = vld [vmem:[%s9 + $0x70] sm:$0xff]
    %v3510 = vld [vmem:[%s9 + $0x78] sm:$0xff]
    %v3511 = vlaneseq
    %v3512 = vshrl.u32 %v3511, 7
    %v3513 = vsub.s32 4, %v3512
    %v3514 = vrot.slane %v1841, %v3513
    %3515 = vmatprep.subr.mxu0 0.0
    %3516 = vmatpush1.msra.mxu0 %v3495
    %3517 = vmatprep.subr.mxu0 0.0
    %3518 = vmatpush1.msra.mxu0 %v3496
    %3519 = vmatprep.subr.mxu0 0.0
    %3520 = vmatpush1.msra.mxu0 %v3497
    %3521 = vmatprep.subr.mxu0 0.0
    %3522 = vmatpush1.msra.mxu0 %v3498
    %3523 = vmatprep.subr.mxu0 0.0
    %3524 = vmatpush1.msra.mxu0 %v3499
    %3525 = vmatprep.subr.mxu0 0.0
    %3526 = vmatpush1.msra.mxu0 %v3500
    %3527 = vmatprep.subr.mxu0 0.0
    %3528 = vmatpush1.msra.mxu0 %v3501
    %3529 = vmatprep.subr.mxu0 0.0
    %3530 = vmatpush1.msra.mxu0 %v3502
    %3531 = vmatprep.subr.mxu0 0.0
    %3532 = vmatpush1.msra.mxu0 %v3503
    %3533 = vmatprep.subr.mxu0 0.0
    %3534 = vmatpush1.msra.mxu0 %v3504
    %3535 = vmatprep.subr.mxu0 0.0
    %3536 = vmatpush1.msra.mxu0 %v3505
    %3537 = vmatprep.subr.mxu0 0.0
    %3538 = vmatpush1.msra.mxu0 %v3506
    %3539 = vmatprep.subr.mxu0 0.0
    %3540 = vmatpush1.msra.mxu0 %v3507
    %3541 = vmatprep.subr.mxu0 0.0
    %3542 = vmatpush1.msra.mxu0 %v3508
    %3543 = vmatprep.subr.mxu0 0.0
    %3544 = vmatpush1.msra.mxu0 %v3509
    %3545 = vmatprep.subr.mxu0 0.0
    %3546 = vmatpush1.msra.mxu0 %v3510
    %3547 = vmatprep.subr.mxu0 0.0
    %3548 = vmatpush1.msra.mxu0 0.0
    %3549 = vmatprep.subr.mxu0 0.0
    %3550 = vmatpush1.msra.mxu0 0.0
    %3551 = vmatprep.subr.mxu0 0.0
    %3552 = vmatpush1.msra.mxu0 0.0
    %3553 = vmatprep.subr.mxu0 0.0
    %3554 = vmatpush1.msra.mxu0 0.0
    %3555 = vmatprep.subr.mxu0 0.0
    %3556 = vmatpush1.msra.mxu0 0.0
    %3557 = vmatprep.subr.mxu0 0.0
    %3558 = vmatpush1.msra.mxu0 0.0
    %3559 = vmatprep.subr.mxu0 0.0
    %3560 = vmatpush1.msra.mxu0 0.0
    %3561 = vmatprep.subr.mxu0 0.0
    %3562 = vmatpush1.msra.mxu0 0.0
    %3563 = vmatprep.subr.mxu0 0.0
    %3564 = vmatpush1.msra.mxu0 0.0
    %3565 = vmatprep.subr.mxu0 0.0
    %3566 = vmatpush1.msra.mxu0 0.0
    %3567 = vmatprep.subr.mxu0 0.0
    %3568 = vmatpush1.msra.mxu0 0.0
    %3569 = vmatprep.subr.mxu0 0.0
    %3570 = vmatpush1.msra.mxu0 0.0
    %3571 = vmatprep.subr.mxu0 0.0
    %3572 = vmatpush1.msra.mxu0 0.0
    %3573 = vmatprep.subr.mxu0 0.0
    %3574 = vmatpush1.msra.mxu0 0.0
    %3575 = vmatprep.subr.mxu0 0.0
    %3576 = vmatpush1.msra.mxu0 0.0
    %3577 = vmatprep.subr.mxu0 0.0
    %3578 = vmatpush1.msra.mxu0 0.0
    %3579 = vmatprep.mubr.f32.mxu0 0.0
    %3580 = vmatmul.mubr.f32.gmra.mrb[0].mxu0 %v3493
    %v3581 = vpop.f32.mrb[0].mxu0
    %v3582 = vadd.f32 %v3514, %v3581
    %v3583 = vpop.f32.mrb[0].mxu0
    %3584 = vmatprep.mubr.f32.mxu0 0.0
    %3585 = vmatmul.mubr.f32.gmra.mrb[0].mxu0 %v3494
    %v3586 = vpop.f32.mrb[0].mxu0
    %v3587 = vadd.f32 %v3514, %v3586
    %v3588 = vpop.f32.mrb[0].mxu0
    %3589 = vdwg.mxu0
    %v3590 = vadd.f32 %v3582, %v3402
    %v3591 = vadd.f32 %v3587, %v3403
    %v3592 = vsel %vm52, %v3590, 0.0
    %3593 = vadd.xlane.f32.xlu0 %v3592
    %v3594 = vpop.xlane.xlu0 %3593
    %v3595 = vsel %vm52, %v3591, 0.0
    %3596 = vadd.xlane.f32.xlu0 %v3595
    %v3597 = vpop.xlane.xlu0 %3596
    %v3598 = vmul.f32 %v3594, %v1582
    %v3599 = vmul.f32 %v3597, %v1582
    %v3600 = vsub.f32 %v3590, %v3598
    %v3601 = vsub.f32 %v3591, %v3599
    %v3602 = vmul.f32 %v3600, %v3600
    %v3603 = vmul.f32 %v3601, %v3601
    %v3604 = vsel %vm52, %v3602, 0.0
    %3605 = vadd.xlane.f32.xlu0 %v3604
    %v3606 = vpop.xlane.xlu0 %3605
    %v3607 = vsel %vm52, %v3603, 0.0
    %3608 = vadd.xlane.f32.xlu0 %v3607
    %v3609 = vpop.xlane.xlu0 %3608
    %v3610 = vmul.f32 %v3606, %v1582
    %v3611 = vmul.f32 %v3609, %v1582
    %v3612 = vadd.f32 %v3610, 1e-05
    %v3613 = vadd.f32 %v3611, 1e-05
    %v3614 = vrsqrt.pop %v3612
    %v3615 = vrsqrt.pop %v3613
    %v3616 = vmul.f32 %v3600, %v3614
    %v3617 = vmul.f32 %v3601, %v3615
    %v3618 = vlaneseq
    %v3619 = vshrl.u32 %v3618, 7
    %v3620 = vsub.s32 5, %v3619
    %v3621 = vrot.slane %v1841, %v3620
    %v3622 = vmul.f32 %v3616, %v3621
    %v3623 = vmul.f32 %v3617, %v3621
    %v3624 = vlaneseq
    %v3625 = vshrl.u32 %v3624, 7
    %v3626 = vsub.s32 6, %v3625
    %v3627 = vrot.slane %v1841, %v3626
    %v3628 = vadd.f32 %v3622, %v3627
    %v3629 = vadd.f32 %v3623, %v3627
    %v3630 = vsel %vm52, %v3628, -inf
    %v3631 = vrot.slane %v3630, 4
    %v3632 = vmax.f32 %v3630, %v3631
    %v3633 = vrot.slane %v3632, 2
    %v3634 = vmax.f32 %v3632, %v3633
    %v3635 = vrot.slane %v3634, 1
    %v3636 = vmax.f32 %v3634, %v3635
    %v3637 = vsel %vm52, %v3629, -inf
    %v3638 = vrot.slane %v3637, 4
    %v3639 = vmax.f32 %v3637, %v3638
    %v3640 = vrot.slane %v3639, 2
    %v3641 = vmax.f32 %v3639, %v3640
    %v3642 = vrot.slane %v3641, 1
    %v3643 = vmax.f32 %v3641, %v3642
    %vm3644 = vcmask 1040384
    %v3645 = vsel %vm3644, %v3636, %v3643
    %v3646 = vld [vmem:[%s11] sm:$0xff]
    %v3647 = vld [vmem:[%s11 + $0x8] sm:$0xff]
    %v3648 = vld [vmem:[%s11 + $0x10] sm:$0xff]
    %v3649 = vld [vmem:[%s11 + $0x18] sm:$0xff]
    %v3650 = vld [vmem:[%s12] sm:$0x1]
    %v3652 = vlaneseq
    %v3653 = vshrl.u32 %v3652, 7
    %v3654 = vsub.s32 0, %v3653
    %v3655 = vrot.slane %v3650, %v3654
    %v3658 = vsel %vm52, %v3645, 0
    %3660 = vmatprep.subr.mxu0 0.0
    %3661 = vmatpush1.msra.mxu0 %v3646
    %3662 = vmatprep.subr.mxu0 0.0
    %3663 = vmatpush1.msra.mxu0 %v3647
    %3664 = vmatprep.subr.mxu0 0.0
    %3665 = vmatpush1.msra.mxu0 %v3648
    %3666 = vmatprep.subr.mxu0 0.0
    %3667 = vmatpush1.msra.mxu0 %v3649
    %3668 = vmatprep.subr.mxu0 0.0
    %3669 = vmatpush1.msra.mxu0 0.0
    %3670 = vmatprep.subr.mxu0 0.0
    %3671 = vmatpush1.msra.mxu0 0.0
    %3672 = vmatprep.subr.mxu0 0.0
    %3673 = vmatpush1.msra.mxu0 0.0
    %3674 = vmatprep.subr.mxu0 0.0
    %3675 = vmatpush1.msra.mxu0 0.0
    %3676 = vmatprep.subr.mxu0 0.0
    %3677 = vmatpush1.msra.mxu0 0.0
    %3678 = vmatprep.subr.mxu0 0.0
    %3679 = vmatpush1.msra.mxu0 0.0
    %3680 = vmatprep.subr.mxu0 0.0
    %3681 = vmatpush1.msra.mxu0 0.0
    %3682 = vmatprep.subr.mxu0 0.0
    %3683 = vmatpush1.msra.mxu0 0.0
    %3684 = vmatprep.subr.mxu0 0.0
    %3685 = vmatpush1.msra.mxu0 0.0
    %3686 = vmatprep.subr.mxu0 0.0
    %3687 = vmatpush1.msra.mxu0 0.0
    %3688 = vmatprep.subr.mxu0 0.0
    %3689 = vmatpush1.msra.mxu0 0.0
    %3690 = vmatprep.subr.mxu0 0.0
    %3691 = vmatpush1.msra.mxu0 0.0
    %3692 = vmatprep.subr.mxu0 0.0
    %3693 = vmatpush1.msra.mxu0 0.0
    %3694 = vmatprep.subr.mxu0 0.0
    %3695 = vmatpush1.msra.mxu0 0.0
    %3696 = vmatprep.subr.mxu0 0.0
    %3697 = vmatpush1.msra.mxu0 0.0
    %3698 = vmatprep.subr.mxu0 0.0
    %3699 = vmatpush1.msra.mxu0 0.0
    %3700 = vmatprep.subr.mxu0 0.0
    %3701 = vmatpush1.msra.mxu0 0.0
    %3702 = vmatprep.subr.mxu0 0.0
    %3703 = vmatpush1.msra.mxu0 0.0
    %3704 = vmatprep.subr.mxu0 0.0
    %3705 = vmatpush1.msra.mxu0 0.0
    %3706 = vmatprep.subr.mxu0 0.0
    %3707 = vmatpush1.msra.mxu0 0.0
    %3708 = vmatprep.subr.mxu0 0.0
    %3709 = vmatpush1.msra.mxu0 0.0
    %3710 = vmatprep.subr.mxu0 0.0
    %3711 = vmatpush1.msra.mxu0 0.0
    %3712 = vmatprep.subr.mxu0 0.0
    %3713 = vmatpush1.msra.mxu0 0.0
    %3714 = vmatprep.subr.mxu0 0.0
    %3715 = vmatpush1.msra.mxu0 0.0
    %3716 = vmatprep.subr.mxu0 0.0
    %3717 = vmatpush1.msra.mxu0 0.0
    %3718 = vmatprep.subr.mxu0 0.0
    %3719 = vmatpush1.msra.mxu0 0.0
    %3720 = vmatprep.subr.mxu0 0.0
    %3721 = vmatpush1.msra.mxu0 0.0
    %3722 = vmatprep.subr.mxu0 0.0
    %3723 = vmatpush1.msra.mxu0 0.0
    %3724 = vmatprep.mubr.f32.mxu0 0.0
    %3725 = vmatmul.mubr.f32.gmra.mrb[0].mxu0 %v3658
    %v3726 = vpop.f32.mrb[0].mxu0
    %v3727 = vadd.f32 %v3655, %v3726
    %v3728 = vpop.f32.mrb[0].mxu0
    %3729 = vdwg.mxu0
    %vm3730 = vcmask 1041408
    %v3731 = vsel %vm3730, %v3727, -inf
    %3732 = vmax.xlane.f32.xlu0 %v3731
    %v3733 = vpop.xlane.xlu0 %3732
    %v3734 = vsub.f32 %v3727, %v3733
    %v3735 = vmul.f32 %v3734, 1.442695
    %v3736 = vpow.pop %v3735
    %v3737 = vsel %vm3730, %v3736, 0.0
    %3738 = vadd.xlane.f32.xlu0 %v3737
    %v3739 = vpop.xlane.xlu0 %3738
    %v3740 = vlog2.pop %v3739
    %v3741 = vmul.f32 %v3740, 0.6931472
    %v3742 = vadd.f32 %v3741, %v3733
    %v3743 = vsub.f32 %v3727, %v3742
    %3744 = vst [vmem:[#allocation2] sm:$0x3] %v3743
    // Predicated region
    $region54: #{transformer_forward.1} parent=1 // pred_check
      _
    $region55: #{transformer_forward.1} parent=1 // pred_check_branch
      %3746 = sbr.rel (0) target = $region57
    $region56: #{transformer_forward.1} parent=1 // pred_region
      %s3748 = ssub.s32 32, 32
      %3749 = vsyncadd [#allocation3], %s3748
      %s3751 = sshll.u32 [#allocation2], 4
      %s3752 = int_to_ptr.vmem [resolvable:$true] %s3751
      %3754 = dma.vmem_to_hbm [thread:$0]  %s3752, 32, %s13, [#allocation3]
    $region57: #{transformer_forward.1} parent=1 // pred_fallthru
      _
    // Predicated region
    $region58: #{transformer_forward.1} parent=1 // pred_check
      _
    $region59: #{transformer_forward.1} parent=1 // pred_check_branch
      %3756 = sbr.rel (0) target = $region61
    $region60: #{transformer_forward.1} parent=1 // pred_region
      %3757 = dma.done [#allocation3], 32
    $region61: #{transformer_forward.1} parent=1 // pred_fallthru
      _
    %3758 = vsyncpa [#allocation3], 1

</llo_original>
